<compile_context>
chip_gen: v6e
topology: v6e:2x2x1
jax: 0.10.0
libtpu: 0.0.40
codegen_flags: <defaults>
</compile_context>

<pallas_src>
import functools

import jax
import jax.numpy as jnp
from jax.experimental import pallas as pl
from jax.experimental.pallas import tpu as pltpu


# ----------------------------------------------------------------------------
# Single fused kernel: LSTM recurrence (packed gates) + MCB head.
#   xw    (T, Bp, 4H) : precomputed x @ Wih_packed + (b_ih + b_hh)
#   whh   (H, 4H)     : packed recurrent weights, gate order (i, f, g, o)
#   img   (Bp, C)     : pooled image descriptor
#   wimg  (C, F*P)    : frozen image projection, factor-major, P = mcb_out padded
#   bimg  (1, F*P)
#   wq    (H, F*P)    : Linear_ques, factor-major, padded
#   bq    (1, F*P)
#   wp    (P, Vp)     : Linear_predict, padded (rows 1000:P and cols V:Vp are 0)
#   bp    (1, Vp)
# Output: softmax probabilities (Bp, Vp); caller slices to (B, V).
# ----------------------------------------------------------------------------
def _mcb_fused_kernel(xw_ref, whh_ref, img_ref, wimg_ref, bimg_ref,
                      wq_ref, bq_ref, wp_ref, bp_ref, out_ref,
                      *, mcb_factor, mcb_out_pad, vocab):
    T, Bp, _ = xw_ref.shape
    H = whh_ref.shape[0]
    whh = whh_ref[...]

    # --- LSTM recurrence: one (Bp,H)@(H,4H) MXU dot per step --------------------
    def step(t, carry):
        h, c = carry
        gates = xw_ref[t] + jnp.dot(h, whh, preferred_element_type=jnp.float32)
        i = jax.nn.sigmoid(gates[:, 0 * H:1 * H])
        f = jax.nn.sigmoid(gates[:, 1 * H:2 * H])
        g = jnp.tanh(gates[:, 2 * H:3 * H])
        o = jax.nn.sigmoid(gates[:, 3 * H:4 * H])
        c_new = f * c + i * g
        h_new = o * jnp.tanh(c_new)
        return (h_new, c_new)

    h0 = jnp.zeros((Bp, H), jnp.float32)
    c0 = jnp.zeros((Bp, H), jnp.float32)
    h_T, _ = jax.lax.fori_loop(0, T, step, (h0, c0), unroll=True)
    # Dropout -> identity (eval mode)

    # --- MCB head: two packed projections, 5-way factor reduction ---------------
    q_proj = jnp.dot(h_T, wq_ref[...],
                     preferred_element_type=jnp.float32) + bq_ref[...]
    i_proj = jnp.dot(img_ref[...], wimg_ref[...],
                     preferred_element_type=jnp.float32) + bimg_ref[...]
    iq = q_proj * i_proj                                   # (Bp, F*P)

    P = mcb_out_pad
    acc = iq[:, 0:P]
    for k in range(1, mcb_factor):                         # 128-aligned lane slices
        acc = acc + iq[:, k * P:(k + 1) * P]

    # signed square root: sqrt(relu(x)) - sqrt(relu(-x))
    s = jnp.sqrt(jnp.maximum(acc, 0.0)) - jnp.sqrt(jnp.maximum(-acc, 0.0))

    # F.normalize(p=2, dim=1, eps=1e-12)  (padded cols are exactly 0 -> no effect)
    norm = jnp.sqrt(jnp.sum(s * s, axis=1, keepdims=True))
    s = s / jnp.maximum(norm, 1e-12)

    # Linear_predict + Softmax(dim=1), computed lane-dense over padded vocab
    logits = jnp.dot(s, wp_ref[...],
                     preferred_element_type=jnp.float32) + bp_ref[...]
    col = jax.lax.broadcasted_iota(jnp.int32, logits.shape, 1)
    logits = jnp.where(col < vocab, logits, jnp.float32(-1e30))
    m = jnp.max(logits, axis=1, keepdims=True)
    e = jnp.exp(logits - m)
    out_ref[...] = (e / jnp.sum(e, axis=1, keepdims=True)).astype(out_ref.dtype)


def mcb_fused(xw, whh, img, wimg, bimg, wq, bq, wp, bp,
              *, mcb_factor, mcb_out_pad, vocab):
    Bp = xw.shape[1]
    Vp = wp.shape[1]
    vmem = pl.BlockSpec(memory_space=pltpu.MemorySpace.VMEM)
    return pl.pallas_call(
        functools.partial(_mcb_fused_kernel, mcb_factor=mcb_factor,
                          mcb_out_pad=mcb_out_pad, vocab=vocab),
        in_specs=[vmem] * 9,
        out_specs=vmem,
        out_shape=jax.ShapeDtypeStruct((Bp, Vp), jnp.float32),
        compiler_params=pltpu.CompilerParams(vmem_limit_bytes=32 * 1024 * 1024),
    )(xw, whh, img, wimg, bimg, wq, bq, wp, bp)


# ----------------------------------------------------------------------------
# Parameter construction + packing.
# ----------------------------------------------------------------------------
def _pack_factor_w(w_flat, mcb_out, factor, pad_to):
    """(in, mcb_out*factor), col j = factor*m + k  ->  (in, factor*pad_to),
    col k*pad_to + m  (padding columns zero).  Mirrors view(...,mcb_out,factor)."""
    in_dim = w_flat.shape[0]
    w = w_flat.reshape(in_dim, mcb_out, factor).transpose(2, 0, 1)   # (F, in, mcb_out)
    w = jnp.pad(w, ((0, 0), (0, 0), (0, pad_to - mcb_out)))
    return jnp.transpose(w, (1, 0, 2)).reshape(in_dim, factor * pad_to)


def _pack_factor_b(b_flat, mcb_out, factor, pad_to):
    b = b_flat.reshape(mcb_out, factor).T                            # (F, mcb_out)
    b = jnp.pad(b, ((0, 0), (0, pad_to - mcb_out)))
    return b.reshape(1, factor * pad_to)


def init_params(key, *, embedding_size, lstm_units, feat_channels, ans_vocab_size,
                mcb_output_dim, mcb_out, mcb_factor, mcb_out_pad, vocab_pad):
    ks = jax.random.split(key, 9)
    u = lambda k, shape: jax.random.uniform(k, shape, jnp.float32, -0.1, 0.1)
    E, H, C, V = embedding_size, lstm_units, feat_channels, ans_vocab_size

    base = {
        # LSTM (single layer), gates in PyTorch order (i, f, g, o):
        "wih": u(ks[0], (4, E, H)),
        "whh": u(ks[1], (4, H, H)),
        "b_lstm": u(ks[2], (4, 1, H)),            # b_ih + b_hh combined
        # frozen image projection standing in for ResNet50:
        "wimg_flat": u(ks[3], (C, mcb_output_dim)),
        "bimg_flat": u(ks[4], (mcb_output_dim,)),
        # Linear_ques: (H -> MCB_output_dim)
        "wq_flat": u(ks[5], (H, mcb_output_dim)),
        "bq_flat": u(ks[6], (mcb_output_dim,)),
        # Linear_predict: (mcb_out -> ans_vocab)
        "wp": u(ks[7], (mcb_out, V)),
        "bp": u(ks[8], (1, V)),
    }

    packed = {
        "wih_packed": jnp.concatenate([base["wih"][k] for k in range(4)], axis=1),
        "whh_packed": jnp.concatenate([base["whh"][k] for k in range(4)], axis=1),
        "b_packed": jnp.concatenate([base["b_lstm"][k] for k in range(4)], axis=1),
        "wq_cat": _pack_factor_w(base["wq_flat"], mcb_out, mcb_factor, mcb_out_pad),
        "bq_cat": _pack_factor_b(base["bq_flat"], mcb_out, mcb_factor, mcb_out_pad),
        "wimg_cat": _pack_factor_w(base["wimg_flat"], mcb_out, mcb_factor, mcb_out_pad),
        "bimg_cat": _pack_factor_b(base["bimg_flat"], mcb_out, mcb_factor, mcb_out_pad),
        "wp_pad": jnp.pad(base["wp"], ((0, mcb_out_pad - mcb_out), (0, vocab_pad - V))),
        "bp_pad": jnp.pad(base["bp"], ((0, 0), (0, vocab_pad - V))),
    }
    return base, packed


# ----------------------------------------------------------------------------
# Forward wrapper.
# ----------------------------------------------------------------------------
def mcb_forward(base, packed, ques_embed, img_feat, *, mcb_factor, mcb_out_pad):
    B, T, E = ques_embed.shape
    V = base["bp"].shape[1]
    Bp = ((B + 7) // 8) * 8                                  # fill sublanes / MXU rows

    # (B, T, E) -> time-major (T, B, E)  (matches .permute(1, 0, 2)); pad batch.
    x = jnp.transpose(ques_embed, (1, 0, 2)).astype(jnp.float32)
    x = jnp.pad(x, ((0, 0), (0, Bp - B), (0, 0)))

    # Hoisted (non-recurrent) input projection: one well-shaped GEMM in XLA.
    xw = jnp.einsum("tbe,eg->tbg", x, packed["wih_packed"]) + packed["b_packed"]

    # Image descriptor (stand-in glue for the frozen ResNet50 backbone).
    img_pooled = jnp.mean(img_feat.astype(jnp.float32), axis=(1, 2))
    img_pooled = jnp.pad(img_pooled, ((0, Bp - B), (0, 0)))

    out = mcb_fused(xw, packed["whh_packed"], img_pooled,
                    packed["wimg_cat"], packed["bimg_cat"],
                    packed["wq_cat"], packed["bq_cat"],
                    packed["wp_pad"], packed["bp_pad"],
                    mcb_factor=mcb_factor, mcb_out_pad=mcb_out_pad, vocab=V)
    return out[:B, :V]


# ----------------------------------------------------------------------------
# Pure-JAX reference (numerical sanity check for the Pallas kernel).
# ----------------------------------------------------------------------------
def mcb_forward_ref(base, ques_embed, img_feat, *, mcb_out, mcb_factor):
    x = jnp.transpose(ques_embed, (1, 0, 2)).astype(jnp.float32)   # (T, B, E)
    B = x.shape[1]
    H = base["whh"].shape[-1]

    def step(carry, x_t):
        h, c = carry
        gates = [x_t @ base["wih"][k] + h @ base["whh"][k] + base["b_lstm"][k]
                 for k in range(4)]
        i = jax.nn.sigmoid(gates[0]); f = jax.nn.sigmoid(gates[1])
        g = jnp.tanh(gates[2]);       o = jax.nn.sigmoid(gates[3])
        c = f * c + i * g
        h = o * jnp.tanh(c)
        return (h, c), None

    (h_T, _), _ = jax.lax.scan(step, (jnp.zeros((B, H)), jnp.zeros((B, H))), x)

    img_pooled = jnp.mean(img_feat.astype(jnp.float32), axis=(1, 2))
    img_features = img_pooled @ base["wimg_flat"] + base["bimg_flat"]
    ques_proj = h_T @ base["wq_flat"] + base["bq_flat"]
    iq = img_features * ques_proj
    iq_sum = iq.reshape(B, mcb_out, mcb_factor).sum(axis=2)
    iq_sqrt = jnp.sqrt(jnp.maximum(iq_sum, 0.0)) - jnp.sqrt(jnp.maximum(-iq_sum, 0.0))
    iq_norm = iq_sqrt / jnp.maximum(
        jnp.sqrt(jnp.sum(iq_sqrt * iq_sqrt, axis=1, keepdims=True)), 1e-12)
    logits = iq_norm @ base["wp"] + base["bp"]
    return jax.nn.softmax(logits, axis=1)


if __name__ == "__main__":
    # Small, self-consistent config.
    B = 2                  # batch_size
    T = 8                  # question sequence length
    E = 16                 # embedding_size
    H = 32                 # LSTM_units (LSTM_layers = 1); 4H = 128 (one MXU tile)
    C = 8                  # image feature channels (feat_size stand-in)
    HS = WS = 16           # image spatial dims
    V = 16                 # ans_vocab_size
    MCB_OUTPUT_DIM = 5000
    MCB_OUT = 1000
    MCB_FACTOR = 5
    MCB_OUT_PAD = 1024     # lane-aligned per-factor chunk
    V_PAD = 128            # lane-dense softmax / output store

    key = jax.random.PRNGKey(0)
    k_par, k_q, k_img = jax.random.split(key, 3)

    base, packed = init_params(
        k_par, embedding_size=E, lstm_units=H, feat_channels=C, ans_vocab_size=V,
        mcb_output_dim=MCB_OUTPUT_DIM, mcb_out=MCB_OUT, mcb_factor=MCB_FACTOR,
        mcb_out_pad=MCB_OUT_PAD, vocab_pad=V_PAD)

    ques_embed = jax.random.normal(k_q, (B, T, E), jnp.float32)       # (B, T, E)
    img_feat = jax.random.normal(k_img, (B, HS, WS, C), jnp.float32)  # NHWC

    pred = mcb_forward(base, packed, ques_embed, img_feat,
                       mcb_factor=MCB_FACTOR, mcb_out_pad=MCB_OUT_PAD)
    pred = jax.block_until_ready(pred)

    ref = mcb_forward_ref(base, ques_embed, img_feat,
                          mcb_out=MCB_OUT, mcb_factor=MCB_FACTOR)
    ref = jax.block_until_ready(ref)

    assert pred.shape == (B, V)
    assert jnp.allclose(jnp.sum(pred, axis=1), 1.0, atol=1e-4)
    assert jnp.allclose(pred, ref, atol=2e-3, rtol=2e-3)

    print("KERNEL_OK")
</pallas_src>

<mosaic_0001>
module attributes {stable_mosaic.version = 11 : i64} {
  func.func @_mcb_fused_kernel(%arg0: memref<8x8x128xf32, #tpu.memory_space<vmem>>, %arg1: memref<32x128xf32, #tpu.memory_space<vmem>>, %arg2: memref<8x8xf32, #tpu.memory_space<vmem>>, %arg3: memref<8x5120xf32, #tpu.memory_space<vmem>>, %arg4: memref<1x5120xf32, #tpu.memory_space<vmem>>, %arg5: memref<32x5120xf32, #tpu.memory_space<vmem>>, %arg6: memref<1x5120xf32, #tpu.memory_space<vmem>>, %arg7: memref<1024x128xf32, #tpu.memory_space<vmem>>, %arg8: memref<1x128xf32, #tpu.memory_space<vmem>>, %arg9: memref<8x128xf32, #tpu.memory_space<vmem>>) attributes {dimension_semantics = [], scalar_prefetch = 0 : i64, scratch_operands = 0 : i64, tpu.core_type = #tpu.core_type<tc>} {
    %c0 = arith.constant 0 : index
    %c0_0 = arith.constant 0 : index
    %0 = vector.load %arg1[%c0, %c0_0] : memref<32x128xf32, #tpu.memory_space<vmem>>, vector<32x128xf32>
    %cst = arith.constant 0.000000e+00 : f32
    %1 = vector.broadcast %cst : f32 to vector<8x32xf32>
    %cst_1 = arith.constant 0.000000e+00 : f32
    %2 = vector.broadcast %cst_1 : f32 to vector<8x32xf32>
    %c0_i32 = arith.constant 0 : i32
    %3 = arith.index_cast %c0_i32 : i32 to index
    %c0_2 = arith.constant 0 : index
    %c0_3 = arith.constant 0 : index
    %4 = vector.load %arg0[%3, %c0_2, %c0_3] : memref<8x8x128xf32, #tpu.memory_space<vmem>>, vector<1x8x128xf32>
    %5 = vector.shape_cast %4 : vector<1x8x128xf32> to vector<8x128xf32>
    %cst_4 = arith.constant dense<0.000000e+00> : vector<8x128xf32>
    %6 = tpu.matmul %1, %0, %cst_4 {dimension_numbers = #tpu.dot_dimension_numbers<[1], [0], [0], [1], [0, 0, 1, 1], [], []>} : vector<8x32xf32>, vector<32x128xf32>, vector<8x128xf32> -> vector<8x128xf32>
    %7 = arith.addf %5, %6 : vector<8x128xf32>
    %8 = vector.extract_strided_slice %7 {offsets = [0, 0], sizes = [8, 32], strides = [1, 1]} : vector<8x128xf32> to vector<8x32xf32>
    %9 = arith.negf %8 : vector<8x32xf32>
    %10 = math.exp %9 : vector<8x32xf32>
    %cst_5 = arith.constant 1.000000e+00 : f32
    %11 = vector.broadcast %cst_5 : f32 to vector<8x32xf32>
    %12 = arith.addf %11, %10 : vector<8x32xf32>
    %13 = arith.divf %11, %12 : vector<8x32xf32>
    %14 = vector.extract_strided_slice %7 {offsets = [0, 32], sizes = [8, 32], strides = [1, 1]} : vector<8x128xf32> to vector<8x32xf32>
    %15 = arith.negf %14 : vector<8x32xf32>
    %16 = math.exp %15 : vector<8x32xf32>
    %cst_6 = arith.constant 1.000000e+00 : f32
    %17 = vector.broadcast %cst_6 : f32 to vector<8x32xf32>
    %18 = arith.addf %17, %16 : vector<8x32xf32>
    %19 = arith.divf %17, %18 : vector<8x32xf32>
    %20 = vector.extract_strided_slice %7 {offsets = [0, 64], sizes = [8, 32], strides = [1, 1]} : vector<8x128xf32> to vector<8x32xf32>
    %21 = math.tanh %20 : vector<8x32xf32>
    %22 = vector.extract_strided_slice %7 {offsets = [0, 96], sizes = [8, 32], strides = [1, 1]} : vector<8x128xf32> to vector<8x32xf32>
    %23 = arith.negf %22 : vector<8x32xf32>
    %24 = math.exp %23 : vector<8x32xf32>
    %cst_7 = arith.constant 1.000000e+00 : f32
    %25 = vector.broadcast %cst_7 : f32 to vector<8x32xf32>
    %26 = arith.addf %25, %24 : vector<8x32xf32>
    %27 = arith.divf %25, %26 : vector<8x32xf32>
    %28 = arith.mulf %19, %2 : vector<8x32xf32>
    %29 = arith.mulf %13, %21 : vector<8x32xf32>
    %30 = arith.addf %28, %29 : vector<8x32xf32>
    %31 = math.tanh %30 : vector<8x32xf32>
    %32 = arith.mulf %27, %31 : vector<8x32xf32>
    %c1_i32 = arith.constant 1 : i32
    %33 = arith.index_cast %c1_i32 : i32 to index
    %c0_8 = arith.constant 0 : index
    %c0_9 = arith.constant 0 : index
    %34 = vector.load %arg0[%33, %c0_8, %c0_9] : memref<8x8x128xf32, #tpu.memory_space<vmem>>, vector<1x8x128xf32>
    %35 = vector.shape_cast %34 : vector<1x8x128xf32> to vector<8x128xf32>
    %cst_10 = arith.constant dense<0.000000e+00> : vector<8x128xf32>
    %36 = tpu.matmul %32, %0, %cst_10 {dimension_numbers = #tpu.dot_dimension_numbers<[1], [0], [0], [1], [0, 0, 1, 1], [], []>} : vector<8x32xf32>, vector<32x128xf32>, vector<8x128xf32> -> vector<8x128xf32>
    %37 = arith.addf %35, %36 : vector<8x128xf32>
    %38 = vector.extract_strided_slice %37 {offsets = [0, 0], sizes = [8, 32], strides = [1, 1]} : vector<8x128xf32> to vector<8x32xf32>
    %39 = arith.negf %38 : vector<8x32xf32>
    %40 = math.exp %39 : vector<8x32xf32>
    %cst_11 = arith.constant 1.000000e+00 : f32
    %41 = vector.broadcast %cst_11 : f32 to vector<8x32xf32>
    %42 = arith.addf %41, %40 : vector<8x32xf32>
    %43 = arith.divf %41, %42 : vector<8x32xf32>
    %44 = vector.extract_strided_slice %37 {offsets = [0, 32], sizes = [8, 32], strides = [1, 1]} : vector<8x128xf32> to vector<8x32xf32>
    %45 = arith.negf %44 : vector<8x32xf32>
    %46 = math.exp %45 : vector<8x32xf32>
    %cst_12 = arith.constant 1.000000e+00 : f32
    %47 = vector.broadcast %cst_12 : f32 to vector<8x32xf32>
    %48 = arith.addf %47, %46 : vector<8x32xf32>
    %49 = arith.divf %47, %48 : vector<8x32xf32>
    %50 = vector.extract_strided_slice %37 {offsets = [0, 64], sizes = [8, 32], strides = [1, 1]} : vector<8x128xf32> to vector<8x32xf32>
    %51 = math.tanh %50 : vector<8x32xf32>
    %52 = vector.extract_strided_slice %37 {offsets = [0, 96], sizes = [8, 32], strides = [1, 1]} : vector<8x128xf32> to vector<8x32xf32>
    %53 = arith.negf %52 : vector<8x32xf32>
    %54 = math.exp %53 : vector<8x32xf32>
    %cst_13 = arith.constant 1.000000e+00 : f32
    %55 = vector.broadcast %cst_13 : f32 to vector<8x32xf32>
    %56 = arith.addf %55, %54 : vector<8x32xf32>
    %57 = arith.divf %55, %56 : vector<8x32xf32>
    %58 = arith.mulf %49, %30 : vector<8x32xf32>
    %59 = arith.mulf %43, %51 : vector<8x32xf32>
    %60 = arith.addf %58, %59 : vector<8x32xf32>
    %61 = math.tanh %60 : vector<8x32xf32>
    %62 = arith.mulf %57, %61 : vector<8x32xf32>
    %c2_i32 = arith.constant 2 : i32
    %63 = arith.index_cast %c2_i32 : i32 to index
    %c0_14 = arith.constant 0 : index
    %c0_15 = arith.constant 0 : index
    %64 = vector.load %arg0[%63, %c0_14, %c0_15] : memref<8x8x128xf32, #tpu.memory_space<vmem>>, vector<1x8x128xf32>
    %65 = vector.shape_cast %64 : vector<1x8x128xf32> to vector<8x128xf32>
    %cst_16 = arith.constant dense<0.000000e+00> : vector<8x128xf32>
    %66 = tpu.matmul %62, %0, %cst_16 {dimension_numbers = #tpu.dot_dimension_numbers<[1], [0], [0], [1], [0, 0, 1, 1], [], []>} : vector<8x32xf32>, vector<32x128xf32>, vector<8x128xf32> -> vector<8x128xf32>
    %67 = arith.addf %65, %66 : vector<8x128xf32>
    %68 = vector.extract_strided_slice %67 {offsets = [0, 0], sizes = [8, 32], strides = [1, 1]} : vector<8x128xf32> to vector<8x32xf32>
    %69 = arith.negf %68 : vector<8x32xf32>
    %70 = math.exp %69 : vector<8x32xf32>
    %cst_17 = arith.constant 1.000000e+00 : f32
    %71 = vector.broadcast %cst_17 : f32 to vector<8x32xf32>
    %72 = arith.addf %71, %70 : vector<8x32xf32>
    %73 = arith.divf %71, %72 : vector<8x32xf32>
    %74 = vector.extract_strided_slice %67 {offsets = [0, 32], sizes = [8, 32], strides = [1, 1]} : vector<8x128xf32> to vector<8x32xf32>
    %75 = arith.negf %74 : vector<8x32xf32>
    %76 = math.exp %75 : vector<8x32xf32>
    %cst_18 = arith.constant 1.000000e+00 : f32
    %77 = vector.broadcast %cst_18 : f32 to vector<8x32xf32>
    %78 = arith.addf %77, %76 : vector<8x32xf32>
    %79 = arith.divf %77, %78 : vector<8x32xf32>
    %80 = vector.extract_strided_slice %67 {offsets = [0, 64], sizes = [8, 32], strides = [1, 1]} : vector<8x128xf32> to vector<8x32xf32>
    %81 = math.tanh %80 : vector<8x32xf32>
    %82 = vector.extract_strided_slice %67 {offsets = [0, 96], sizes = [8, 32], strides = [1, 1]} : vector<8x128xf32> to vector<8x32xf32>
    %83 = arith.negf %82 : vector<8x32xf32>
    %84 = math.exp %83 : vector<8x32xf32>
    %cst_19 = arith.constant 1.000000e+00 : f32
    %85 = vector.broadcast %cst_19 : f32 to vector<8x32xf32>
    %86 = arith.addf %85, %84 : vector<8x32xf32>
    %87 = arith.divf %85, %86 : vector<8x32xf32>
    %88 = arith.mulf %79, %60 : vector<8x32xf32>
    %89 = arith.mulf %73, %81 : vector<8x32xf32>
    %90 = arith.addf %88, %89 : vector<8x32xf32>
    %91 = math.tanh %90 : vector<8x32xf32>
    %92 = arith.mulf %87, %91 : vector<8x32xf32>
    %c3_i32 = arith.constant 3 : i32
    %93 = arith.index_cast %c3_i32 : i32 to index
    %c0_20 = arith.constant 0 : index
    %c0_21 = arith.constant 0 : index
    %94 = vector.load %arg0[%93, %c0_20, %c0_21] : memref<8x8x128xf32, #tpu.memory_space<vmem>>, vector<1x8x128xf32>
    %95 = vector.shape_cast %94 : vector<1x8x128xf32> to vector<8x128xf32>
    %cst_22 = arith.constant dense<0.000000e+00> : vector<8x128xf32>
    %96 = tpu.matmul %92, %0, %cst_22 {dimension_numbers = #tpu.dot_dimension_numbers<[1], [0], [0], [1], [0, 0, 1, 1], [], []>} : vector<8x32xf32>, vector<32x128xf32>, vector<8x128xf32> -> vector<8x128xf32>
    %97 = arith.addf %95, %96 : vector<8x128xf32>
    %98 = vector.extract_strided_slice %97 {offsets = [0, 0], sizes = [8, 32], strides = [1, 1]} : vector<8x128xf32> to vector<8x32xf32>
    %99 = arith.negf %98 : vector<8x32xf32>
    %100 = math.exp %99 : vector<8x32xf32>
    %cst_23 = arith.constant 1.000000e+00 : f32
    %101 = vector.broadcast %cst_23 : f32 to vector<8x32xf32>
    %102 = arith.addf %101, %100 : vector<8x32xf32>
    %103 = arith.divf %101, %102 : vector<8x32xf32>
    %104 = vector.extract_strided_slice %97 {offsets = [0, 32], sizes = [8, 32], strides = [1, 1]} : vector<8x128xf32> to vector<8x32xf32>
    %105 = arith.negf %104 : vector<8x32xf32>
    %106 = math.exp %105 : vector<8x32xf32>
    %cst_24 = arith.constant 1.000000e+00 : f32
    %107 = vector.broadcast %cst_24 : f32 to vector<8x32xf32>
    %108 = arith.addf %107, %106 : vector<8x32xf32>
    %109 = arith.divf %107, %108 : vector<8x32xf32>
    %110 = vector.extract_strided_slice %97 {offsets = [0, 64], sizes = [8, 32], strides = [1, 1]} : vector<8x128xf32> to vector<8x32xf32>
    %111 = math.tanh %110 : vector<8x32xf32>
    %112 = vector.extract_strided_slice %97 {offsets = [0, 96], sizes = [8, 32], strides = [1, 1]} : vector<8x128xf32> to vector<8x32xf32>
    %113 = arith.negf %112 : vector<8x32xf32>
    %114 = math.exp %113 : vector<8x32xf32>
    %cst_25 = arith.constant 1.000000e+00 : f32
    %115 = vector.broadcast %cst_25 : f32 to vector<8x32xf32>
    %116 = arith.addf %115, %114 : vector<8x32xf32>
    %117 = arith.divf %115, %116 : vector<8x32xf32>
    %118 = arith.mulf %109, %90 : vector<8x32xf32>
    %119 = arith.mulf %103, %111 : vector<8x32xf32>
    %120 = arith.addf %118, %119 : vector<8x32xf32>
    %121 = math.tanh %120 : vector<8x32xf32>
    %122 = arith.mulf %117, %121 : vector<8x32xf32>
    %c4_i32 = arith.constant 4 : i32
    %123 = arith.index_cast %c4_i32 : i32 to index
    %c0_26 = arith.constant 0 : index
    %c0_27 = arith.constant 0 : index
    %124 = vector.load %arg0[%123, %c0_26, %c0_27] : memref<8x8x128xf32, #tpu.memory_space<vmem>>, vector<1x8x128xf32>
    %125 = vector.shape_cast %124 : vector<1x8x128xf32> to vector<8x128xf32>
    %cst_28 = arith.constant dense<0.000000e+00> : vector<8x128xf32>
    %126 = tpu.matmul %122, %0, %cst_28 {dimension_numbers = #tpu.dot_dimension_numbers<[1], [0], [0], [1], [0, 0, 1, 1], [], []>} : vector<8x32xf32>, vector<32x128xf32>, vector<8x128xf32> -> vector<8x128xf32>
    %127 = arith.addf %125, %126 : vector<8x128xf32>
    %128 = vector.extract_strided_slice %127 {offsets = [0, 0], sizes = [8, 32], strides = [1, 1]} : vector<8x128xf32> to vector<8x32xf32>
    %129 = arith.negf %128 : vector<8x32xf32>
    %130 = math.exp %129 : vector<8x32xf32>
    %cst_29 = arith.constant 1.000000e+00 : f32
    %131 = vector.broadcast %cst_29 : f32 to vector<8x32xf32>
    %132 = arith.addf %131, %130 : vector<8x32xf32>
    %133 = arith.divf %131, %132 : vector<8x32xf32>
    %134 = vector.extract_strided_slice %127 {offsets = [0, 32], sizes = [8, 32], strides = [1, 1]} : vector<8x128xf32> to vector<8x32xf32>
    %135 = arith.negf %134 : vector<8x32xf32>
    %136 = math.exp %135 : vector<8x32xf32>
    %cst_30 = arith.constant 1.000000e+00 : f32
    %137 = vector.broadcast %cst_30 : f32 to vector<8x32xf32>
    %138 = arith.addf %137, %136 : vector<8x32xf32>
    %139 = arith.divf %137, %138 : vector<8x32xf32>
    %140 = vector.extract_strided_slice %127 {offsets = [0, 64], sizes = [8, 32], strides = [1, 1]} : vector<8x128xf32> to vector<8x32xf32>
    %141 = math.tanh %140 : vector<8x32xf32>
    %142 = vector.extract_strided_slice %127 {offsets = [0, 96], sizes = [8, 32], strides = [1, 1]} : vector<8x128xf32> to vector<8x32xf32>
    %143 = arith.negf %142 : vector<8x32xf32>
    %144 = math.exp %143 : vector<8x32xf32>
    %cst_31 = arith.constant 1.000000e+00 : f32
    %145 = vector.broadcast %cst_31 : f32 to vector<8x32xf32>
    %146 = arith.addf %145, %144 : vector<8x32xf32>
    %147 = arith.divf %145, %146 : vector<8x32xf32>
    %148 = arith.mulf %139, %120 : vector<8x32xf32>
    %149 = arith.mulf %133, %141 : vector<8x32xf32>
    %150 = arith.addf %148, %149 : vector<8x32xf32>
    %151 = math.tanh %150 : vector<8x32xf32>
    %152 = arith.mulf %147, %151 : vector<8x32xf32>
    %c5_i32 = arith.constant 5 : i32
    %153 = arith.index_cast %c5_i32 : i32 to index
    %c0_32 = arith.constant 0 : index
    %c0_33 = arith.constant 0 : index
    %154 = vector.load %arg0[%153, %c0_32, %c0_33] : memref<8x8x128xf32, #tpu.memory_space<vmem>>, vector<1x8x128xf32>
    %155 = vector.shape_cast %154 : vector<1x8x128xf32> to vector<8x128xf32>
    %cst_34 = arith.constant dense<0.000000e+00> : vector<8x128xf32>
    %156 = tpu.matmul %152, %0, %cst_34 {dimension_numbers = #tpu.dot_dimension_numbers<[1], [0], [0], [1], [0, 0, 1, 1], [], []>} : vector<8x32xf32>, vector<32x128xf32>, vector<8x128xf32> -> vector<8x128xf32>
    %157 = arith.addf %155, %156 : vector<8x128xf32>
    %158 = vector.extract_strided_slice %157 {offsets = [0, 0], sizes = [8, 32], strides = [1, 1]} : vector<8x128xf32> to vector<8x32xf32>
    %159 = arith.negf %158 : vector<8x32xf32>
    %160 = math.exp %159 : vector<8x32xf32>
    %cst_35 = arith.constant 1.000000e+00 : f32
    %161 = vector.broadcast %cst_35 : f32 to vector<8x32xf32>
    %162 = arith.addf %161, %160 : vector<8x32xf32>
    %163 = arith.divf %161, %162 : vector<8x32xf32>
    %164 = vector.extract_strided_slice %157 {offsets = [0, 32], sizes = [8, 32], strides = [1, 1]} : vector<8x128xf32> to vector<8x32xf32>
    %165 = arith.negf %164 : vector<8x32xf32>
    %166 = math.exp %165 : vector<8x32xf32>
    %cst_36 = arith.constant 1.000000e+00 : f32
    %167 = vector.broadcast %cst_36 : f32 to vector<8x32xf32>
    %168 = arith.addf %167, %166 : vector<8x32xf32>
    %169 = arith.divf %167, %168 : vector<8x32xf32>
    %170 = vector.extract_strided_slice %157 {offsets = [0, 64], sizes = [8, 32], strides = [1, 1]} : vector<8x128xf32> to vector<8x32xf32>
    %171 = math.tanh %170 : vector<8x32xf32>
    %172 = vector.extract_strided_slice %157 {offsets = [0, 96], sizes = [8, 32], strides = [1, 1]} : vector<8x128xf32> to vector<8x32xf32>
    %173 = arith.negf %172 : vector<8x32xf32>
    %174 = math.exp %173 : vector<8x32xf32>
    %cst_37 = arith.constant 1.000000e+00 : f32
    %175 = vector.broadcast %cst_37 : f32 to vector<8x32xf32>
    %176 = arith.addf %175, %174 : vector<8x32xf32>
    %177 = arith.divf %175, %176 : vector<8x32xf32>
    %178 = arith.mulf %169, %150 : vector<8x32xf32>
    %179 = arith.mulf %163, %171 : vector<8x32xf32>
    %180 = arith.addf %178, %179 : vector<8x32xf32>
    %181 = math.tanh %180 : vector<8x32xf32>
    %182 = arith.mulf %177, %181 : vector<8x32xf32>
    %c6_i32 = arith.constant 6 : i32
    %183 = arith.index_cast %c6_i32 : i32 to index
    %c0_38 = arith.constant 0 : index
    %c0_39 = arith.constant 0 : index
    %184 = vector.load %arg0[%183, %c0_38, %c0_39] : memref<8x8x128xf32, #tpu.memory_space<vmem>>, vector<1x8x128xf32>
    %185 = vector.shape_cast %184 : vector<1x8x128xf32> to vector<8x128xf32>
    %cst_40 = arith.constant dense<0.000000e+00> : vector<8x128xf32>
    %186 = tpu.matmul %182, %0, %cst_40 {dimension_numbers = #tpu.dot_dimension_numbers<[1], [0], [0], [1], [0, 0, 1, 1], [], []>} : vector<8x32xf32>, vector<32x128xf32>, vector<8x128xf32> -> vector<8x128xf32>
    %187 = arith.addf %185, %186 : vector<8x128xf32>
    %188 = vector.extract_strided_slice %187 {offsets = [0, 0], sizes = [8, 32], strides = [1, 1]} : vector<8x128xf32> to vector<8x32xf32>
    %189 = arith.negf %188 : vector<8x32xf32>
    %190 = math.exp %189 : vector<8x32xf32>
    %cst_41 = arith.constant 1.000000e+00 : f32
    %191 = vector.broadcast %cst_41 : f32 to vector<8x32xf32>
    %192 = arith.addf %191, %190 : vector<8x32xf32>
    %193 = arith.divf %191, %192 : vector<8x32xf32>
    %194 = vector.extract_strided_slice %187 {offsets = [0, 32], sizes = [8, 32], strides = [1, 1]} : vector<8x128xf32> to vector<8x32xf32>
    %195 = arith.negf %194 : vector<8x32xf32>
    %196 = math.exp %195 : vector<8x32xf32>
    %cst_42 = arith.constant 1.000000e+00 : f32
    %197 = vector.broadcast %cst_42 : f32 to vector<8x32xf32>
    %198 = arith.addf %197, %196 : vector<8x32xf32>
    %199 = arith.divf %197, %198 : vector<8x32xf32>
    %200 = vector.extract_strided_slice %187 {offsets = [0, 64], sizes = [8, 32], strides = [1, 1]} : vector<8x128xf32> to vector<8x32xf32>
    %201 = math.tanh %200 : vector<8x32xf32>
    %202 = vector.extract_strided_slice %187 {offsets = [0, 96], sizes = [8, 32], strides = [1, 1]} : vector<8x128xf32> to vector<8x32xf32>
    %203 = arith.negf %202 : vector<8x32xf32>
    %204 = math.exp %203 : vector<8x32xf32>
    %cst_43 = arith.constant 1.000000e+00 : f32
    %205 = vector.broadcast %cst_43 : f32 to vector<8x32xf32>
    %206 = arith.addf %205, %204 : vector<8x32xf32>
    %207 = arith.divf %205, %206 : vector<8x32xf32>
    %208 = arith.mulf %199, %180 : vector<8x32xf32>
    %209 = arith.mulf %193, %201 : vector<8x32xf32>
    %210 = arith.addf %208, %209 : vector<8x32xf32>
    %211 = math.tanh %210 : vector<8x32xf32>
    %212 = arith.mulf %207, %211 : vector<8x32xf32>
    %c7_i32 = arith.constant 7 : i32
    %213 = arith.index_cast %c7_i32 : i32 to index
    %c0_44 = arith.constant 0 : index
    %c0_45 = arith.constant 0 : index
    %214 = vector.load %arg0[%213, %c0_44, %c0_45] : memref<8x8x128xf32, #tpu.memory_space<vmem>>, vector<1x8x128xf32>
    %215 = vector.shape_cast %214 : vector<1x8x128xf32> to vector<8x128xf32>
    %cst_46 = arith.constant dense<0.000000e+00> : vector<8x128xf32>
    %216 = tpu.matmul %212, %0, %cst_46 {dimension_numbers = #tpu.dot_dimension_numbers<[1], [0], [0], [1], [0, 0, 1, 1], [], []>} : vector<8x32xf32>, vector<32x128xf32>, vector<8x128xf32> -> vector<8x128xf32>
    %217 = arith.addf %215, %216 : vector<8x128xf32>
    %218 = vector.extract_strided_slice %217 {offsets = [0, 0], sizes = [8, 32], strides = [1, 1]} : vector<8x128xf32> to vector<8x32xf32>
    %219 = arith.negf %218 : vector<8x32xf32>
    %220 = math.exp %219 : vector<8x32xf32>
    %cst_47 = arith.constant 1.000000e+00 : f32
    %221 = vector.broadcast %cst_47 : f32 to vector<8x32xf32>
    %222 = arith.addf %221, %220 : vector<8x32xf32>
    %223 = arith.divf %221, %222 : vector<8x32xf32>
    %224 = vector.extract_strided_slice %217 {offsets = [0, 32], sizes = [8, 32], strides = [1, 1]} : vector<8x128xf32> to vector<8x32xf32>
    %225 = arith.negf %224 : vector<8x32xf32>
    %226 = math.exp %225 : vector<8x32xf32>
    %cst_48 = arith.constant 1.000000e+00 : f32
    %227 = vector.broadcast %cst_48 : f32 to vector<8x32xf32>
    %228 = arith.addf %227, %226 : vector<8x32xf32>
    %229 = arith.divf %227, %228 : vector<8x32xf32>
    %230 = vector.extract_strided_slice %217 {offsets = [0, 64], sizes = [8, 32], strides = [1, 1]} : vector<8x128xf32> to vector<8x32xf32>
    %231 = math.tanh %230 : vector<8x32xf32>
    %232 = vector.extract_strided_slice %217 {offsets = [0, 96], sizes = [8, 32], strides = [1, 1]} : vector<8x128xf32> to vector<8x32xf32>
    %233 = arith.negf %232 : vector<8x32xf32>
    %234 = math.exp %233 : vector<8x32xf32>
    %cst_49 = arith.constant 1.000000e+00 : f32
    %235 = vector.broadcast %cst_49 : f32 to vector<8x32xf32>
    %236 = arith.addf %235, %234 : vector<8x32xf32>
    %237 = arith.divf %235, %236 : vector<8x32xf32>
    %238 = arith.mulf %229, %210 : vector<8x32xf32>
    %239 = arith.mulf %223, %231 : vector<8x32xf32>
    %240 = arith.addf %238, %239 : vector<8x32xf32>
    %241 = math.tanh %240 : vector<8x32xf32>
    %242 = arith.mulf %237, %241 : vector<8x32xf32>
    %c8_i32 = arith.constant 8 : i32
    %c0_50 = arith.constant 0 : index
    %c0_51 = arith.constant 0 : index
    %243 = vector.load %arg5[%c0_50, %c0_51] : memref<32x5120xf32, #tpu.memory_space<vmem>>, vector<32x5120xf32>
    %cst_52 = arith.constant dense<0.000000e+00> : vector<8x5120xf32>
    %244 = tpu.matmul %242, %243, %cst_52 {dimension_numbers = #tpu.dot_dimension_numbers<[1], [0], [0], [1], [0, 0, 1, 1], [], []>} : vector<8x32xf32>, vector<32x5120xf32>, vector<8x5120xf32> -> vector<8x5120xf32>
    %c0_53 = arith.constant 0 : index
    %c0_54 = arith.constant 0 : index
    %245 = vector.load %arg6[%c0_53, %c0_54] : memref<1x5120xf32, #tpu.memory_space<vmem>>, vector<1x5120xf32>
    %246 = vector.broadcast %245 : vector<1x5120xf32> to vector<8x5120xf32>
    %247 = arith.addf %244, %246 : vector<8x5120xf32>
    %c0_55 = arith.constant 0 : index
    %c0_56 = arith.constant 0 : index
    %248 = vector.load %arg2[%c0_55, %c0_56] : memref<8x8xf32, #tpu.memory_space<vmem>>, vector<8x8xf32>
    %c0_57 = arith.constant 0 : index
    %c0_58 = arith.constant 0 : index
    %249 = vector.load %arg3[%c0_57, %c0_58] : memref<8x5120xf32, #tpu.memory_space<vmem>>, vector<8x5120xf32>
    %cst_59 = arith.constant dense<0.000000e+00> : vector<8x5120xf32>
    %250 = tpu.matmul %248, %249, %cst_59 {dimension_numbers = #tpu.dot_dimension_numbers<[1], [0], [0], [1], [0, 0, 1, 1], [], []>} : vector<8x8xf32>, vector<8x5120xf32>, vector<8x5120xf32> -> vector<8x5120xf32>
    %c0_60 = arith.constant 0 : index
    %c0_61 = arith.constant 0 : index
    %251 = vector.load %arg4[%c0_60, %c0_61] : memref<1x5120xf32, #tpu.memory_space<vmem>>, vector<1x5120xf32>
    %252 = vector.broadcast %251 : vector<1x5120xf32> to vector<8x5120xf32>
    %253 = arith.addf %250, %252 : vector<8x5120xf32>
    %254 = arith.mulf %247, %253 : vector<8x5120xf32>
    %255 = vector.extract_strided_slice %254 {offsets = [0, 0], sizes = [8, 1024], strides = [1, 1]} : vector<8x5120xf32> to vector<8x1024xf32>
    %256 = vector.extract_strided_slice %254 {offsets = [0, 1024], sizes = [8, 1024], strides = [1, 1]} : vector<8x5120xf32> to vector<8x1024xf32>
    %257 = arith.addf %255, %256 : vector<8x1024xf32>
    %258 = vector.extract_strided_slice %254 {offsets = [0, 2048], sizes = [8, 1024], strides = [1, 1]} : vector<8x5120xf32> to vector<8x1024xf32>
    %259 = arith.addf %257, %258 : vector<8x1024xf32>
    %260 = vector.extract_strided_slice %254 {offsets = [0, 3072], sizes = [8, 1024], strides = [1, 1]} : vector<8x5120xf32> to vector<8x1024xf32>
    %261 = arith.addf %259, %260 : vector<8x1024xf32>
    %262 = vector.extract_strided_slice %254 {offsets = [0, 4096], sizes = [8, 1024], strides = [1, 1]} : vector<8x5120xf32> to vector<8x1024xf32>
    %263 = arith.addf %261, %262 : vector<8x1024xf32>
    %cst_62 = arith.constant 0.000000e+00 : f32
    %264 = vector.broadcast %cst_62 : f32 to vector<8x1024xf32>
    %265 = arith.maximumf %263, %264 : vector<8x1024xf32>
    %266 = math.sqrt %265 : vector<8x1024xf32>
    %cst_63 = arith.constant 0.000000e+00 : f32
    %267 = vector.broadcast %cst_63 : f32 to vector<8x1024xf32>
    %268 = arith.subf %267, %263 : vector<8x1024xf32>
    %cst_64 = arith.constant 0.000000e+00 : f32
    %269 = vector.broadcast %cst_64 : f32 to vector<8x1024xf32>
    %270 = arith.maximumf %268, %269 : vector<8x1024xf32>
    %271 = math.sqrt %270 : vector<8x1024xf32>
    %272 = arith.subf %266, %271 : vector<8x1024xf32>
    %273 = arith.mulf %272, %272 : vector<8x1024xf32>
    %cst_65 = arith.constant dense<0.000000e+00> : vector<8xf32>
    %274 = vector.multi_reduction <add>, %273, %cst_65 [1] : vector<8x1024xf32> to vector<8xf32>
    %275 = vector.shape_cast %274 : vector<8xf32> to vector<8x1xf32>
    %276 = math.sqrt %275 : vector<8x1xf32>
    %cst_66 = arith.constant 9.99999996E-13 : f32
    %277 = vector.broadcast %cst_66 : f32 to vector<8x1xf32>
    %278 = arith.maximumf %276, %277 : vector<8x1xf32>
    %279 = vector.broadcast %278 : vector<8x1xf32> to vector<8x1024xf32>
    %280 = arith.divf %272, %279 : vector<8x1024xf32>
    %c0_67 = arith.constant 0 : index
    %c0_68 = arith.constant 0 : index
    %281 = vector.load %arg7[%c0_67, %c0_68] : memref<1024x128xf32, #tpu.memory_space<vmem>>, vector<1024x128xf32>
    %cst_69 = arith.constant dense<0.000000e+00> : vector<8x128xf32>
    %282 = tpu.matmul %280, %281, %cst_69 {dimension_numbers = #tpu.dot_dimension_numbers<[1], [0], [0], [1], [0, 0, 1, 1], [], []>} : vector<8x1024xf32>, vector<1024x128xf32>, vector<8x128xf32> -> vector<8x128xf32>
    %c0_70 = arith.constant 0 : index
    %c0_71 = arith.constant 0 : index
    %283 = vector.load %arg8[%c0_70, %c0_71] : memref<1x128xf32, #tpu.memory_space<vmem>>, vector<1x128xf32>
    %284 = vector.broadcast %283 : vector<1x128xf32> to vector<8x128xf32>
    %285 = arith.addf %282, %284 : vector<8x128xf32>
    %286 = tpu.iota {dimensions = array<i32: 1>} : vector<8x128xi32>
    %c16_i32 = arith.constant 16 : i32
    %287 = vector.broadcast %c16_i32 : i32 to vector<8x128xi32>
    %288 = arith.cmpi slt, %286, %287 : vector<8x128xi32>
    %cst_72 = arith.constant -1.000000e+30 : f32
    %289 = vector.broadcast %cst_72 : f32 to vector<8x128xf32>
    %290 = arith.select %288, %285, %289 : vector<8x128xi1>, vector<8x128xf32>
    %cst_73 = arith.constant dense<0xFF800000> : vector<8xf32>
    %291 = vector.multi_reduction <maximumf>, %290, %cst_73 [1] : vector<8x128xf32> to vector<8xf32>
    %292 = vector.shape_cast %291 : vector<8xf32> to vector<8x1xf32>
    %293 = vector.broadcast %292 : vector<8x1xf32> to vector<8x128xf32>
    %294 = arith.subf %290, %293 : vector<8x128xf32>
    %295 = math.exp %294 : vector<8x128xf32>
    %cst_74 = arith.constant dense<0.000000e+00> : vector<8xf32>
    %296 = vector.multi_reduction <add>, %295, %cst_74 [1] : vector<8x128xf32> to vector<8xf32>
    %297 = vector.shape_cast %296 : vector<8xf32> to vector<8x1xf32>
    %298 = vector.broadcast %297 : vector<8x1xf32> to vector<8x128xf32>
    %299 = arith.divf %295, %298 : vector<8x128xf32>
    %c0_75 = arith.constant 0 : index
    %c0_76 = arith.constant 0 : index
    %300 = vector.load %arg9[%c0_75, %c0_76] : memref<8x128xf32, #tpu.memory_space<vmem>>, vector<8x128xf32>
    tpu.vector_store %arg9[%c0_75, %c0_76], %299 {strides = array<i32>} : memref<8x128xf32, #tpu.memory_space<vmem>>, vector<8x128xf32>,
    return
  }
}

</mosaic_0001>

<llo_original>
// kernel: tpu_custom_call.1
$region0: #{tpu_custom_call.1}
  #allocation0 [shape = 'u32[]', space=smem, size = 0x4, offset = 0x4, fixed_abs, tag = 'smem constant byte address 0x4 - core index']
  #allocation1 [shape = 'u32[144,128]{1,0:T(1,128)}', space=vmem, size = 0x12000, scoped, tag = 'internal scratch']
  %s0 = inlined_call_operand.hbm [shape: f32[8,8,128], index: 0, kind: input, shape index: {}]
  %s1 = inlined_call_operand.hbm [shape: f32[32,128], index: 1, kind: input, shape index: {}]
  %s2 = inlined_call_operand.hbm [shape: f32[8,8], index: 2, kind: input, shape index: {}]
  %s3 = inlined_call_operand.hbm [shape: f32[8,5120], index: 3, kind: input, shape index: {}]
  %s4 = inlined_call_operand.hbm [shape: f32[1,5120], index: 4, kind: input, shape index: {}]
  %s5 = inlined_call_operand.hbm [shape: f32[32,5120], index: 5, kind: input, shape index: {}]
  %s6 = inlined_call_operand.hbm [shape: f32[1,5120], index: 6, kind: input, shape index: {}]
  %s7 = inlined_call_operand.hbm [shape: f32[1024,128], index: 7, kind: input, shape index: {}]
  %s8 = inlined_call_operand.vmem [shape: f32[1,128], index: 8, kind: input, shape index: {}]
  %s9 = inlined_call_operand.hbm [shape: f32[8,128], index: 9, kind: output, shape index: {}]
  %s10 = sld [smem:[#allocation0]]
  $region78: #{tpu_custom_call.1} parent=0
    _
  %s12 = ssub.s32 1, %s10
  %s13 = scalar_select 0, %s12, %s10
  $region1: #{tpu_custom_call.1} parent=0
    #allocation2 [shape = 'u8[32768]{0}', space=vmem, size = 0x8000, scoped, tag = 'input window, operand 0, single buffered']
    #allocation3 [shape = 's32[1]{0}', space=sflag, size = 0x4, scoped, tag = 'scoped memory for tpu_custom_call.1']
    #allocation4 [shape = 's32[1]{0}', space=sflag, size = 0x4, scoped, tag = 'scoped memory for tpu_custom_call.1']
    #allocation5 [shape = 'u8[16384]{0}', space=vmem, size = 0x4000, scoped, tag = 'input window, operand 1, single buffered']
    #allocation6 [shape = 's32[1]{0}', space=sflag, size = 0x4, scoped, tag = 'scoped memory for tpu_custom_call.1']
    #allocation7 [shape = 'u8[4096]{0}', space=vmem, size = 0x1000, scoped, tag = 'input window, operand 2, single buffered']
    #allocation8 [shape = 'u8[163840]{0}', space=vmem, size = 0x28000, scoped, tag = 'input window, operand 3, single buffered']
    #allocation9 [shape = 's32[1]{0}', space=sflag, size = 0x4, scoped, tag = 'scoped memory for tpu_custom_call.1']
    #allocation10 [shape = 'u8[20480]{0}', space=vmem, size = 0x5000, scoped, tag = 'input window, operand 4, single buffered']
    #allocation11 [shape = 'u8[655360]{0}', space=vmem, size = 0xa0000, scoped, tag = 'input window, operand 5, single buffered']
    #allocation12 [shape = 's32[1]{0}', space=sflag, size = 0x4, scoped, tag = 'scoped memory for tpu_custom_call.1']
    #allocation13 [shape = 'u8[20480]{0}', space=vmem, size = 0x5000, scoped, tag = 'input window, operand 6, single buffered']
    #allocation14 [shape = 'u8[524288]{0}', space=vmem, size = 0x80000, scoped, tag = 'input window, operand 7, single buffered']
    #allocation15 [shape = 's32[1]{0}', space=sflag, size = 0x4, scoped, tag = 'scoped memory for tpu_custom_call.1']
    #allocation16 [shape = 'u8[4096]{0}', space=vmem, size = 0x1000, scoped, tag = 'output window, operand 0, single buffered']
    %14 = vsyncpa [#allocation3], 0
    %15 = vsyncpa [#allocation6], 0
    %16 = vsyncpa [#allocation9], 0
    %17 = vsyncpa [#allocation12], 0
    %18 = vsyncpa [#allocation15], 0
    %19 = vsyncpa [#allocation4], 0
    // Predicated region
    $region2: #{tpu_custom_call.1} parent=1 // pred_check
      _
    $region3: #{tpu_custom_call.1} parent=1 // pred_check_branch
      %21 = sbr.rel (0) target = $region5
    $region4: #{tpu_custom_call.1} parent=1 // pred_region
      %s23 = ssub.s32 1024, 1024
      %24 = vsyncadd [#allocation3], %s23
      %s25 = sshll.u32 [#allocation2], 4
      %s26 = int_to_ptr.vmem [resolvable:$true] %s25
      %31 = dma.hbm_to_vmem [thread:$0]  %s0, 1024, %s26, [#allocation3], 128, 128, 8
    $region5: #{tpu_custom_call.1} parent=1 // pred_fallthru
      _
    // Predicated region
    $region6: #{tpu_custom_call.1} parent=1 // pred_check
      _
    $region7: #{tpu_custom_call.1} parent=1 // pred_check_branch
      %33 = sbr.rel (0) target = $region9
    $region8: #{tpu_custom_call.1} parent=1 // pred_region
      %s35 = ssub.s32 512, 512
      %36 = vsyncadd [#allocation6], %s35
      %s37 = sshll.u32 [#allocation5], 4
      %s38 = int_to_ptr.vmem [resolvable:$true] %s37
      %43 = dma.hbm_to_vmem [thread:$0]  %s1, 512, %s38, [#allocation6], 128, 128, 8
    $region9: #{tpu_custom_call.1} parent=1 // pred_fallthru
      _
    // Predicated region
    $region10: #{tpu_custom_call.1} parent=1 // pred_check
      _
    $region11: #{tpu_custom_call.1} parent=1 // pred_check_branch
      %45 = sbr.rel (0) target = $region13
    $region12: #{tpu_custom_call.1} parent=1 // pred_region
      %s47 = ssub.s32 128, 128
      %48 = vsyncadd [#allocation6], %s47
      %s50 = sshll.u32 [#allocation7], 4
      %s51 = int_to_ptr.vmem [resolvable:$true] %s50
      %53 = dma.hbm_to_vmem [thread:$0]  %s2, 128, %s51, [#allocation6]
    $region13: #{tpu_custom_call.1} parent=1 // pred_fallthru
      _
    // Predicated region
    $region14: #{tpu_custom_call.1} parent=1 // pred_check
      _
    $region15: #{tpu_custom_call.1} parent=1 // pred_check_branch
      %55 = sbr.rel (0) target = $region17
    $region16: #{tpu_custom_call.1} parent=1 // pred_region
      %s57 = ssub.s32 5120, 5120
      %58 = vsyncadd [#allocation9], %s57
      %s60 = sshll.u32 [#allocation8], 4
      %s61 = int_to_ptr.vmem [resolvable:$true] %s60
      %63 = dma.hbm_to_vmem [thread:$0]  %s3, 5120, %s61, [#allocation9]
    $region17: #{tpu_custom_call.1} parent=1 // pred_fallthru
      _
    // Predicated region
    $region18: #{tpu_custom_call.1} parent=1 // pred_check
      _
    $region19: #{tpu_custom_call.1} parent=1 // pred_check_branch
      %65 = sbr.rel (0) target = $region21
    $region20: #{tpu_custom_call.1} parent=1 // pred_region
      %s67 = ssub.s32 640, 640
      %68 = vsyncadd [#allocation9], %s67
      %s70 = sshll.u32 [#allocation10], 4
      %s71 = int_to_ptr.vmem [resolvable:$true] %s70
      %73 = dma.hbm_to_vmem [thread:$0]  %s4, 640, %s71, [#allocation9]
    $region21: #{tpu_custom_call.1} parent=1 // pred_fallthru
      _
    // Predicated region
    $region22: #{tpu_custom_call.1} parent=1 // pred_check
      _
    $region23: #{tpu_custom_call.1} parent=1 // pred_check_branch
      %75 = sbr.rel (0) target = $region25
    $region24: #{tpu_custom_call.1} parent=1 // pred_region
      %s77 = ssub.s32 20480, 20480
      %78 = vsyncadd [#allocation12], %s77
      %s79 = sshll.u32 [#allocation11], 4
      %s80 = int_to_ptr.vmem [resolvable:$true] %s79
      %85 = dma.hbm_to_vmem [thread:$0]  %s5, 20480, %s80, [#allocation12], 5120, 5120, 320
    $region25: #{tpu_custom_call.1} parent=1 // pred_fallthru
      _
    // Predicated region
    $region26: #{tpu_custom_call.1} parent=1 // pred_check
      _
    $region27: #{tpu_custom_call.1} parent=1 // pred_check_branch
      %87 = sbr.rel (0) target = $region29
    $region28: #{tpu_custom_call.1} parent=1 // pred_region
      %s89 = ssub.s32 640, 640
      %90 = vsyncadd [#allocation12], %s89
      %s92 = sshll.u32 [#allocation13], 4
      %s93 = int_to_ptr.vmem [resolvable:$true] %s92
      %95 = dma.hbm_to_vmem [thread:$0]  %s6, 640, %s93, [#allocation12]
    $region29: #{tpu_custom_call.1} parent=1 // pred_fallthru
      _
    // Predicated region
    $region30: #{tpu_custom_call.1} parent=1 // pred_check
      _
    $region31: #{tpu_custom_call.1} parent=1 // pred_check_branch
      %97 = sbr.rel (0) target = $region33
    $region32: #{tpu_custom_call.1} parent=1 // pred_region
      %s99 = ssub.s32 16384, 16384
      %100 = vsyncadd [#allocation15], %s99
      %s101 = sshll.u32 [#allocation14], 4
      %s102 = int_to_ptr.vmem [resolvable:$true] %s101
      %107 = dma.hbm_to_vmem [thread:$0]  %s7, 16384, %s102, [#allocation15], 128, 128, 8
    $region33: #{tpu_custom_call.1} parent=1 // pred_fallthru
      _
    // Predicated region
    $region34: #{tpu_custom_call.1} parent=1 // pred_check
      _
    $region35: #{tpu_custom_call.1} parent=1 // pred_check_branch
      %109 = sbr.rel (0) target = $region37
    $region36: #{tpu_custom_call.1} parent=1 // pred_region
      _
    $region37: #{tpu_custom_call.1} parent=1 // pred_fallthru
      _
    // Predicated region
    $region38: #{tpu_custom_call.1} parent=1 // pred_check
      _
    $region39: #{tpu_custom_call.1} parent=1 // pred_check_branch
      %111 = sbr.rel (0) target = $region41
    $region40: #{tpu_custom_call.1} parent=1 // pred_region
      %112 = dma.done [#allocation3], 1024
    $region41: #{tpu_custom_call.1} parent=1 // pred_fallthru
      _
    // Predicated region
    $region42: #{tpu_custom_call.1} parent=1 // pred_check
      _
    $region43: #{tpu_custom_call.1} parent=1 // pred_check_branch
      %114 = sbr.rel (0) target = $region45
    $region44: #{tpu_custom_call.1} parent=1 // pred_region
      %115 = dma.done [#allocation6], 512
    $region45: #{tpu_custom_call.1} parent=1 // pred_fallthru
      _
    // Predicated region
    $region46: #{tpu_custom_call.1} parent=1 // pred_check
      _
    $region47: #{tpu_custom_call.1} parent=1 // pred_check_branch
      %117 = sbr.rel (0) target = $region49
    $region48: #{tpu_custom_call.1} parent=1 // pred_region
      %118 = dma.done [#allocation6], 128
    $region49: #{tpu_custom_call.1} parent=1 // pred_fallthru
      _
    // Predicated region
    $region50: #{tpu_custom_call.1} parent=1 // pred_check
      _
    $region51: #{tpu_custom_call.1} parent=1 // pred_check_branch
      %120 = sbr.rel (0) target = $region53
    $region52: #{tpu_custom_call.1} parent=1 // pred_region
      %121 = dma.done [#allocation9], 5120
    $region53: #{tpu_custom_call.1} parent=1 // pred_fallthru
      _
    // Predicated region
    $region54: #{tpu_custom_call.1} parent=1 // pred_check
      _
    $region55: #{tpu_custom_call.1} parent=1 // pred_check_branch
      %123 = sbr.rel (0) target = $region57
    $region56: #{tpu_custom_call.1} parent=1 // pred_region
      %124 = dma.done [#allocation9], 640
    $region57: #{tpu_custom_call.1} parent=1 // pred_fallthru
      _
    // Predicated region
    $region58: #{tpu_custom_call.1} parent=1 // pred_check
      _
    $region59: #{tpu_custom_call.1} parent=1 // pred_check_branch
      %126 = sbr.rel (0) target = $region61
    $region60: #{tpu_custom_call.1} parent=1 // pred_region
      %127 = dma.done [#allocation12], 20480
    $region61: #{tpu_custom_call.1} parent=1 // pred_fallthru
      _
    // Predicated region
    $region62: #{tpu_custom_call.1} parent=1 // pred_check
      _
    $region63: #{tpu_custom_call.1} parent=1 // pred_check_branch
      %129 = sbr.rel (0) target = $region65
    $region64: #{tpu_custom_call.1} parent=1 // pred_region
      %130 = dma.done [#allocation12], 640
    $region65: #{tpu_custom_call.1} parent=1 // pred_fallthru
      _
    // Predicated region
    $region66: #{tpu_custom_call.1} parent=1 // pred_check
      _
    $region67: #{tpu_custom_call.1} parent=1 // pred_check_branch
      %132 = sbr.rel (0) target = $region69
    $region68: #{tpu_custom_call.1} parent=1 // pred_region
      %133 = dma.done [#allocation15], 16384
    $region69: #{tpu_custom_call.1} parent=1 // pred_fallthru
      _
    %v134 = vld [vmem:[#allocation5] sm:$0xff]
    %v135 = vld [vmem:[#allocation5 + $0x8] sm:$0xff]
    %v136 = vld [vmem:[#allocation5 + $0x10] sm:$0xff]
    %v137 = vld [vmem:[#allocation5 + $0x18] sm:$0xff]
    %v138 = vld [vmem:[#allocation2] sm:$0xff]
    %vm139 = vcmask 261120
    %v141 = vsel %vm139, 0.0, 0
    %143 = vmatprep.subr.mxu0 0.0
    %144 = vmatpush1.msra.mxu0 0.0
    %145 = vmatprep.subr.mxu0 0.0
    %146 = vmatpush1.msra.mxu0 0.0
    %147 = vmatprep.subr.mxu0 0.0
    %148 = vmatpush1.msra.mxu0 0.0
    %149 = vmatprep.subr.mxu0 0.0
    %150 = vmatpush1.msra.mxu0 0.0
    %151 = vmatprep.subr.mxu0 0.0
    %152 = vmatpush1.msra.mxu0 0.0
    %153 = vmatprep.subr.mxu0 0.0
    %154 = vmatpush1.msra.mxu0 0.0
    %155 = vmatprep.subr.mxu0 0.0
    %156 = vmatpush1.msra.mxu0 0.0
    %157 = vmatprep.subr.mxu0 0.0
    %158 = vmatpush1.msra.mxu0 0.0
    %159 = vmatprep.subr.mxu0 0.0
    %160 = vmatpush1.msra.mxu0 0.0
    %161 = vmatprep.subr.mxu0 0.0
    %162 = vmatpush1.msra.mxu0 0.0
    %163 = vmatprep.subr.mxu0 0.0
    %164 = vmatpush1.msra.mxu0 0.0
    %165 = vmatprep.subr.mxu0 0.0
    %166 = vmatpush1.msra.mxu0 0.0
    %167 = vmatprep.subr.mxu0 0.0
    %168 = vmatpush1.msra.mxu0 %v137
    %169 = vmatprep.subr.mxu0 0.0
    %170 = vmatpush1.msra.mxu0 %v136
    %171 = vmatprep.subr.mxu0 0.0
    %172 = vmatpush1.msra.mxu0 %v135
    %173 = vmatprep.subr.mxu0 0.0
    %174 = vmatpush1.msra.mxu0 %v134
    %175 = vmatprep.subr.mxu0 0.0
    %176 = vmatpush2.msra.mxu0 0.0
    %177 = vmatprep.subr.mxu0 0.0
    %178 = vmatpush2.msra.mxu0 0.0
    %179 = vmatprep.subr.mxu0 0.0
    %180 = vmatpush2.msra.mxu0 0.0
    %181 = vmatprep.subr.mxu0 0.0
    %182 = vmatpush2.msra.mxu0 0.0
    %183 = vmatprep.subr.mxu0 0.0
    %184 = vmatpush2.msra.mxu0 0.0
    %185 = vmatprep.subr.mxu0 0.0
    %186 = vmatpush2.msra.mxu0 0.0
    %187 = vmatprep.subr.mxu0 0.0
    %188 = vmatpush2.msra.mxu0 0.0
    %189 = vmatprep.subr.mxu0 0.0
    %190 = vmatpush2.msra.mxu0 0.0
    %191 = vmatprep.subr.mxu0 0.0
    %192 = vmatpush2.msra.mxu0 0.0
    %193 = vmatprep.subr.mxu0 0.0
    %194 = vmatpush2.msra.mxu0 0.0
    %195 = vmatprep.subr.mxu0 0.0
    %196 = vmatpush2.msra.mxu0 0.0
    %197 = vmatprep.subr.mxu0 0.0
    %198 = vmatpush2.msra.mxu0 0.0
    %199 = vmatprep.subr.mxu0 0.0
    %200 = vmatpush2.msra.mxu0 0.0
    %201 = vmatprep.subr.mxu0 0.0
    %202 = vmatpush2.msra.mxu0 0.0
    %203 = vmatprep.subr.mxu0 0.0
    %204 = vmatpush2.msra.mxu0 0.0
    %205 = vmatprep.subr.mxu0 0.0
    %206 = vmatpush2.msra.mxu0 0.0
    %207 = vmatprep.mubr.f32.mxu0 0.0
    %208 = vmatmul.mubr.f32.gmra.mxu0 %v141
    %v209 = vpop.f32.mrf.mxu0
    %v210 = vadd.f32 0.0, %v209
    %v211 = vpop.f32.mrf.mxu0
    %212 = vdwg.mxu0
    %v213 = vadd.f32 %v138, %v210
    %v214 = vxor.u32 %v213, 2147483648
    %v215 = vmul.f32 %v214, 1.442695
    %v216 = vpow.pop %v215
    %v217 = vadd.f32 %v216, 1.0
    %v218 = vrcp.pop %v217
    %v219 = vmul.f32 1.0, %v218
    %v220 = vtanh.pop %v213
    %v221 = vmul.f32 %v219, 0.0
    %223 = vrot.lane.b32.xlu0 %v220, 64
    %v224 = vpop.permute.xlu0 %223
    %v226 = vmul.f32 %v219, %v224
    %228 = vrot.lane.b32.xlu0 %v226, 32
    %v229 = vpop.permute.xlu0 %228
    %v231 = vadd.f32 %v221, %v229
    %v232 = vtanh.pop %v231
    %234 = vrot.lane.b32.xlu0 %v232, 64
    %v235 = vpop.permute.xlu0 %234
    %v237 = vmul.f32 %v219, %v235
    %s238 = scalar_lea.vmem [#allocation2], 8
    %v239 = vld [vmem:[%s238] sm:$0xff]
    %241 = vrot.lane.b32.xlu0 %v237, 32
    %v242 = vpop.permute.xlu0 %241
    %v243 = vsel %vm139, %v242, 0
    %245 = vmatprep.subr.mxu0 0.0
    %246 = vmatpush1.msra.mxu0 0.0
    %247 = vmatprep.subr.mxu0 0.0
    %248 = vmatpush1.msra.mxu0 0.0
    %249 = vmatprep.subr.mxu0 0.0
    %250 = vmatpush1.msra.mxu0 0.0
    %251 = vmatprep.subr.mxu0 0.0
    %252 = vmatpush1.msra.mxu0 0.0
    %253 = vmatprep.subr.mxu0 0.0
    %254 = vmatpush1.msra.mxu0 0.0
    %255 = vmatprep.subr.mxu0 0.0
    %256 = vmatpush1.msra.mxu0 0.0
    %257 = vmatprep.subr.mxu0 0.0
    %258 = vmatpush1.msra.mxu0 0.0
    %259 = vmatprep.subr.mxu0 0.0
    %260 = vmatpush1.msra.mxu0 0.0
    %261 = vmatprep.subr.mxu0 0.0
    %262 = vmatpush1.msra.mxu0 0.0
    %263 = vmatprep.subr.mxu0 0.0
    %264 = vmatpush1.msra.mxu0 0.0
    %265 = vmatprep.subr.mxu0 0.0
    %266 = vmatpush1.msra.mxu0 0.0
    %267 = vmatprep.subr.mxu0 0.0
    %268 = vmatpush1.msra.mxu0 0.0
    %269 = vmatprep.subr.mxu0 0.0
    %270 = vmatpush1.msra.mxu0 %v137
    %271 = vmatprep.subr.mxu0 0.0
    %272 = vmatpush1.msra.mxu0 %v136
    %273 = vmatprep.subr.mxu0 0.0
    %274 = vmatpush1.msra.mxu0 %v135
    %275 = vmatprep.subr.mxu0 0.0
    %276 = vmatpush1.msra.mxu0 %v134
    %277 = vmatprep.subr.mxu0 0.0
    %278 = vmatpush2.msra.mxu0 0.0
    %279 = vmatprep.subr.mxu0 0.0
    %280 = vmatpush2.msra.mxu0 0.0
    %281 = vmatprep.subr.mxu0 0.0
    %282 = vmatpush2.msra.mxu0 0.0
    %283 = vmatprep.subr.mxu0 0.0
    %284 = vmatpush2.msra.mxu0 0.0
    %285 = vmatprep.subr.mxu0 0.0
    %286 = vmatpush2.msra.mxu0 0.0
    %287 = vmatprep.subr.mxu0 0.0
    %288 = vmatpush2.msra.mxu0 0.0
    %289 = vmatprep.subr.mxu0 0.0
    %290 = vmatpush2.msra.mxu0 0.0
    %291 = vmatprep.subr.mxu0 0.0
    %292 = vmatpush2.msra.mxu0 0.0
    %293 = vmatprep.subr.mxu0 0.0
    %294 = vmatpush2.msra.mxu0 0.0
    %295 = vmatprep.subr.mxu0 0.0
    %296 = vmatpush2.msra.mxu0 0.0
    %297 = vmatprep.subr.mxu0 0.0
    %298 = vmatpush2.msra.mxu0 0.0
    %299 = vmatprep.subr.mxu0 0.0
    %300 = vmatpush2.msra.mxu0 0.0
    %301 = vmatprep.subr.mxu0 0.0
    %302 = vmatpush2.msra.mxu0 0.0
    %303 = vmatprep.subr.mxu0 0.0
    %304 = vmatpush2.msra.mxu0 0.0
    %305 = vmatprep.subr.mxu0 0.0
    %306 = vmatpush2.msra.mxu0 0.0
    %307 = vmatprep.subr.mxu0 0.0
    %308 = vmatpush2.msra.mxu0 0.0
    %309 = vmatprep.mubr.f32.mxu0 0.0
    %310 = vmatmul.mubr.f32.gmra.mxu0 %v243
    %v311 = vpop.f32.mrf.mxu0
    %v312 = vadd.f32 0.0, %v311
    %v313 = vpop.f32.mrf.mxu0
    %314 = vdwg.mxu0
    %v315 = vadd.f32 %v239, %v312
    %v316 = vxor.u32 %v315, 2147483648
    %v317 = vmul.f32 %v316, 1.442695
    %v318 = vpow.pop %v317
    %v319 = vadd.f32 %v318, 1.0
    %v320 = vrcp.pop %v319
    %v321 = vmul.f32 1.0, %v320
    %v322 = vtanh.pop %v315
    %v323 = vmul.f32 %v321, %v231
    %325 = vrot.lane.b32.xlu0 %v322, 64
    %v326 = vpop.permute.xlu0 %325
    %v328 = vmul.f32 %v321, %v326
    %330 = vrot.lane.b32.xlu0 %v328, 32
    %v331 = vpop.permute.xlu0 %330
    %v333 = vadd.f32 %v323, %v331
    %v334 = vtanh.pop %v333
    %336 = vrot.lane.b32.xlu0 %v334, 64
    %v337 = vpop.permute.xlu0 %336
    %v339 = vmul.f32 %v321, %v337
    %s340 = scalar_lea.vmem [#allocation2], 16
    %v341 = vld [vmem:[%s340] sm:$0xff]
    %343 = vrot.lane.b32.xlu0 %v339, 32
    %v344 = vpop.permute.xlu0 %343
    %v345 = vsel %vm139, %v344, 0
    %347 = vmatprep.subr.mxu0 0.0
    %348 = vmatpush1.msra.mxu0 0.0
    %349 = vmatprep.subr.mxu0 0.0
    %350 = vmatpush1.msra.mxu0 0.0
    %351 = vmatprep.subr.mxu0 0.0
    %352 = vmatpush1.msra.mxu0 0.0
    %353 = vmatprep.subr.mxu0 0.0
    %354 = vmatpush1.msra.mxu0 0.0
    %355 = vmatprep.subr.mxu0 0.0
    %356 = vmatpush1.msra.mxu0 0.0
    %357 = vmatprep.subr.mxu0 0.0
    %358 = vmatpush1.msra.mxu0 0.0
    %359 = vmatprep.subr.mxu0 0.0
    %360 = vmatpush1.msra.mxu0 0.0
    %361 = vmatprep.subr.mxu0 0.0
    %362 = vmatpush1.msra.mxu0 0.0
    %363 = vmatprep.subr.mxu0 0.0
    %364 = vmatpush1.msra.mxu0 0.0
    %365 = vmatprep.subr.mxu0 0.0
    %366 = vmatpush1.msra.mxu0 0.0
    %367 = vmatprep.subr.mxu0 0.0
    %368 = vmatpush1.msra.mxu0 0.0
    %369 = vmatprep.subr.mxu0 0.0
    %370 = vmatpush1.msra.mxu0 0.0
    %371 = vmatprep.subr.mxu0 0.0
    %372 = vmatpush1.msra.mxu0 %v137
    %373 = vmatprep.subr.mxu0 0.0
    %374 = vmatpush1.msra.mxu0 %v136
    %375 = vmatprep.subr.mxu0 0.0
    %376 = vmatpush1.msra.mxu0 %v135
    %377 = vmatprep.subr.mxu0 0.0
    %378 = vmatpush1.msra.mxu0 %v134
    %379 = vmatprep.subr.mxu0 0.0
    %380 = vmatpush2.msra.mxu0 0.0
    %381 = vmatprep.subr.mxu0 0.0
    %382 = vmatpush2.msra.mxu0 0.0
    %383 = vmatprep.subr.mxu0 0.0
    %384 = vmatpush2.msra.mxu0 0.0
    %385 = vmatprep.subr.mxu0 0.0
    %386 = vmatpush2.msra.mxu0 0.0
    %387 = vmatprep.subr.mxu0 0.0
    %388 = vmatpush2.msra.mxu0 0.0
    %389 = vmatprep.subr.mxu0 0.0
    %390 = vmatpush2.msra.mxu0 0.0
    %391 = vmatprep.subr.mxu0 0.0
    %392 = vmatpush2.msra.mxu0 0.0
    %393 = vmatprep.subr.mxu0 0.0
    %394 = vmatpush2.msra.mxu0 0.0
    %395 = vmatprep.subr.mxu0 0.0
    %396 = vmatpush2.msra.mxu0 0.0
    %397 = vmatprep.subr.mxu0 0.0
    %398 = vmatpush2.msra.mxu0 0.0
    %399 = vmatprep.subr.mxu0 0.0
    %400 = vmatpush2.msra.mxu0 0.0
    %401 = vmatprep.subr.mxu0 0.0
    %402 = vmatpush2.msra.mxu0 0.0
    %403 = vmatprep.subr.mxu0 0.0
    %404 = vmatpush2.msra.mxu0 0.0
    %405 = vmatprep.subr.mxu0 0.0
    %406 = vmatpush2.msra.mxu0 0.0
    %407 = vmatprep.subr.mxu0 0.0
    %408 = vmatpush2.msra.mxu0 0.0
    %409 = vmatprep.subr.mxu0 0.0
    %410 = vmatpush2.msra.mxu0 0.0
    %411 = vmatprep.mubr.f32.mxu0 0.0
    %412 = vmatmul.mubr.f32.gmra.mxu0 %v345
    %v413 = vpop.f32.mrf.mxu0
    %v414 = vadd.f32 0.0, %v413
    %v415 = vpop.f32.mrf.mxu0
    %416 = vdwg.mxu0
    %v417 = vadd.f32 %v341, %v414
    %v418 = vxor.u32 %v417, 2147483648
    %v419 = vmul.f32 %v418, 1.442695
    %v420 = vpow.pop %v419
    %v421 = vadd.f32 %v420, 1.0
    %v422 = vrcp.pop %v421
    %v423 = vmul.f32 1.0, %v422
    %v424 = vtanh.pop %v417
    %v425 = vmul.f32 %v423, %v333
    %427 = vrot.lane.b32.xlu0 %v424, 64
    %v428 = vpop.permute.xlu0 %427
    %v430 = vmul.f32 %v423, %v428
    %432 = vrot.lane.b32.xlu0 %v430, 32
    %v433 = vpop.permute.xlu0 %432
    %v435 = vadd.f32 %v425, %v433
    %v436 = vtanh.pop %v435
    %438 = vrot.lane.b32.xlu0 %v436, 64
    %v439 = vpop.permute.xlu0 %438
    %v441 = vmul.f32 %v423, %v439
    %s442 = scalar_lea.vmem [#allocation2], 24
    %v443 = vld [vmem:[%s442] sm:$0xff]
    %445 = vrot.lane.b32.xlu0 %v441, 32
    %v446 = vpop.permute.xlu0 %445
    %v447 = vsel %vm139, %v446, 0
    %449 = vmatprep.subr.mxu0 0.0
    %450 = vmatpush1.msra.mxu0 0.0
    %451 = vmatprep.subr.mxu0 0.0
    %452 = vmatpush1.msra.mxu0 0.0
    %453 = vmatprep.subr.mxu0 0.0
    %454 = vmatpush1.msra.mxu0 0.0
    %455 = vmatprep.subr.mxu0 0.0
    %456 = vmatpush1.msra.mxu0 0.0
    %457 = vmatprep.subr.mxu0 0.0
    %458 = vmatpush1.msra.mxu0 0.0
    %459 = vmatprep.subr.mxu0 0.0
    %460 = vmatpush1.msra.mxu0 0.0
    %461 = vmatprep.subr.mxu0 0.0
    %462 = vmatpush1.msra.mxu0 0.0
    %463 = vmatprep.subr.mxu0 0.0
    %464 = vmatpush1.msra.mxu0 0.0
    %465 = vmatprep.subr.mxu0 0.0
    %466 = vmatpush1.msra.mxu0 0.0
    %467 = vmatprep.subr.mxu0 0.0
    %468 = vmatpush1.msra.mxu0 0.0
    %469 = vmatprep.subr.mxu0 0.0
    %470 = vmatpush1.msra.mxu0 0.0
    %471 = vmatprep.subr.mxu0 0.0
    %472 = vmatpush1.msra.mxu0 0.0
    %473 = vmatprep.subr.mxu0 0.0
    %474 = vmatpush1.msra.mxu0 %v137
    %475 = vmatprep.subr.mxu0 0.0
    %476 = vmatpush1.msra.mxu0 %v136
    %477 = vmatprep.subr.mxu0 0.0
    %478 = vmatpush1.msra.mxu0 %v135
    %479 = vmatprep.subr.mxu0 0.0
    %480 = vmatpush1.msra.mxu0 %v134
    %481 = vmatprep.subr.mxu0 0.0
    %482 = vmatpush2.msra.mxu0 0.0
    %483 = vmatprep.subr.mxu0 0.0
    %484 = vmatpush2.msra.mxu0 0.0
    %485 = vmatprep.subr.mxu0 0.0
    %486 = vmatpush2.msra.mxu0 0.0
    %487 = vmatprep.subr.mxu0 0.0
    %488 = vmatpush2.msra.mxu0 0.0
    %489 = vmatprep.subr.mxu0 0.0
    %490 = vmatpush2.msra.mxu0 0.0
    %491 = vmatprep.subr.mxu0 0.0
    %492 = vmatpush2.msra.mxu0 0.0
    %493 = vmatprep.subr.mxu0 0.0
    %494 = vmatpush2.msra.mxu0 0.0
    %495 = vmatprep.subr.mxu0 0.0
    %496 = vmatpush2.msra.mxu0 0.0
    %497 = vmatprep.subr.mxu0 0.0
    %498 = vmatpush2.msra.mxu0 0.0
    %499 = vmatprep.subr.mxu0 0.0
    %500 = vmatpush2.msra.mxu0 0.0
    %501 = vmatprep.subr.mxu0 0.0
    %502 = vmatpush2.msra.mxu0 0.0
    %503 = vmatprep.subr.mxu0 0.0
    %504 = vmatpush2.msra.mxu0 0.0
    %505 = vmatprep.subr.mxu0 0.0
    %506 = vmatpush2.msra.mxu0 0.0
    %507 = vmatprep.subr.mxu0 0.0
    %508 = vmatpush2.msra.mxu0 0.0
    %509 = vmatprep.subr.mxu0 0.0
    %510 = vmatpush2.msra.mxu0 0.0
    %511 = vmatprep.subr.mxu0 0.0
    %512 = vmatpush2.msra.mxu0 0.0
    %513 = vmatprep.mubr.f32.mxu0 0.0
    %514 = vmatmul.mubr.f32.gmra.mxu0 %v447
    %v515 = vpop.f32.mrf.mxu0
    %v516 = vadd.f32 0.0, %v515
    %v517 = vpop.f32.mrf.mxu0
    %518 = vdwg.mxu0
    %v519 = vadd.f32 %v443, %v516
    %v520 = vxor.u32 %v519, 2147483648
    %v521 = vmul.f32 %v520, 1.442695
    %v522 = vpow.pop %v521
    %v523 = vadd.f32 %v522, 1.0
    %v524 = vrcp.pop %v523
    %v525 = vmul.f32 1.0, %v524
    %v526 = vtanh.pop %v519
    %v527 = vmul.f32 %v525, %v435
    %529 = vrot.lane.b32.xlu0 %v526, 64
    %v530 = vpop.permute.xlu0 %529
    %v532 = vmul.f32 %v525, %v530
    %534 = vrot.lane.b32.xlu0 %v532, 32
    %v535 = vpop.permute.xlu0 %534
    %v537 = vadd.f32 %v527, %v535
    %v538 = vtanh.pop %v537
    %540 = vrot.lane.b32.xlu0 %v538, 64
    %v541 = vpop.permute.xlu0 %540
    %v543 = vmul.f32 %v525, %v541
    %s544 = scalar_lea.vmem [#allocation2], 32
    %v545 = vld [vmem:[%s544] sm:$0xff]
    %547 = vrot.lane.b32.xlu0 %v543, 32
    %v548 = vpop.permute.xlu0 %547
    %v549 = vsel %vm139, %v548, 0
    %551 = vmatprep.subr.mxu0 0.0
    %552 = vmatpush1.msra.mxu0 0.0
    %553 = vmatprep.subr.mxu0 0.0
    %554 = vmatpush1.msra.mxu0 0.0
    %555 = vmatprep.subr.mxu0 0.0
    %556 = vmatpush1.msra.mxu0 0.0
    %557 = vmatprep.subr.mxu0 0.0
    %558 = vmatpush1.msra.mxu0 0.0
    %559 = vmatprep.subr.mxu0 0.0
    %560 = vmatpush1.msra.mxu0 0.0
    %561 = vmatprep.subr.mxu0 0.0
    %562 = vmatpush1.msra.mxu0 0.0
    %563 = vmatprep.subr.mxu0 0.0
    %564 = vmatpush1.msra.mxu0 0.0
    %565 = vmatprep.subr.mxu0 0.0
    %566 = vmatpush1.msra.mxu0 0.0
    %567 = vmatprep.subr.mxu0 0.0
    %568 = vmatpush1.msra.mxu0 0.0
    %569 = vmatprep.subr.mxu0 0.0
    %570 = vmatpush1.msra.mxu0 0.0
    %571 = vmatprep.subr.mxu0 0.0
    %572 = vmatpush1.msra.mxu0 0.0
    %573 = vmatprep.subr.mxu0 0.0
    %574 = vmatpush1.msra.mxu0 0.0
    %575 = vmatprep.subr.mxu0 0.0
    %576 = vmatpush1.msra.mxu0 %v137
    %577 = vmatprep.subr.mxu0 0.0
    %578 = vmatpush1.msra.mxu0 %v136
    %579 = vmatprep.subr.mxu0 0.0
    %580 = vmatpush1.msra.mxu0 %v135
    %581 = vmatprep.subr.mxu0 0.0
    %582 = vmatpush1.msra.mxu0 %v134
    %583 = vmatprep.subr.mxu0 0.0
    %584 = vmatpush2.msra.mxu0 0.0
    %585 = vmatprep.subr.mxu0 0.0
    %586 = vmatpush2.msra.mxu0 0.0
    %587 = vmatprep.subr.mxu0 0.0
    %588 = vmatpush2.msra.mxu0 0.0
    %589 = vmatprep.subr.mxu0 0.0
    %590 = vmatpush2.msra.mxu0 0.0
    %591 = vmatprep.subr.mxu0 0.0
    %592 = vmatpush2.msra.mxu0 0.0
    %593 = vmatprep.subr.mxu0 0.0
    %594 = vmatpush2.msra.mxu0 0.0
    %595 = vmatprep.subr.mxu0 0.0
    %596 = vmatpush2.msra.mxu0 0.0
    %597 = vmatprep.subr.mxu0 0.0
    %598 = vmatpush2.msra.mxu0 0.0
    %599 = vmatprep.subr.mxu0 0.0
    %600 = vmatpush2.msra.mxu0 0.0
    %601 = vmatprep.subr.mxu0 0.0
    %602 = vmatpush2.msra.mxu0 0.0
    %603 = vmatprep.subr.mxu0 0.0
    %604 = vmatpush2.msra.mxu0 0.0
    %605 = vmatprep.subr.mxu0 0.0
    %606 = vmatpush2.msra.mxu0 0.0
    %607 = vmatprep.subr.mxu0 0.0
    %608 = vmatpush2.msra.mxu0 0.0
    %609 = vmatprep.subr.mxu0 0.0
    %610 = vmatpush2.msra.mxu0 0.0
    %611 = vmatprep.subr.mxu0 0.0
    %612 = vmatpush2.msra.mxu0 0.0
    %613 = vmatprep.subr.mxu0 0.0
    %614 = vmatpush2.msra.mxu0 0.0
    %615 = vmatprep.mubr.f32.mxu0 0.0
    %616 = vmatmul.mubr.f32.gmra.mxu0 %v549
    %v617 = vpop.f32.mrf.mxu0
    %v618 = vadd.f32 0.0, %v617
    %v619 = vpop.f32.mrf.mxu0
    %620 = vdwg.mxu0
    %v621 = vadd.f32 %v545, %v618
    %v622 = vxor.u32 %v621, 2147483648
    %v623 = vmul.f32 %v622, 1.442695
    %v624 = vpow.pop %v623
    %v625 = vadd.f32 %v624, 1.0
    %v626 = vrcp.pop %v625
    %v627 = vmul.f32 1.0, %v626
    %v628 = vtanh.pop %v621
    %v629 = vmul.f32 %v627, %v537
    %631 = vrot.lane.b32.xlu0 %v628, 64
    %v632 = vpop.permute.xlu0 %631
    %v634 = vmul.f32 %v627, %v632
    %636 = vrot.lane.b32.xlu0 %v634, 32
    %v637 = vpop.permute.xlu0 %636
    %v639 = vadd.f32 %v629, %v637
    %v640 = vtanh.pop %v639
    %642 = vrot.lane.b32.xlu0 %v640, 64
    %v643 = vpop.permute.xlu0 %642
    %v645 = vmul.f32 %v627, %v643
    %s646 = scalar_lea.vmem [#allocation2], 40
    %v647 = vld [vmem:[%s646] sm:$0xff]
    %649 = vrot.lane.b32.xlu0 %v645, 32
    %v650 = vpop.permute.xlu0 %649
    %v651 = vsel %vm139, %v650, 0
    %653 = vmatprep.subr.mxu0 0.0
    %654 = vmatpush1.msra.mxu0 0.0
    %655 = vmatprep.subr.mxu0 0.0
    %656 = vmatpush1.msra.mxu0 0.0
    %657 = vmatprep.subr.mxu0 0.0
    %658 = vmatpush1.msra.mxu0 0.0
    %659 = vmatprep.subr.mxu0 0.0
    %660 = vmatpush1.msra.mxu0 0.0
    %661 = vmatprep.subr.mxu0 0.0
    %662 = vmatpush1.msra.mxu0 0.0
    %663 = vmatprep.subr.mxu0 0.0
    %664 = vmatpush1.msra.mxu0 0.0
    %665 = vmatprep.subr.mxu0 0.0
    %666 = vmatpush1.msra.mxu0 0.0
    %667 = vmatprep.subr.mxu0 0.0
    %668 = vmatpush1.msra.mxu0 0.0
    %669 = vmatprep.subr.mxu0 0.0
    %670 = vmatpush1.msra.mxu0 0.0
    %671 = vmatprep.subr.mxu0 0.0
    %672 = vmatpush1.msra.mxu0 0.0
    %673 = vmatprep.subr.mxu0 0.0
    %674 = vmatpush1.msra.mxu0 0.0
    %675 = vmatprep.subr.mxu0 0.0
    %676 = vmatpush1.msra.mxu0 0.0
    %677 = vmatprep.subr.mxu0 0.0
    %678 = vmatpush1.msra.mxu0 %v137
    %679 = vmatprep.subr.mxu0 0.0
    %680 = vmatpush1.msra.mxu0 %v136
    %681 = vmatprep.subr.mxu0 0.0
    %682 = vmatpush1.msra.mxu0 %v135
    %683 = vmatprep.subr.mxu0 0.0
    %684 = vmatpush1.msra.mxu0 %v134
    %685 = vmatprep.subr.mxu0 0.0
    %686 = vmatpush2.msra.mxu0 0.0
    %687 = vmatprep.subr.mxu0 0.0
    %688 = vmatpush2.msra.mxu0 0.0
    %689 = vmatprep.subr.mxu0 0.0
    %690 = vmatpush2.msra.mxu0 0.0
    %691 = vmatprep.subr.mxu0 0.0
    %692 = vmatpush2.msra.mxu0 0.0
    %693 = vmatprep.subr.mxu0 0.0
    %694 = vmatpush2.msra.mxu0 0.0
    %695 = vmatprep.subr.mxu0 0.0
    %696 = vmatpush2.msra.mxu0 0.0
    %697 = vmatprep.subr.mxu0 0.0
    %698 = vmatpush2.msra.mxu0 0.0
    %699 = vmatprep.subr.mxu0 0.0
    %700 = vmatpush2.msra.mxu0 0.0
    %701 = vmatprep.subr.mxu0 0.0
    %702 = vmatpush2.msra.mxu0 0.0
    %703 = vmatprep.subr.mxu0 0.0
    %704 = vmatpush2.msra.mxu0 0.0
    %705 = vmatprep.subr.mxu0 0.0
    %706 = vmatpush2.msra.mxu0 0.0
    %707 = vmatprep.subr.mxu0 0.0
    %708 = vmatpush2.msra.mxu0 0.0
    %709 = vmatprep.subr.mxu0 0.0
    %710 = vmatpush2.msra.mxu0 0.0
    %711 = vmatprep.subr.mxu0 0.0
    %712 = vmatpush2.msra.mxu0 0.0
    %713 = vmatprep.subr.mxu0 0.0
    %714 = vmatpush2.msra.mxu0 0.0
    %715 = vmatprep.subr.mxu0 0.0
    %716 = vmatpush2.msra.mxu0 0.0
    %717 = vmatprep.mubr.f32.mxu0 0.0
    %718 = vmatmul.mubr.f32.gmra.mxu0 %v651
    %v719 = vpop.f32.mrf.mxu0
    %v720 = vadd.f32 0.0, %v719
    %v721 = vpop.f32.mrf.mxu0
    %722 = vdwg.mxu0
    %v723 = vadd.f32 %v647, %v720
    %v724 = vxor.u32 %v723, 2147483648
    %v725 = vmul.f32 %v724, 1.442695
    %v726 = vpow.pop %v725
    %v727 = vadd.f32 %v726, 1.0
    %v728 = vrcp.pop %v727
    %v729 = vmul.f32 1.0, %v728
    %v730 = vtanh.pop %v723
    %v731 = vmul.f32 %v729, %v639
    %733 = vrot.lane.b32.xlu0 %v730, 64
    %v734 = vpop.permute.xlu0 %733
    %v736 = vmul.f32 %v729, %v734
    %738 = vrot.lane.b32.xlu0 %v736, 32
    %v739 = vpop.permute.xlu0 %738
    %v741 = vadd.f32 %v731, %v739
    %v742 = vtanh.pop %v741
    %744 = vrot.lane.b32.xlu0 %v742, 64
    %v745 = vpop.permute.xlu0 %744
    %v747 = vmul.f32 %v729, %v745
    %s748 = scalar_lea.vmem [#allocation2], 48
    %v749 = vld [vmem:[%s748] sm:$0xff]
    %751 = vrot.lane.b32.xlu0 %v747, 32
    %v752 = vpop.permute.xlu0 %751
    %v753 = vsel %vm139, %v752, 0
    %755 = vmatprep.subr.mxu0 0.0
    %756 = vmatpush1.msra.mxu0 0.0
    %757 = vmatprep.subr.mxu0 0.0
    %758 = vmatpush1.msra.mxu0 0.0
    %759 = vmatprep.subr.mxu0 0.0
    %760 = vmatpush1.msra.mxu0 0.0
    %761 = vmatprep.subr.mxu0 0.0
    %762 = vmatpush1.msra.mxu0 0.0
    %763 = vmatprep.subr.mxu0 0.0
    %764 = vmatpush1.msra.mxu0 0.0
    %765 = vmatprep.subr.mxu0 0.0
    %766 = vmatpush1.msra.mxu0 0.0
    %767 = vmatprep.subr.mxu0 0.0
    %768 = vmatpush1.msra.mxu0 0.0
    %769 = vmatprep.subr.mxu0 0.0
    %770 = vmatpush1.msra.mxu0 0.0
    %771 = vmatprep.subr.mxu0 0.0
    %772 = vmatpush1.msra.mxu0 0.0
    %773 = vmatprep.subr.mxu0 0.0
    %774 = vmatpush1.msra.mxu0 0.0
    %775 = vmatprep.subr.mxu0 0.0
    %776 = vmatpush1.msra.mxu0 0.0
    %777 = vmatprep.subr.mxu0 0.0
    %778 = vmatpush1.msra.mxu0 0.0
    %779 = vmatprep.subr.mxu0 0.0
    %780 = vmatpush1.msra.mxu0 %v137
    %781 = vmatprep.subr.mxu0 0.0
    %782 = vmatpush1.msra.mxu0 %v136
    %783 = vmatprep.subr.mxu0 0.0
    %784 = vmatpush1.msra.mxu0 %v135
    %785 = vmatprep.subr.mxu0 0.0
    %786 = vmatpush1.msra.mxu0 %v134
    %787 = vmatprep.subr.mxu0 0.0
    %788 = vmatpush2.msra.mxu0 0.0
    %789 = vmatprep.subr.mxu0 0.0
    %790 = vmatpush2.msra.mxu0 0.0
    %791 = vmatprep.subr.mxu0 0.0
    %792 = vmatpush2.msra.mxu0 0.0
    %793 = vmatprep.subr.mxu0 0.0
    %794 = vmatpush2.msra.mxu0 0.0
    %795 = vmatprep.subr.mxu0 0.0
    %796 = vmatpush2.msra.mxu0 0.0
    %797 = vmatprep.subr.mxu0 0.0
    %798 = vmatpush2.msra.mxu0 0.0
    %799 = vmatprep.subr.mxu0 0.0
    %800 = vmatpush2.msra.mxu0 0.0
    %801 = vmatprep.subr.mxu0 0.0
    %802 = vmatpush2.msra.mxu0 0.0
    %803 = vmatprep.subr.mxu0 0.0
    %804 = vmatpush2.msra.mxu0 0.0
    %805 = vmatprep.subr.mxu0 0.0
    %806 = vmatpush2.msra.mxu0 0.0
    %807 = vmatprep.subr.mxu0 0.0
    %808 = vmatpush2.msra.mxu0 0.0
    %809 = vmatprep.subr.mxu0 0.0
    %810 = vmatpush2.msra.mxu0 0.0
    %811 = vmatprep.subr.mxu0 0.0
    %812 = vmatpush2.msra.mxu0 0.0
    %813 = vmatprep.subr.mxu0 0.0
    %814 = vmatpush2.msra.mxu0 0.0
    %815 = vmatprep.subr.mxu0 0.0
    %816 = vmatpush2.msra.mxu0 0.0
    %817 = vmatprep.subr.mxu0 0.0
    %818 = vmatpush2.msra.mxu0 0.0
    %819 = vmatprep.mubr.f32.mxu0 0.0
    %820 = vmatmul.mubr.f32.gmra.mxu0 %v753
    %v821 = vpop.f32.mrf.mxu0
    %v822 = vadd.f32 0.0, %v821
    %v823 = vpop.f32.mrf.mxu0
    %824 = vdwg.mxu0
    %v825 = vadd.f32 %v749, %v822
    %v826 = vxor.u32 %v825, 2147483648
    %v827 = vmul.f32 %v826, 1.442695
    %v828 = vpow.pop %v827
    %v829 = vadd.f32 %v828, 1.0
    %v830 = vrcp.pop %v829
    %v831 = vmul.f32 1.0, %v830
    %v832 = vtanh.pop %v825
    %v833 = vmul.f32 %v831, %v741
    %835 = vrot.lane.b32.xlu0 %v832, 64
    %v836 = vpop.permute.xlu0 %835
    %v838 = vmul.f32 %v831, %v836
    %840 = vrot.lane.b32.xlu0 %v838, 32
    %v841 = vpop.permute.xlu0 %840
    %v843 = vadd.f32 %v833, %v841
    %v844 = vtanh.pop %v843
    %846 = vrot.lane.b32.xlu0 %v844, 64
    %v847 = vpop.permute.xlu0 %846
    %v849 = vmul.f32 %v831, %v847
    %s850 = scalar_lea.vmem [#allocation2], 56
    %v851 = vld [vmem:[%s850] sm:$0xff]
    %853 = vrot.lane.b32.xlu0 %v849, 32
    %v854 = vpop.permute.xlu0 %853
    %v855 = vsel %vm139, %v854, 0
    %857 = vmatprep.subr.mxu0 0.0
    %858 = vmatpush1.msra.mxu0 0.0
    %859 = vmatprep.subr.mxu0 0.0
    %860 = vmatpush1.msra.mxu0 0.0
    %861 = vmatprep.subr.mxu0 0.0
    %862 = vmatpush1.msra.mxu0 0.0
    %863 = vmatprep.subr.mxu0 0.0
    %864 = vmatpush1.msra.mxu0 0.0
    %865 = vmatprep.subr.mxu0 0.0
    %866 = vmatpush1.msra.mxu0 0.0
    %867 = vmatprep.subr.mxu0 0.0
    %868 = vmatpush1.msra.mxu0 0.0
    %869 = vmatprep.subr.mxu0 0.0
    %870 = vmatpush1.msra.mxu0 0.0
    %871 = vmatprep.subr.mxu0 0.0
    %872 = vmatpush1.msra.mxu0 0.0
    %873 = vmatprep.subr.mxu0 0.0
    %874 = vmatpush1.msra.mxu0 0.0
    %875 = vmatprep.subr.mxu0 0.0
    %876 = vmatpush1.msra.mxu0 0.0
    %877 = vmatprep.subr.mxu0 0.0
    %878 = vmatpush1.msra.mxu0 0.0
    %879 = vmatprep.subr.mxu0 0.0
    %880 = vmatpush1.msra.mxu0 0.0
    %881 = vmatprep.subr.mxu0 0.0
    %882 = vmatpush1.msra.mxu0 %v137
    %883 = vmatprep.subr.mxu0 0.0
    %884 = vmatpush1.msra.mxu0 %v136
    %885 = vmatprep.subr.mxu0 0.0
    %886 = vmatpush1.msra.mxu0 %v135
    %887 = vmatprep.subr.mxu0 0.0
    %888 = vmatpush1.msra.mxu0 %v134
    %889 = vmatprep.subr.mxu0 0.0
    %890 = vmatpush2.msra.mxu0 0.0
    %891 = vmatprep.subr.mxu0 0.0
    %892 = vmatpush2.msra.mxu0 0.0
    %893 = vmatprep.subr.mxu0 0.0
    %894 = vmatpush2.msra.mxu0 0.0
    %895 = vmatprep.subr.mxu0 0.0
    %896 = vmatpush2.msra.mxu0 0.0
    %897 = vmatprep.subr.mxu0 0.0
    %898 = vmatpush2.msra.mxu0 0.0
    %899 = vmatprep.subr.mxu0 0.0
    %900 = vmatpush2.msra.mxu0 0.0
    %901 = vmatprep.subr.mxu0 0.0
    %902 = vmatpush2.msra.mxu0 0.0
    %903 = vmatprep.subr.mxu0 0.0
    %904 = vmatpush2.msra.mxu0 0.0
    %905 = vmatprep.subr.mxu0 0.0
    %906 = vmatpush2.msra.mxu0 0.0
    %907 = vmatprep.subr.mxu0 0.0
    %908 = vmatpush2.msra.mxu0 0.0
    %909 = vmatprep.subr.mxu0 0.0
    %910 = vmatpush2.msra.mxu0 0.0
    %911 = vmatprep.subr.mxu0 0.0
    %912 = vmatpush2.msra.mxu0 0.0
    %913 = vmatprep.subr.mxu0 0.0
    %914 = vmatpush2.msra.mxu0 0.0
    %915 = vmatprep.subr.mxu0 0.0
    %916 = vmatpush2.msra.mxu0 0.0
    %917 = vmatprep.subr.mxu0 0.0
    %918 = vmatpush2.msra.mxu0 0.0
    %919 = vmatprep.subr.mxu0 0.0
    %920 = vmatpush2.msra.mxu0 0.0
    %921 = vmatprep.mubr.f32.mxu0 0.0
    %922 = vmatmul.mubr.f32.gmra.mxu0 %v855
    %v923 = vpop.f32.mrf.mxu0
    %v924 = vadd.f32 0.0, %v923
    %v925 = vpop.f32.mrf.mxu0
    %926 = vdwg.mxu0
    %v927 = vadd.f32 %v851, %v924
    %v928 = vxor.u32 %v927, 2147483648
    %v929 = vmul.f32 %v928, 1.442695
    %v930 = vpow.pop %v929
    %v931 = vadd.f32 %v930, 1.0
    %v932 = vrcp.pop %v931
    %v933 = vmul.f32 1.0, %v932
    %v934 = vtanh.pop %v927
    %v935 = vmul.f32 %v933, %v843
    %937 = vrot.lane.b32.xlu0 %v934, 64
    %v938 = vpop.permute.xlu0 %937
    %v940 = vmul.f32 %v933, %v938
    %942 = vrot.lane.b32.xlu0 %v940, 32
    %v943 = vpop.permute.xlu0 %942
    %v945 = vadd.f32 %v935, %v943
    %v946 = vtanh.pop %v945
    %948 = vrot.lane.b32.xlu0 %v946, 64
    %v949 = vpop.permute.xlu0 %948
    %v951 = vmul.f32 %v933, %v949
    %v952 = vld [vmem:[#allocation11] sm:$0xff]
    %v953 = vld [vmem:[#allocation11 + $0x8] sm:$0xff]
    %v954 = vld [vmem:[#allocation11 + $0x10] sm:$0xff]
    %v955 = vld [vmem:[#allocation11 + $0x18] sm:$0xff]
    %v956 = vld [vmem:[#allocation11 + $0x20] sm:$0xff]
    %v957 = vld [vmem:[#allocation11 + $0x28] sm:$0xff]
    %v958 = vld [vmem:[#allocation11 + $0x30] sm:$0xff]
    %v959 = vld [vmem:[#allocation11 + $0x38] sm:$0xff]
    %v960 = vld [vmem:[#allocation11 + $0x40] sm:$0xff]
    %v961 = vld [vmem:[#allocation11 + $0x48] sm:$0xff]
    %v962 = vld [vmem:[#allocation11 + $0x50] sm:$0xff]
    %v963 = vld [vmem:[#allocation11 + $0x58] sm:$0xff]
    %v964 = vld [vmem:[#allocation11 + $0x60] sm:$0xff]
    %v965 = vld [vmem:[#allocation11 + $0x68] sm:$0xff]
    %v966 = vld [vmem:[#allocation11 + $0x70] sm:$0xff]
    %v967 = vld [vmem:[#allocation11 + $0x78] sm:$0xff]
    %v968 = vld [vmem:[#allocation11 + $0x80] sm:$0xff]
    %v969 = vld [vmem:[#allocation11 + $0x88] sm:$0xff]
    %v970 = vld [vmem:[#allocation11 + $0x90] sm:$0xff]
    %v971 = vld [vmem:[#allocation11 + $0x98] sm:$0xff]
    %v972 = vld [vmem:[#allocation11 + $0xa0] sm:$0xff]
    %v973 = vld [vmem:[#allocation11 + $0xa8] sm:$0xff]
    %v974 = vld [vmem:[#allocation11 + $0xb0] sm:$0xff]
    %v975 = vld [vmem:[#allocation11 + $0xb8] sm:$0xff]
    %v976 = vld [vmem:[#allocation11 + $0xc0] sm:$0xff]
    %v977 = vld [vmem:[#allocation11 + $0xc8] sm:$0xff]
    %v978 = vld [vmem:[#allocation11 + $0xd0] sm:$0xff]
    %v979 = vld [vmem:[#allocation11 + $0xd8] sm:$0xff]
    %v980 = vld [vmem:[#allocation11 + $0xe0] sm:$0xff]
    %v981 = vld [vmem:[#allocation11 + $0xe8] sm:$0xff]
    %v982 = vld [vmem:[#allocation11 + $0xf0] sm:$0xff]
    %v983 = vld [vmem:[#allocation11 + $0xf8] sm:$0xff]
    %v984 = vld [vmem:[#allocation11 + $0x100] sm:$0xff]
    %v985 = vld [vmem:[#allocation11 + $0x108] sm:$0xff]
    %v986 = vld [vmem:[#allocation11 + $0x110] sm:$0xff]
    %v987 = vld [vmem:[#allocation11 + $0x118] sm:$0xff]
    %v988 = vld [vmem:[#allocation11 + $0x120] sm:$0xff]
    %v989 = vld [vmem:[#allocation11 + $0x128] sm:$0xff]
    %v990 = vld [vmem:[#allocation11 + $0x130] sm:$0xff]
    %v991 = vld [vmem:[#allocation11 + $0x138] sm:$0xff]
    %v992 = vld [vmem:[#allocation11 + $0x140] sm:$0xff]
    %v993 = vld [vmem:[#allocation11 + $0x148] sm:$0xff]
    %v994 = vld [vmem:[#allocation11 + $0x150] sm:$0xff]
    %v995 = vld [vmem:[#allocation11 + $0x158] sm:$0xff]
    %v996 = vld [vmem:[#allocation11 + $0x160] sm:$0xff]
    %v997 = vld [vmem:[#allocation11 + $0x168] sm:$0xff]
    %v998 = vld [vmem:[#allocation11 + $0x170] sm:$0xff]
    %v999 = vld [vmem:[#allocation11 + $0x178] sm:$0xff]
    %v1000 = vld [vmem:[#allocation11 + $0x180] sm:$0xff]
    %v1001 = vld [vmem:[#allocation11 + $0x188] sm:$0xff]
    %v1002 = vld [vmem:[#allocation11 + $0x190] sm:$0xff]
    %v1003 = vld [vmem:[#allocation11 + $0x198] sm:$0xff]
    %v1004 = vld [vmem:[#allocation11 + $0x1a0] sm:$0xff]
    %v1005 = vld [vmem:[#allocation11 + $0x1a8] sm:$0xff]
    %v1006 = vld [vmem:[#allocation11 + $0x1b0] sm:$0xff]
    %v1007 = vld [vmem:[#allocation11 + $0x1b8] sm:$0xff]
    %v1008 = vld [vmem:[#allocation11 + $0x1c0] sm:$0xff]
    %v1009 = vld [vmem:[#allocation11 + $0x1c8] sm:$0xff]
    %v1010 = vld [vmem:[#allocation11 + $0x1d0] sm:$0xff]
    %v1011 = vld [vmem:[#allocation11 + $0x1d8] sm:$0xff]
    %v1012 = vld [vmem:[#allocation11 + $0x1e0] sm:$0xff]
    %v1013 = vld [vmem:[#allocation11 + $0x1e8] sm:$0xff]
    %v1014 = vld [vmem:[#allocation11 + $0x1f0] sm:$0xff]
    %v1015 = vld [vmem:[#allocation11 + $0x1f8] sm:$0xff]
    %v1016 = vld [vmem:[#allocation11 + $0x200] sm:$0xff]
    %v1017 = vld [vmem:[#allocation11 + $0x208] sm:$0xff]
    %v1018 = vld [vmem:[#allocation11 + $0x210] sm:$0xff]
    %v1019 = vld [vmem:[#allocation11 + $0x218] sm:$0xff]
    %v1020 = vld [vmem:[#allocation11 + $0x220] sm:$0xff]
    %v1021 = vld [vmem:[#allocation11 + $0x228] sm:$0xff]
    %v1022 = vld [vmem:[#allocation11 + $0x230] sm:$0xff]
    %v1023 = vld [vmem:[#allocation11 + $0x238] sm:$0xff]
    %v1024 = vld [vmem:[#allocation11 + $0x240] sm:$0xff]
    %v1025 = vld [vmem:[#allocation11 + $0x248] sm:$0xff]
    %v1026 = vld [vmem:[#allocation11 + $0x250] sm:$0xff]
    %v1027 = vld [vmem:[#allocation11 + $0x258] sm:$0xff]
    %v1028 = vld [vmem:[#allocation11 + $0x260] sm:$0xff]
    %v1029 = vld [vmem:[#allocation11 + $0x268] sm:$0xff]
    %v1030 = vld [vmem:[#allocation11 + $0x270] sm:$0xff]
    %v1031 = vld [vmem:[#allocation11 + $0x278] sm:$0xff]
    %v1032 = vld [vmem:[#allocation11 + $0x280] sm:$0xff]
    %v1033 = vld [vmem:[#allocation11 + $0x288] sm:$0xff]
    %v1034 = vld [vmem:[#allocation11 + $0x290] sm:$0xff]
    %v1035 = vld [vmem:[#allocation11 + $0x298] sm:$0xff]
    %v1036 = vld [vmem:[#allocation11 + $0x2a0] sm:$0xff]
    %v1037 = vld [vmem:[#allocation11 + $0x2a8] sm:$0xff]
    %v1038 = vld [vmem:[#allocation11 + $0x2b0] sm:$0xff]
    %v1039 = vld [vmem:[#allocation11 + $0x2b8] sm:$0xff]
    %v1040 = vld [vmem:[#allocation11 + $0x2c0] sm:$0xff]
    %v1041 = vld [vmem:[#allocation11 + $0x2c8] sm:$0xff]
    %v1042 = vld [vmem:[#allocation11 + $0x2d0] sm:$0xff]
    %v1043 = vld [vmem:[#allocation11 + $0x2d8] sm:$0xff]
    %v1044 = vld [vmem:[#allocation11 + $0x2e0] sm:$0xff]
    %v1045 = vld [vmem:[#allocation11 + $0x2e8] sm:$0xff]
    %v1046 = vld [vmem:[#allocation11 + $0x2f0] sm:$0xff]
    %v1047 = vld [vmem:[#allocation11 + $0x2f8] sm:$0xff]
    %v1048 = vld [vmem:[#allocation11 + $0x300] sm:$0xff]
    %v1049 = vld [vmem:[#allocation11 + $0x308] sm:$0xff]
    %v1050 = vld [vmem:[#allocation11 + $0x310] sm:$0xff]
    %v1051 = vld [vmem:[#allocation11 + $0x318] sm:$0xff]
    %v1052 = vld [vmem:[#allocation11 + $0x320] sm:$0xff]
    %v1053 = vld [vmem:[#allocation11 + $0x328] sm:$0xff]
    %v1054 = vld [vmem:[#allocation11 + $0x330] sm:$0xff]
    %v1055 = vld [vmem:[#allocation11 + $0x338] sm:$0xff]
    %v1056 = vld [vmem:[#allocation11 + $0x340] sm:$0xff]
    %v1057 = vld [vmem:[#allocation11 + $0x348] sm:$0xff]
    %v1058 = vld [vmem:[#allocation11 + $0x350] sm:$0xff]
    %v1059 = vld [vmem:[#allocation11 + $0x358] sm:$0xff]
    %v1060 = vld [vmem:[#allocation11 + $0x360] sm:$0xff]
    %v1061 = vld [vmem:[#allocation11 + $0x368] sm:$0xff]
    %v1062 = vld [vmem:[#allocation11 + $0x370] sm:$0xff]
    %v1063 = vld [vmem:[#allocation11 + $0x378] sm:$0xff]
    %v1064 = vld [vmem:[#allocation11 + $0x380] sm:$0xff]
    %v1065 = vld [vmem:[#allocation11 + $0x388] sm:$0xff]
    %v1066 = vld [vmem:[#allocation11 + $0x390] sm:$0xff]
    %v1067 = vld [vmem:[#allocation11 + $0x398] sm:$0xff]
    %v1068 = vld [vmem:[#allocation11 + $0x3a0] sm:$0xff]
    %v1069 = vld [vmem:[#allocation11 + $0x3a8] sm:$0xff]
    %v1070 = vld [vmem:[#allocation11 + $0x3b0] sm:$0xff]
    %v1071 = vld [vmem:[#allocation11 + $0x3b8] sm:$0xff]
    %v1072 = vld [vmem:[#allocation11 + $0x3c0] sm:$0xff]
    %v1073 = vld [vmem:[#allocation11 + $0x3c8] sm:$0xff]
    %v1074 = vld [vmem:[#allocation11 + $0x3d0] sm:$0xff]
    %v1075 = vld [vmem:[#allocation11 + $0x3d8] sm:$0xff]
    %v1076 = vld [vmem:[#allocation11 + $0x3e0] sm:$0xff]
    %v1077 = vld [vmem:[#allocation11 + $0x3e8] sm:$0xff]
    %v1078 = vld [vmem:[#allocation11 + $0x3f0] sm:$0xff]
    %v1079 = vld [vmem:[#allocation11 + $0x3f8] sm:$0xff]
    %v1080 = vld [vmem:[#allocation11 + $0x400] sm:$0xff]
    %v1081 = vld [vmem:[#allocation11 + $0x408] sm:$0xff]
    %v1082 = vld [vmem:[#allocation11 + $0x410] sm:$0xff]
    %v1083 = vld [vmem:[#allocation11 + $0x418] sm:$0xff]
    %v1084 = vld [vmem:[#allocation11 + $0x420] sm:$0xff]
    %v1085 = vld [vmem:[#allocation11 + $0x428] sm:$0xff]
    %v1086 = vld [vmem:[#allocation11 + $0x430] sm:$0xff]
    %v1087 = vld [vmem:[#allocation11 + $0x438] sm:$0xff]
    %v1088 = vld [vmem:[#allocation11 + $0x440] sm:$0xff]
    %v1089 = vld [vmem:[#allocation11 + $0x448] sm:$0xff]
    %v1090 = vld [vmem:[#allocation11 + $0x450] sm:$0xff]
    %v1091 = vld [vmem:[#allocation11 + $0x458] sm:$0xff]
    %v1092 = vld [vmem:[#allocation11 + $0x460] sm:$0xff]
    %v1093 = vld [vmem:[#allocation11 + $0x468] sm:$0xff]
    %v1094 = vld [vmem:[#allocation11 + $0x470] sm:$0xff]
    %v1095 = vld [vmem:[#allocation11 + $0x478] sm:$0xff]
    %v1096 = vld [vmem:[#allocation11 + $0x480] sm:$0xff]
    %v1097 = vld [vmem:[#allocation11 + $0x488] sm:$0xff]
    %v1098 = vld [vmem:[#allocation11 + $0x490] sm:$0xff]
    %v1099 = vld [vmem:[#allocation11 + $0x498] sm:$0xff]
    %v1100 = vld [vmem:[#allocation11 + $0x4a0] sm:$0xff]
    %v1101 = vld [vmem:[#allocation11 + $0x4a8] sm:$0xff]
    %v1102 = vld [vmem:[#allocation11 + $0x4b0] sm:$0xff]
    %v1103 = vld [vmem:[#allocation11 + $0x4b8] sm:$0xff]
    %v1104 = vld [vmem:[#allocation11 + $0x4c0] sm:$0xff]
    %v1105 = vld [vmem:[#allocation11 + $0x4c8] sm:$0xff]
    %v1106 = vld [vmem:[#allocation11 + $0x4d0] sm:$0xff]
    %v1107 = vld [vmem:[#allocation11 + $0x4d8] sm:$0xff]
    %v1108 = vld [vmem:[#allocation11 + $0x4e0] sm:$0xff]
    %v1109 = vld [vmem:[#allocation11 + $0x4e8] sm:$0xff]
    %v1110 = vld [vmem:[#allocation11 + $0x4f0] sm:$0xff]
    %v1111 = vld [vmem:[#allocation11 + $0x4f8] sm:$0xff]
    %v1112 = vld [vmem:[#allocation13] sm:$0xff]
    %v1113 = vld [vmem:[#allocation13 + $0x8] sm:$0xff]
    %v1114 = vld [vmem:[#allocation13 + $0x10] sm:$0xff]
    %v1115 = vld [vmem:[#allocation13 + $0x18] sm:$0xff]
    %v1116 = vld [vmem:[#allocation13 + $0x20] sm:$0xff]
    %v1122 = vlaneseq
    %v1123 = vshrl.u32 %v1122, 7
    %v1124 = vsub.s32 0, %v1123
    %v1125 = vrot.slane %v1112, %v1124
    %v1126 = vlaneseq
    %v1127 = vshrl.u32 %v1126, 7
    %v1128 = vsub.s32 1, %v1127
    %v1129 = vrot.slane %v1112, %v1128
    %v1130 = vlaneseq
    %v1131 = vshrl.u32 %v1130, 7
    %v1132 = vsub.s32 2, %v1131
    %v1133 = vrot.slane %v1112, %v1132
    %v1134 = vlaneseq
    %v1135 = vshrl.u32 %v1134, 7
    %v1136 = vsub.s32 3, %v1135
    %v1137 = vrot.slane %v1112, %v1136
    %v1138 = vlaneseq
    %v1139 = vshrl.u32 %v1138, 7
    %v1140 = vsub.s32 4, %v1139
    %v1141 = vrot.slane %v1112, %v1140
    %v1142 = vlaneseq
    %v1143 = vshrl.u32 %v1142, 7
    %v1144 = vsub.s32 5, %v1143
    %v1145 = vrot.slane %v1112, %v1144
    %v1146 = vlaneseq
    %v1147 = vshrl.u32 %v1146, 7
    %v1148 = vsub.s32 6, %v1147
    %v1149 = vrot.slane %v1112, %v1148
    %v1150 = vlaneseq
    %v1151 = vshrl.u32 %v1150, 7
    %v1152 = vsub.s32 7, %v1151
    %v1153 = vrot.slane %v1112, %v1152
    %v1154 = vlaneseq
    %v1155 = vshrl.u32 %v1154, 7
    %v1156 = vsub.s32 0, %v1155
    %v1157 = vrot.slane %v1113, %v1156
    %v1158 = vlaneseq
    %v1159 = vshrl.u32 %v1158, 7
    %v1160 = vsub.s32 1, %v1159
    %v1161 = vrot.slane %v1113, %v1160
    %v1162 = vlaneseq
    %v1163 = vshrl.u32 %v1162, 7
    %v1164 = vsub.s32 2, %v1163
    %v1165 = vrot.slane %v1113, %v1164
    %v1166 = vlaneseq
    %v1167 = vshrl.u32 %v1166, 7
    %v1168 = vsub.s32 3, %v1167
    %v1169 = vrot.slane %v1113, %v1168
    %v1170 = vlaneseq
    %v1171 = vshrl.u32 %v1170, 7
    %v1172 = vsub.s32 4, %v1171
    %v1173 = vrot.slane %v1113, %v1172
    %v1174 = vlaneseq
    %v1175 = vshrl.u32 %v1174, 7
    %v1176 = vsub.s32 5, %v1175
    %v1177 = vrot.slane %v1113, %v1176
    %v1178 = vlaneseq
    %v1179 = vshrl.u32 %v1178, 7
    %v1180 = vsub.s32 6, %v1179
    %v1181 = vrot.slane %v1113, %v1180
    %v1182 = vlaneseq
    %v1183 = vshrl.u32 %v1182, 7
    %v1184 = vsub.s32 7, %v1183
    %v1185 = vrot.slane %v1113, %v1184
    %v1186 = vlaneseq
    %v1187 = vshrl.u32 %v1186, 7
    %v1188 = vsub.s32 0, %v1187
    %v1189 = vrot.slane %v1114, %v1188
    %v1190 = vlaneseq
    %v1191 = vshrl.u32 %v1190, 7
    %v1192 = vsub.s32 1, %v1191
    %v1193 = vrot.slane %v1114, %v1192
    %v1194 = vlaneseq
    %v1195 = vshrl.u32 %v1194, 7
    %v1196 = vsub.s32 2, %v1195
    %v1197 = vrot.slane %v1114, %v1196
    %v1198 = vlaneseq
    %v1199 = vshrl.u32 %v1198, 7
    %v1200 = vsub.s32 3, %v1199
    %v1201 = vrot.slane %v1114, %v1200
    %v1202 = vlaneseq
    %v1203 = vshrl.u32 %v1202, 7
    %v1204 = vsub.s32 4, %v1203
    %v1205 = vrot.slane %v1114, %v1204
    %v1206 = vlaneseq
    %v1207 = vshrl.u32 %v1206, 7
    %v1208 = vsub.s32 5, %v1207
    %v1209 = vrot.slane %v1114, %v1208
    %v1210 = vlaneseq
    %v1211 = vshrl.u32 %v1210, 7
    %v1212 = vsub.s32 6, %v1211
    %v1213 = vrot.slane %v1114, %v1212
    %v1214 = vlaneseq
    %v1215 = vshrl.u32 %v1214, 7
    %v1216 = vsub.s32 7, %v1215
    %v1217 = vrot.slane %v1114, %v1216
    %v1218 = vlaneseq
    %v1219 = vshrl.u32 %v1218, 7
    %v1220 = vsub.s32 0, %v1219
    %v1221 = vrot.slane %v1115, %v1220
    %v1222 = vlaneseq
    %v1223 = vshrl.u32 %v1222, 7
    %v1224 = vsub.s32 1, %v1223
    %v1225 = vrot.slane %v1115, %v1224
    %v1226 = vlaneseq
    %v1227 = vshrl.u32 %v1226, 7
    %v1228 = vsub.s32 2, %v1227
    %v1229 = vrot.slane %v1115, %v1228
    %v1230 = vlaneseq
    %v1231 = vshrl.u32 %v1230, 7
    %v1232 = vsub.s32 3, %v1231
    %v1233 = vrot.slane %v1115, %v1232
    %v1234 = vlaneseq
    %v1235 = vshrl.u32 %v1234, 7
    %v1236 = vsub.s32 4, %v1235
    %v1237 = vrot.slane %v1115, %v1236
    %v1238 = vlaneseq
    %v1239 = vshrl.u32 %v1238, 7
    %v1240 = vsub.s32 5, %v1239
    %v1241 = vrot.slane %v1115, %v1240
    %v1242 = vlaneseq
    %v1243 = vshrl.u32 %v1242, 7
    %v1244 = vsub.s32 6, %v1243
    %v1245 = vrot.slane %v1115, %v1244
    %v1246 = vlaneseq
    %v1247 = vshrl.u32 %v1246, 7
    %v1248 = vsub.s32 7, %v1247
    %v1249 = vrot.slane %v1115, %v1248
    %v1250 = vlaneseq
    %v1251 = vshrl.u32 %v1250, 7
    %v1252 = vsub.s32 0, %v1251
    %v1253 = vrot.slane %v1116, %v1252
    %v1254 = vlaneseq
    %v1255 = vshrl.u32 %v1254, 7
    %v1256 = vsub.s32 1, %v1255
    %v1257 = vrot.slane %v1116, %v1256
    %v1258 = vlaneseq
    %v1259 = vshrl.u32 %v1258, 7
    %v1260 = vsub.s32 2, %v1259
    %v1261 = vrot.slane %v1116, %v1260
    %v1262 = vlaneseq
    %v1263 = vshrl.u32 %v1262, 7
    %v1264 = vsub.s32 3, %v1263
    %v1265 = vrot.slane %v1116, %v1264
    %v1266 = vlaneseq
    %v1267 = vshrl.u32 %v1266, 7
    %v1268 = vsub.s32 4, %v1267
    %v1269 = vrot.slane %v1116, %v1268
    %v1270 = vlaneseq
    %v1271 = vshrl.u32 %v1270, 7
    %v1272 = vsub.s32 5, %v1271
    %v1273 = vrot.slane %v1116, %v1272
    %v1274 = vlaneseq
    %v1275 = vshrl.u32 %v1274, 7
    %v1276 = vsub.s32 6, %v1275
    %v1277 = vrot.slane %v1116, %v1276
    %v1278 = vlaneseq
    %v1279 = vshrl.u32 %v1278, 7
    %v1280 = vsub.s32 7, %v1279
    %v1281 = vrot.slane %v1116, %v1280
    %1323 = vrot.lane.b32.xlu0 %v951, 32
    %v1324 = vpop.permute.xlu0 %1323
    %v1325 = vsel %vm139, %v1324, 0
    %1327 = vmatprep.subr.mxu0 0.0
    %1328 = vmatpush1.msra.mxu0 0.0
    %1329 = vmatprep.subr.mxu0 0.0
    %1330 = vmatpush1.msra.mxu0 0.0
    %1331 = vmatprep.subr.mxu0 0.0
    %1332 = vmatpush1.msra.mxu0 0.0
    %1333 = vmatprep.subr.mxu0 0.0
    %1334 = vmatpush1.msra.mxu0 0.0
    %1335 = vmatprep.subr.mxu0 0.0
    %1336 = vmatpush1.msra.mxu0 0.0
    %1337 = vmatprep.subr.mxu0 0.0
    %1338 = vmatpush1.msra.mxu0 0.0
    %1339 = vmatprep.subr.mxu0 0.0
    %1340 = vmatpush1.msra.mxu0 0.0
    %1341 = vmatprep.subr.mxu0 0.0
    %1342 = vmatpush1.msra.mxu0 0.0
    %1343 = vmatprep.subr.mxu0 0.0
    %1344 = vmatpush1.msra.mxu0 0.0
    %1345 = vmatprep.subr.mxu0 0.0
    %1346 = vmatpush1.msra.mxu0 0.0
    %1347 = vmatprep.subr.mxu0 0.0
    %1348 = vmatpush1.msra.mxu0 0.0
    %1349 = vmatprep.subr.mxu0 0.0
    %1350 = vmatpush1.msra.mxu0 0.0
    %1351 = vmatprep.subr.mxu0 %v1073
    %1352 = vmatpush1.msra.mxu0 %v1072
    %1353 = vmatprep.subr.mxu0 %v1033
    %1354 = vmatpush1.msra.mxu0 %v1032
    %1355 = vmatprep.subr.mxu0 %v993
    %1356 = vmatpush1.msra.mxu0 %v992
    %1357 = vmatprep.subr.mxu0 %v953
    %1358 = vmatpush1.msra.mxu0 %v952
    %1359 = vmatprep.subr.mxu0 0.0
    %1360 = vmatpush2.msra.mxu0 0.0
    %1361 = vmatprep.subr.mxu0 0.0
    %1362 = vmatpush2.msra.mxu0 0.0
    %1363 = vmatprep.subr.mxu0 0.0
    %1364 = vmatpush2.msra.mxu0 0.0
    %1365 = vmatprep.subr.mxu0 0.0
    %1366 = vmatpush2.msra.mxu0 0.0
    %1367 = vmatprep.subr.mxu0 0.0
    %1368 = vmatpush2.msra.mxu0 0.0
    %1369 = vmatprep.subr.mxu0 0.0
    %1370 = vmatpush2.msra.mxu0 0.0
    %1371 = vmatprep.subr.mxu0 0.0
    %1372 = vmatpush2.msra.mxu0 0.0
    %1373 = vmatprep.subr.mxu0 0.0
    %1374 = vmatpush2.msra.mxu0 0.0
    %1375 = vmatprep.subr.mxu0 0.0
    %1376 = vmatpush2.msra.mxu0 0.0
    %1377 = vmatprep.subr.mxu0 0.0
    %1378 = vmatpush2.msra.mxu0 0.0
    %1379 = vmatprep.subr.mxu0 0.0
    %1380 = vmatpush2.msra.mxu0 0.0
    %1381 = vmatprep.subr.mxu0 0.0
    %1382 = vmatpush2.msra.mxu0 0.0
    %1383 = vmatprep.subr.mxu0 0.0
    %1384 = vmatpush2.msra.mxu0 0.0
    %1385 = vmatprep.subr.mxu0 0.0
    %1386 = vmatpush2.msra.mxu0 0.0
    %1387 = vmatprep.subr.mxu0 0.0
    %1388 = vmatpush2.msra.mxu0 0.0
    %1389 = vmatprep.subr.mxu0 0.0
    %1390 = vmatpush2.msra.mxu0 0.0
    %1391 = vmatprep.mubr.f32.mxu0 0.0
    %1392 = vmatmul.mubr.f32.gmra.mxu0 %v1325
    %v1393 = vpop.f32.mrf.mxu0
    %v1394 = vadd.f32 %v1125, %v1393
    %v1395 = vpop.f32.mrf.mxu0
    %v1396 = vadd.f32 %v1129, %v1395
    %1397 = vdwg.mxu0
    %1398 = vmatprep.subr.mxu0 0.0
    %1399 = vmatpush1.msra.mxu0 0.0
    %1400 = vmatprep.subr.mxu0 0.0
    %1401 = vmatpush1.msra.mxu0 0.0
    %1402 = vmatprep.subr.mxu0 0.0
    %1403 = vmatpush1.msra.mxu0 0.0
    %1404 = vmatprep.subr.mxu0 0.0
    %1405 = vmatpush1.msra.mxu0 0.0
    %1406 = vmatprep.subr.mxu0 0.0
    %1407 = vmatpush1.msra.mxu0 0.0
    %1408 = vmatprep.subr.mxu0 0.0
    %1409 = vmatpush1.msra.mxu0 0.0
    %1410 = vmatprep.subr.mxu0 0.0
    %1411 = vmatpush1.msra.mxu0 0.0
    %1412 = vmatprep.subr.mxu0 0.0
    %1413 = vmatpush1.msra.mxu0 0.0
    %1414 = vmatprep.subr.mxu0 0.0
    %1415 = vmatpush1.msra.mxu0 0.0
    %1416 = vmatprep.subr.mxu0 0.0
    %1417 = vmatpush1.msra.mxu0 0.0
    %1418 = vmatprep.subr.mxu0 0.0
    %1419 = vmatpush1.msra.mxu0 0.0
    %1420 = vmatprep.subr.mxu0 0.0
    %1421 = vmatpush1.msra.mxu0 0.0
    %1422 = vmatprep.subr.mxu0 %v1075
    %1423 = vmatpush1.msra.mxu0 %v1074
    %1424 = vmatprep.subr.mxu0 %v1035
    %1425 = vmatpush1.msra.mxu0 %v1034
    %1426 = vmatprep.subr.mxu0 %v995
    %1427 = vmatpush1.msra.mxu0 %v994
    %1428 = vmatprep.subr.mxu0 %v955
    %1429 = vmatpush1.msra.mxu0 %v954
    %1430 = vmatprep.subr.mxu0 0.0
    %1431 = vmatpush2.msra.mxu0 0.0
    %1432 = vmatprep.subr.mxu0 0.0
    %1433 = vmatpush2.msra.mxu0 0.0
    %1434 = vmatprep.subr.mxu0 0.0
    %1435 = vmatpush2.msra.mxu0 0.0
    %1436 = vmatprep.subr.mxu0 0.0
    %1437 = vmatpush2.msra.mxu0 0.0
    %1438 = vmatprep.subr.mxu0 0.0
    %1439 = vmatpush2.msra.mxu0 0.0
    %1440 = vmatprep.subr.mxu0 0.0
    %1441 = vmatpush2.msra.mxu0 0.0
    %1442 = vmatprep.subr.mxu0 0.0
    %1443 = vmatpush2.msra.mxu0 0.0
    %1444 = vmatprep.subr.mxu0 0.0
    %1445 = vmatpush2.msra.mxu0 0.0
    %1446 = vmatprep.subr.mxu0 0.0
    %1447 = vmatpush2.msra.mxu0 0.0
    %1448 = vmatprep.subr.mxu0 0.0
    %1449 = vmatpush2.msra.mxu0 0.0
    %1450 = vmatprep.subr.mxu0 0.0
    %1451 = vmatpush2.msra.mxu0 0.0
    %1452 = vmatprep.subr.mxu0 0.0
    %1453 = vmatpush2.msra.mxu0 0.0
    %1454 = vmatprep.subr.mxu0 0.0
    %1455 = vmatpush2.msra.mxu0 0.0
    %1456 = vmatprep.subr.mxu0 0.0
    %1457 = vmatpush2.msra.mxu0 0.0
    %1458 = vmatprep.subr.mxu0 0.0
    %1459 = vmatpush2.msra.mxu0 0.0
    %1460 = vmatprep.subr.mxu0 0.0
    %1461 = vmatpush2.msra.mxu0 0.0
    %1462 = vmatprep.mubr.f32.mxu0 0.0
    %1463 = vmatmul.mubr.f32.gmra.mxu0 %v1325
    %v1464 = vpop.f32.mrf.mxu0
    %v1465 = vadd.f32 %v1133, %v1464
    %v1466 = vpop.f32.mrf.mxu0
    %v1467 = vadd.f32 %v1137, %v1466
    %1468 = vdwg.mxu0
    %1469 = vmatprep.subr.mxu0 0.0
    %1470 = vmatpush1.msra.mxu0 0.0
    %1471 = vmatprep.subr.mxu0 0.0
    %1472 = vmatpush1.msra.mxu0 0.0
    %1473 = vmatprep.subr.mxu0 0.0
    %1474 = vmatpush1.msra.mxu0 0.0
    %1475 = vmatprep.subr.mxu0 0.0
    %1476 = vmatpush1.msra.mxu0 0.0
    %1477 = vmatprep.subr.mxu0 0.0
    %1478 = vmatpush1.msra.mxu0 0.0
    %1479 = vmatprep.subr.mxu0 0.0
    %1480 = vmatpush1.msra.mxu0 0.0
    %1481 = vmatprep.subr.mxu0 0.0
    %1482 = vmatpush1.msra.mxu0 0.0
    %1483 = vmatprep.subr.mxu0 0.0
    %1484 = vmatpush1.msra.mxu0 0.0
    %1485 = vmatprep.subr.mxu0 0.0
    %1486 = vmatpush1.msra.mxu0 0.0
    %1487 = vmatprep.subr.mxu0 0.0
    %1488 = vmatpush1.msra.mxu0 0.0
    %1489 = vmatprep.subr.mxu0 0.0
    %1490 = vmatpush1.msra.mxu0 0.0
    %1491 = vmatprep.subr.mxu0 0.0
    %1492 = vmatpush1.msra.mxu0 0.0
    %1493 = vmatprep.subr.mxu0 %v1077
    %1494 = vmatpush1.msra.mxu0 %v1076
    %1495 = vmatprep.subr.mxu0 %v1037
    %1496 = vmatpush1.msra.mxu0 %v1036
    %1497 = vmatprep.subr.mxu0 %v997
    %1498 = vmatpush1.msra.mxu0 %v996
    %1499 = vmatprep.subr.mxu0 %v957
    %1500 = vmatpush1.msra.mxu0 %v956
    %1501 = vmatprep.subr.mxu0 0.0
    %1502 = vmatpush2.msra.mxu0 0.0
    %1503 = vmatprep.subr.mxu0 0.0
    %1504 = vmatpush2.msra.mxu0 0.0
    %1505 = vmatprep.subr.mxu0 0.0
    %1506 = vmatpush2.msra.mxu0 0.0
    %1507 = vmatprep.subr.mxu0 0.0
    %1508 = vmatpush2.msra.mxu0 0.0
    %1509 = vmatprep.subr.mxu0 0.0
    %1510 = vmatpush2.msra.mxu0 0.0
    %1511 = vmatprep.subr.mxu0 0.0
    %1512 = vmatpush2.msra.mxu0 0.0
    %1513 = vmatprep.subr.mxu0 0.0
    %1514 = vmatpush2.msra.mxu0 0.0
    %1515 = vmatprep.subr.mxu0 0.0
    %1516 = vmatpush2.msra.mxu0 0.0
    %1517 = vmatprep.subr.mxu0 0.0
    %1518 = vmatpush2.msra.mxu0 0.0
    %1519 = vmatprep.subr.mxu0 0.0
    %1520 = vmatpush2.msra.mxu0 0.0
    %1521 = vmatprep.subr.mxu0 0.0
    %1522 = vmatpush2.msra.mxu0 0.0
    %1523 = vmatprep.subr.mxu0 0.0
    %1524 = vmatpush2.msra.mxu0 0.0
    %1525 = vmatprep.subr.mxu0 0.0
    %1526 = vmatpush2.msra.mxu0 0.0
    %1527 = vmatprep.subr.mxu0 0.0
    %1528 = vmatpush2.msra.mxu0 0.0
    %1529 = vmatprep.subr.mxu0 0.0
    %1530 = vmatpush2.msra.mxu0 0.0
    %1531 = vmatprep.subr.mxu0 0.0
    %1532 = vmatpush2.msra.mxu0 0.0
    %1533 = vmatprep.mubr.f32.mxu0 0.0
    %1534 = vmatmul.mubr.f32.gmra.mxu0 %v1325
    %v1535 = vpop.f32.mrf.mxu0
    %v1536 = vadd.f32 %v1141, %v1535
    %v1537 = vpop.f32.mrf.mxu0
    %v1538 = vadd.f32 %v1145, %v1537
    %1539 = vdwg.mxu0
    %1540 = vmatprep.subr.mxu0 0.0
    %1541 = vmatpush1.msra.mxu0 0.0
    %1542 = vmatprep.subr.mxu0 0.0
    %1543 = vmatpush1.msra.mxu0 0.0
    %1544 = vmatprep.subr.mxu0 0.0
    %1545 = vmatpush1.msra.mxu0 0.0
    %1546 = vmatprep.subr.mxu0 0.0
    %1547 = vmatpush1.msra.mxu0 0.0
    %1548 = vmatprep.subr.mxu0 0.0
    %1549 = vmatpush1.msra.mxu0 0.0
    %1550 = vmatprep.subr.mxu0 0.0
    %1551 = vmatpush1.msra.mxu0 0.0
    %1552 = vmatprep.subr.mxu0 0.0
    %1553 = vmatpush1.msra.mxu0 0.0
    %1554 = vmatprep.subr.mxu0 0.0
    %1555 = vmatpush1.msra.mxu0 0.0
    %1556 = vmatprep.subr.mxu0 0.0
    %1557 = vmatpush1.msra.mxu0 0.0
    %1558 = vmatprep.subr.mxu0 0.0
    %1559 = vmatpush1.msra.mxu0 0.0
    %1560 = vmatprep.subr.mxu0 0.0
    %1561 = vmatpush1.msra.mxu0 0.0
    %1562 = vmatprep.subr.mxu0 0.0
    %1563 = vmatpush1.msra.mxu0 0.0
    %1564 = vmatprep.subr.mxu0 %v1079
    %1565 = vmatpush1.msra.mxu0 %v1078
    %1566 = vmatprep.subr.mxu0 %v1039
    %1567 = vmatpush1.msra.mxu0 %v1038
    %1568 = vmatprep.subr.mxu0 %v999
    %1569 = vmatpush1.msra.mxu0 %v998
    %1570 = vmatprep.subr.mxu0 %v959
    %1571 = vmatpush1.msra.mxu0 %v958
    %1572 = vmatprep.subr.mxu0 0.0
    %1573 = vmatpush2.msra.mxu0 0.0
    %1574 = vmatprep.subr.mxu0 0.0
    %1575 = vmatpush2.msra.mxu0 0.0
    %1576 = vmatprep.subr.mxu0 0.0
    %1577 = vmatpush2.msra.mxu0 0.0
    %1578 = vmatprep.subr.mxu0 0.0
    %1579 = vmatpush2.msra.mxu0 0.0
    %1580 = vmatprep.subr.mxu0 0.0
    %1581 = vmatpush2.msra.mxu0 0.0
    %1582 = vmatprep.subr.mxu0 0.0
    %1583 = vmatpush2.msra.mxu0 0.0
    %1584 = vmatprep.subr.mxu0 0.0
    %1585 = vmatpush2.msra.mxu0 0.0
    %1586 = vmatprep.subr.mxu0 0.0
    %1587 = vmatpush2.msra.mxu0 0.0
    %1588 = vmatprep.subr.mxu0 0.0
    %1589 = vmatpush2.msra.mxu0 0.0
    %1590 = vmatprep.subr.mxu0 0.0
    %1591 = vmatpush2.msra.mxu0 0.0
    %1592 = vmatprep.subr.mxu0 0.0
    %1593 = vmatpush2.msra.mxu0 0.0
    %1594 = vmatprep.subr.mxu0 0.0
    %1595 = vmatpush2.msra.mxu0 0.0
    %1596 = vmatprep.subr.mxu0 0.0
    %1597 = vmatpush2.msra.mxu0 0.0
    %1598 = vmatprep.subr.mxu0 0.0
    %1599 = vmatpush2.msra.mxu0 0.0
    %1600 = vmatprep.subr.mxu0 0.0
    %1601 = vmatpush2.msra.mxu0 0.0
    %1602 = vmatprep.subr.mxu0 0.0
    %1603 = vmatpush2.msra.mxu0 0.0
    %1604 = vmatprep.mubr.f32.mxu0 0.0
    %1605 = vmatmul.mubr.f32.gmra.mxu0 %v1325
    %v1606 = vpop.f32.mrf.mxu0
    %v1607 = vadd.f32 %v1149, %v1606
    %v1608 = vpop.f32.mrf.mxu0
    %v1609 = vadd.f32 %v1153, %v1608
    %1610 = vdwg.mxu0
    %1611 = vmatprep.subr.mxu0 0.0
    %1612 = vmatpush1.msra.mxu0 0.0
    %1613 = vmatprep.subr.mxu0 0.0
    %1614 = vmatpush1.msra.mxu0 0.0
    %1615 = vmatprep.subr.mxu0 0.0
    %1616 = vmatpush1.msra.mxu0 0.0
    %1617 = vmatprep.subr.mxu0 0.0
    %1618 = vmatpush1.msra.mxu0 0.0
    %1619 = vmatprep.subr.mxu0 0.0
    %1620 = vmatpush1.msra.mxu0 0.0
    %1621 = vmatprep.subr.mxu0 0.0
    %1622 = vmatpush1.msra.mxu0 0.0
    %1623 = vmatprep.subr.mxu0 0.0
    %1624 = vmatpush1.msra.mxu0 0.0
    %1625 = vmatprep.subr.mxu0 0.0
    %1626 = vmatpush1.msra.mxu0 0.0
    %1627 = vmatprep.subr.mxu0 0.0
    %1628 = vmatpush1.msra.mxu0 0.0
    %1629 = vmatprep.subr.mxu0 0.0
    %1630 = vmatpush1.msra.mxu0 0.0
    %1631 = vmatprep.subr.mxu0 0.0
    %1632 = vmatpush1.msra.mxu0 0.0
    %1633 = vmatprep.subr.mxu0 0.0
    %1634 = vmatpush1.msra.mxu0 0.0
    %1635 = vmatprep.subr.mxu0 %v1081
    %1636 = vmatpush1.msra.mxu0 %v1080
    %1637 = vmatprep.subr.mxu0 %v1041
    %1638 = vmatpush1.msra.mxu0 %v1040
    %1639 = vmatprep.subr.mxu0 %v1001
    %1640 = vmatpush1.msra.mxu0 %v1000
    %1641 = vmatprep.subr.mxu0 %v961
    %1642 = vmatpush1.msra.mxu0 %v960
    %1643 = vmatprep.subr.mxu0 0.0
    %1644 = vmatpush2.msra.mxu0 0.0
    %1645 = vmatprep.subr.mxu0 0.0
    %1646 = vmatpush2.msra.mxu0 0.0
    %1647 = vmatprep.subr.mxu0 0.0
    %1648 = vmatpush2.msra.mxu0 0.0
    %1649 = vmatprep.subr.mxu0 0.0
    %1650 = vmatpush2.msra.mxu0 0.0
    %1651 = vmatprep.subr.mxu0 0.0
    %1652 = vmatpush2.msra.mxu0 0.0
    %1653 = vmatprep.subr.mxu0 0.0
    %1654 = vmatpush2.msra.mxu0 0.0
    %1655 = vmatprep.subr.mxu0 0.0
    %1656 = vmatpush2.msra.mxu0 0.0
    %1657 = vmatprep.subr.mxu0 0.0
    %1658 = vmatpush2.msra.mxu0 0.0
    %1659 = vmatprep.subr.mxu0 0.0
    %1660 = vmatpush2.msra.mxu0 0.0
    %1661 = vmatprep.subr.mxu0 0.0
    %1662 = vmatpush2.msra.mxu0 0.0
    %1663 = vmatprep.subr.mxu0 0.0
    %1664 = vmatpush2.msra.mxu0 0.0
    %1665 = vmatprep.subr.mxu0 0.0
    %1666 = vmatpush2.msra.mxu0 0.0
    %1667 = vmatprep.subr.mxu0 0.0
    %1668 = vmatpush2.msra.mxu0 0.0
    %1669 = vmatprep.subr.mxu0 0.0
    %1670 = vmatpush2.msra.mxu0 0.0
    %1671 = vmatprep.subr.mxu0 0.0
    %1672 = vmatpush2.msra.mxu0 0.0
    %1673 = vmatprep.subr.mxu0 0.0
    %1674 = vmatpush2.msra.mxu0 0.0
    %1675 = vmatprep.mubr.f32.mxu0 0.0
    %1676 = vmatmul.mubr.f32.gmra.mxu0 %v1325
    %v1677 = vpop.f32.mrf.mxu0
    %v1678 = vadd.f32 %v1157, %v1677
    %v1679 = vpop.f32.mrf.mxu0
    %v1680 = vadd.f32 %v1161, %v1679
    %1681 = vdwg.mxu0
    %1682 = vmatprep.subr.mxu0 0.0
    %1683 = vmatpush1.msra.mxu0 0.0
    %1684 = vmatprep.subr.mxu0 0.0
    %1685 = vmatpush1.msra.mxu0 0.0
    %1686 = vmatprep.subr.mxu0 0.0
    %1687 = vmatpush1.msra.mxu0 0.0
    %1688 = vmatprep.subr.mxu0 0.0
    %1689 = vmatpush1.msra.mxu0 0.0
    %1690 = vmatprep.subr.mxu0 0.0
    %1691 = vmatpush1.msra.mxu0 0.0
    %1692 = vmatprep.subr.mxu0 0.0
    %1693 = vmatpush1.msra.mxu0 0.0
    %1694 = vmatprep.subr.mxu0 0.0
    %1695 = vmatpush1.msra.mxu0 0.0
    %1696 = vmatprep.subr.mxu0 0.0
    %1697 = vmatpush1.msra.mxu0 0.0
    %1698 = vmatprep.subr.mxu0 0.0
    %1699 = vmatpush1.msra.mxu0 0.0
    %1700 = vmatprep.subr.mxu0 0.0
    %1701 = vmatpush1.msra.mxu0 0.0
    %1702 = vmatprep.subr.mxu0 0.0
    %1703 = vmatpush1.msra.mxu0 0.0
    %1704 = vmatprep.subr.mxu0 0.0
    %1705 = vmatpush1.msra.mxu0 0.0
    %1706 = vmatprep.subr.mxu0 %v1083
    %1707 = vmatpush1.msra.mxu0 %v1082
    %1708 = vmatprep.subr.mxu0 %v1043
    %1709 = vmatpush1.msra.mxu0 %v1042
    %1710 = vmatprep.subr.mxu0 %v1003
    %1711 = vmatpush1.msra.mxu0 %v1002
    %1712 = vmatprep.subr.mxu0 %v963
    %1713 = vmatpush1.msra.mxu0 %v962
    %1714 = vmatprep.subr.mxu0 0.0
    %1715 = vmatpush2.msra.mxu0 0.0
    %1716 = vmatprep.subr.mxu0 0.0
    %1717 = vmatpush2.msra.mxu0 0.0
    %1718 = vmatprep.subr.mxu0 0.0
    %1719 = vmatpush2.msra.mxu0 0.0
    %1720 = vmatprep.subr.mxu0 0.0
    %1721 = vmatpush2.msra.mxu0 0.0
    %1722 = vmatprep.subr.mxu0 0.0
    %1723 = vmatpush2.msra.mxu0 0.0
    %1724 = vmatprep.subr.mxu0 0.0
    %1725 = vmatpush2.msra.mxu0 0.0
    %1726 = vmatprep.subr.mxu0 0.0
    %1727 = vmatpush2.msra.mxu0 0.0
    %1728 = vmatprep.subr.mxu0 0.0
    %1729 = vmatpush2.msra.mxu0 0.0
    %1730 = vmatprep.subr.mxu0 0.0
    %1731 = vmatpush2.msra.mxu0 0.0
    %1732 = vmatprep.subr.mxu0 0.0
    %1733 = vmatpush2.msra.mxu0 0.0
    %1734 = vmatprep.subr.mxu0 0.0
    %1735 = vmatpush2.msra.mxu0 0.0
    %1736 = vmatprep.subr.mxu0 0.0
    %1737 = vmatpush2.msra.mxu0 0.0
    %1738 = vmatprep.subr.mxu0 0.0
    %1739 = vmatpush2.msra.mxu0 0.0
    %1740 = vmatprep.subr.mxu0 0.0
    %1741 = vmatpush2.msra.mxu0 0.0
    %1742 = vmatprep.subr.mxu0 0.0
    %1743 = vmatpush2.msra.mxu0 0.0
    %1744 = vmatprep.subr.mxu0 0.0
    %1745 = vmatpush2.msra.mxu0 0.0
    %1746 = vmatprep.mubr.f32.mxu0 0.0
    %1747 = vmatmul.mubr.f32.gmra.mxu0 %v1325
    %v1748 = vpop.f32.mrf.mxu0
    %v1749 = vadd.f32 %v1165, %v1748
    %v1750 = vpop.f32.mrf.mxu0
    %v1751 = vadd.f32 %v1169, %v1750
    %1752 = vdwg.mxu0
    %1753 = vmatprep.subr.mxu0 0.0
    %1754 = vmatpush1.msra.mxu0 0.0
    %1755 = vmatprep.subr.mxu0 0.0
    %1756 = vmatpush1.msra.mxu0 0.0
    %1757 = vmatprep.subr.mxu0 0.0
    %1758 = vmatpush1.msra.mxu0 0.0
    %1759 = vmatprep.subr.mxu0 0.0
    %1760 = vmatpush1.msra.mxu0 0.0
    %1761 = vmatprep.subr.mxu0 0.0
    %1762 = vmatpush1.msra.mxu0 0.0
    %1763 = vmatprep.subr.mxu0 0.0
    %1764 = vmatpush1.msra.mxu0 0.0
    %1765 = vmatprep.subr.mxu0 0.0
    %1766 = vmatpush1.msra.mxu0 0.0
    %1767 = vmatprep.subr.mxu0 0.0
    %1768 = vmatpush1.msra.mxu0 0.0
    %1769 = vmatprep.subr.mxu0 0.0
    %1770 = vmatpush1.msra.mxu0 0.0
    %1771 = vmatprep.subr.mxu0 0.0
    %1772 = vmatpush1.msra.mxu0 0.0
    %1773 = vmatprep.subr.mxu0 0.0
    %1774 = vmatpush1.msra.mxu0 0.0
    %1775 = vmatprep.subr.mxu0 0.0
    %1776 = vmatpush1.msra.mxu0 0.0
    %1777 = vmatprep.subr.mxu0 %v1085
    %1778 = vmatpush1.msra.mxu0 %v1084
    %1779 = vmatprep.subr.mxu0 %v1045
    %1780 = vmatpush1.msra.mxu0 %v1044
    %1781 = vmatprep.subr.mxu0 %v1005
    %1782 = vmatpush1.msra.mxu0 %v1004
    %1783 = vmatprep.subr.mxu0 %v965
    %1784 = vmatpush1.msra.mxu0 %v964
    %1785 = vmatprep.subr.mxu0 0.0
    %1786 = vmatpush2.msra.mxu0 0.0
    %1787 = vmatprep.subr.mxu0 0.0
    %1788 = vmatpush2.msra.mxu0 0.0
    %1789 = vmatprep.subr.mxu0 0.0
    %1790 = vmatpush2.msra.mxu0 0.0
    %1791 = vmatprep.subr.mxu0 0.0
    %1792 = vmatpush2.msra.mxu0 0.0
    %1793 = vmatprep.subr.mxu0 0.0
    %1794 = vmatpush2.msra.mxu0 0.0
    %1795 = vmatprep.subr.mxu0 0.0
    %1796 = vmatpush2.msra.mxu0 0.0
    %1797 = vmatprep.subr.mxu0 0.0
    %1798 = vmatpush2.msra.mxu0 0.0
    %1799 = vmatprep.subr.mxu0 0.0
    %1800 = vmatpush2.msra.mxu0 0.0
    %1801 = vmatprep.subr.mxu0 0.0
    %1802 = vmatpush2.msra.mxu0 0.0
    %1803 = vmatprep.subr.mxu0 0.0
    %1804 = vmatpush2.msra.mxu0 0.0
    %1805 = vmatprep.subr.mxu0 0.0
    %1806 = vmatpush2.msra.mxu0 0.0
    %1807 = vmatprep.subr.mxu0 0.0
    %1808 = vmatpush2.msra.mxu0 0.0
    %1809 = vmatprep.subr.mxu0 0.0
    %1810 = vmatpush2.msra.mxu0 0.0
    %1811 = vmatprep.subr.mxu0 0.0
    %1812 = vmatpush2.msra.mxu0 0.0
    %1813 = vmatprep.subr.mxu0 0.0
    %1814 = vmatpush2.msra.mxu0 0.0
    %1815 = vmatprep.subr.mxu0 0.0
    %1816 = vmatpush2.msra.mxu0 0.0
    %1817 = vmatprep.mubr.f32.mxu0 0.0
    %1818 = vmatmul.mubr.f32.gmra.mxu0 %v1325
    %v1819 = vpop.f32.mrf.mxu0
    %v1820 = vadd.f32 %v1173, %v1819
    %v1821 = vpop.f32.mrf.mxu0
    %v1822 = vadd.f32 %v1177, %v1821
    %1823 = vdwg.mxu0
    %1824 = vmatprep.subr.mxu0 0.0
    %1825 = vmatpush1.msra.mxu0 0.0
    %1826 = vmatprep.subr.mxu0 0.0
    %1827 = vmatpush1.msra.mxu0 0.0
    %1828 = vmatprep.subr.mxu0 0.0
    %1829 = vmatpush1.msra.mxu0 0.0
    %1830 = vmatprep.subr.mxu0 0.0
    %1831 = vmatpush1.msra.mxu0 0.0
    %1832 = vmatprep.subr.mxu0 0.0
    %1833 = vmatpush1.msra.mxu0 0.0
    %1834 = vmatprep.subr.mxu0 0.0
    %1835 = vmatpush1.msra.mxu0 0.0
    %1836 = vmatprep.subr.mxu0 0.0
    %1837 = vmatpush1.msra.mxu0 0.0
    %1838 = vmatprep.subr.mxu0 0.0
    %1839 = vmatpush1.msra.mxu0 0.0
    %1840 = vmatprep.subr.mxu0 0.0
    %1841 = vmatpush1.msra.mxu0 0.0
    %1842 = vmatprep.subr.mxu0 0.0
    %1843 = vmatpush1.msra.mxu0 0.0
    %1844 = vmatprep.subr.mxu0 0.0
    %1845 = vmatpush1.msra.mxu0 0.0
    %1846 = vmatprep.subr.mxu0 0.0
    %1847 = vmatpush1.msra.mxu0 0.0
    %1848 = vmatprep.subr.mxu0 %v1087
    %1849 = vmatpush1.msra.mxu0 %v1086
    %1850 = vmatprep.subr.mxu0 %v1047
    %1851 = vmatpush1.msra.mxu0 %v1046
    %1852 = vmatprep.subr.mxu0 %v1007
    %1853 = vmatpush1.msra.mxu0 %v1006
    %1854 = vmatprep.subr.mxu0 %v967
    %1855 = vmatpush1.msra.mxu0 %v966
    %1856 = vmatprep.subr.mxu0 0.0
    %1857 = vmatpush2.msra.mxu0 0.0
    %1858 = vmatprep.subr.mxu0 0.0
    %1859 = vmatpush2.msra.mxu0 0.0
    %1860 = vmatprep.subr.mxu0 0.0
    %1861 = vmatpush2.msra.mxu0 0.0
    %1862 = vmatprep.subr.mxu0 0.0
    %1863 = vmatpush2.msra.mxu0 0.0
    %1864 = vmatprep.subr.mxu0 0.0
    %1865 = vmatpush2.msra.mxu0 0.0
    %1866 = vmatprep.subr.mxu0 0.0
    %1867 = vmatpush2.msra.mxu0 0.0
    %1868 = vmatprep.subr.mxu0 0.0
    %1869 = vmatpush2.msra.mxu0 0.0
    %1870 = vmatprep.subr.mxu0 0.0
    %1871 = vmatpush2.msra.mxu0 0.0
    %1872 = vmatprep.subr.mxu0 0.0
    %1873 = vmatpush2.msra.mxu0 0.0
    %1874 = vmatprep.subr.mxu0 0.0
    %1875 = vmatpush2.msra.mxu0 0.0
    %1876 = vmatprep.subr.mxu0 0.0
    %1877 = vmatpush2.msra.mxu0 0.0
    %1878 = vmatprep.subr.mxu0 0.0
    %1879 = vmatpush2.msra.mxu0 0.0
    %1880 = vmatprep.subr.mxu0 0.0
    %1881 = vmatpush2.msra.mxu0 0.0
    %1882 = vmatprep.subr.mxu0 0.0
    %1883 = vmatpush2.msra.mxu0 0.0
    %1884 = vmatprep.subr.mxu0 0.0
    %1885 = vmatpush2.msra.mxu0 0.0
    %1886 = vmatprep.subr.mxu0 0.0
    %1887 = vmatpush2.msra.mxu0 0.0
    %1888 = vmatprep.mubr.f32.mxu0 0.0
    %1889 = vmatmul.mubr.f32.gmra.mxu0 %v1325
    %v1890 = vpop.f32.mrf.mxu0
    %v1891 = vadd.f32 %v1181, %v1890
    %v1892 = vpop.f32.mrf.mxu0
    %v1893 = vadd.f32 %v1185, %v1892
    %1894 = vdwg.mxu0
    %1895 = vmatprep.subr.mxu0 0.0
    %1896 = vmatpush1.msra.mxu0 0.0
    %1897 = vmatprep.subr.mxu0 0.0
    %1898 = vmatpush1.msra.mxu0 0.0
    %1899 = vmatprep.subr.mxu0 0.0
    %1900 = vmatpush1.msra.mxu0 0.0
    %1901 = vmatprep.subr.mxu0 0.0
    %1902 = vmatpush1.msra.mxu0 0.0
    %1903 = vmatprep.subr.mxu0 0.0
    %1904 = vmatpush1.msra.mxu0 0.0
    %1905 = vmatprep.subr.mxu0 0.0
    %1906 = vmatpush1.msra.mxu0 0.0
    %1907 = vmatprep.subr.mxu0 0.0
    %1908 = vmatpush1.msra.mxu0 0.0
    %1909 = vmatprep.subr.mxu0 0.0
    %1910 = vmatpush1.msra.mxu0 0.0
    %1911 = vmatprep.subr.mxu0 0.0
    %1912 = vmatpush1.msra.mxu0 0.0
    %1913 = vmatprep.subr.mxu0 0.0
    %1914 = vmatpush1.msra.mxu0 0.0
    %1915 = vmatprep.subr.mxu0 0.0
    %1916 = vmatpush1.msra.mxu0 0.0
    %1917 = vmatprep.subr.mxu0 0.0
    %1918 = vmatpush1.msra.mxu0 0.0
    %1919 = vmatprep.subr.mxu0 %v1089
    %1920 = vmatpush1.msra.mxu0 %v1088
    %1921 = vmatprep.subr.mxu0 %v1049
    %1922 = vmatpush1.msra.mxu0 %v1048
    %1923 = vmatprep.subr.mxu0 %v1009
    %1924 = vmatpush1.msra.mxu0 %v1008
    %1925 = vmatprep.subr.mxu0 %v969
    %1926 = vmatpush1.msra.mxu0 %v968
    %1927 = vmatprep.subr.mxu0 0.0
    %1928 = vmatpush2.msra.mxu0 0.0
    %1929 = vmatprep.subr.mxu0 0.0
    %1930 = vmatpush2.msra.mxu0 0.0
    %1931 = vmatprep.subr.mxu0 0.0
    %1932 = vmatpush2.msra.mxu0 0.0
    %1933 = vmatprep.subr.mxu0 0.0
    %1934 = vmatpush2.msra.mxu0 0.0
    %1935 = vmatprep.subr.mxu0 0.0
    %1936 = vmatpush2.msra.mxu0 0.0
    %1937 = vmatprep.subr.mxu0 0.0
    %1938 = vmatpush2.msra.mxu0 0.0
    %1939 = vmatprep.subr.mxu0 0.0
    %1940 = vmatpush2.msra.mxu0 0.0
    %1941 = vmatprep.subr.mxu0 0.0
    %1942 = vmatpush2.msra.mxu0 0.0
    %1943 = vmatprep.subr.mxu0 0.0
    %1944 = vmatpush2.msra.mxu0 0.0
    %1945 = vmatprep.subr.mxu0 0.0
    %1946 = vmatpush2.msra.mxu0 0.0
    %1947 = vmatprep.subr.mxu0 0.0
    %1948 = vmatpush2.msra.mxu0 0.0
    %1949 = vmatprep.subr.mxu0 0.0
    %1950 = vmatpush2.msra.mxu0 0.0
    %1951 = vmatprep.subr.mxu0 0.0
    %1952 = vmatpush2.msra.mxu0 0.0
    %1953 = vmatprep.subr.mxu0 0.0
    %1954 = vmatpush2.msra.mxu0 0.0
    %1955 = vmatprep.subr.mxu0 0.0
    %1956 = vmatpush2.msra.mxu0 0.0
    %1957 = vmatprep.subr.mxu0 0.0
    %1958 = vmatpush2.msra.mxu0 0.0
    %1959 = vmatprep.mubr.f32.mxu0 0.0
    %1960 = vmatmul.mubr.f32.gmra.mxu0 %v1325
    %v1961 = vpop.f32.mrf.mxu0
    %v1962 = vadd.f32 %v1189, %v1961
    %v1963 = vpop.f32.mrf.mxu0
    %v1964 = vadd.f32 %v1193, %v1963
    %1965 = vdwg.mxu0
    %1966 = vmatprep.subr.mxu0 0.0
    %1967 = vmatpush1.msra.mxu0 0.0
    %1968 = vmatprep.subr.mxu0 0.0
    %1969 = vmatpush1.msra.mxu0 0.0
    %1970 = vmatprep.subr.mxu0 0.0
    %1971 = vmatpush1.msra.mxu0 0.0
    %1972 = vmatprep.subr.mxu0 0.0
    %1973 = vmatpush1.msra.mxu0 0.0
    %1974 = vmatprep.subr.mxu0 0.0
    %1975 = vmatpush1.msra.mxu0 0.0
    %1976 = vmatprep.subr.mxu0 0.0
    %1977 = vmatpush1.msra.mxu0 0.0
    %1978 = vmatprep.subr.mxu0 0.0
    %1979 = vmatpush1.msra.mxu0 0.0
    %1980 = vmatprep.subr.mxu0 0.0
    %1981 = vmatpush1.msra.mxu0 0.0
    %1982 = vmatprep.subr.mxu0 0.0
    %1983 = vmatpush1.msra.mxu0 0.0
    %1984 = vmatprep.subr.mxu0 0.0
    %1985 = vmatpush1.msra.mxu0 0.0
    %1986 = vmatprep.subr.mxu0 0.0
    %1987 = vmatpush1.msra.mxu0 0.0
    %1988 = vmatprep.subr.mxu0 0.0
    %1989 = vmatpush1.msra.mxu0 0.0
    %1990 = vmatprep.subr.mxu0 %v1091
    %1991 = vmatpush1.msra.mxu0 %v1090
    %1992 = vmatprep.subr.mxu0 %v1051
    %1993 = vmatpush1.msra.mxu0 %v1050
    %1994 = vmatprep.subr.mxu0 %v1011
    %1995 = vmatpush1.msra.mxu0 %v1010
    %1996 = vmatprep.subr.mxu0 %v971
    %1997 = vmatpush1.msra.mxu0 %v970
    %1998 = vmatprep.subr.mxu0 0.0
    %1999 = vmatpush2.msra.mxu0 0.0
    %2000 = vmatprep.subr.mxu0 0.0
    %2001 = vmatpush2.msra.mxu0 0.0
    %2002 = vmatprep.subr.mxu0 0.0
    %2003 = vmatpush2.msra.mxu0 0.0
    %2004 = vmatprep.subr.mxu0 0.0
    %2005 = vmatpush2.msra.mxu0 0.0
    %2006 = vmatprep.subr.mxu0 0.0
    %2007 = vmatpush2.msra.mxu0 0.0
    %2008 = vmatprep.subr.mxu0 0.0
    %2009 = vmatpush2.msra.mxu0 0.0
    %2010 = vmatprep.subr.mxu0 0.0
    %2011 = vmatpush2.msra.mxu0 0.0
    %2012 = vmatprep.subr.mxu0 0.0
    %2013 = vmatpush2.msra.mxu0 0.0
    %2014 = vmatprep.subr.mxu0 0.0
    %2015 = vmatpush2.msra.mxu0 0.0
    %2016 = vmatprep.subr.mxu0 0.0
    %2017 = vmatpush2.msra.mxu0 0.0
    %2018 = vmatprep.subr.mxu0 0.0
    %2019 = vmatpush2.msra.mxu0 0.0
    %2020 = vmatprep.subr.mxu0 0.0
    %2021 = vmatpush2.msra.mxu0 0.0
    %2022 = vmatprep.subr.mxu0 0.0
    %2023 = vmatpush2.msra.mxu0 0.0
    %2024 = vmatprep.subr.mxu0 0.0
    %2025 = vmatpush2.msra.mxu0 0.0
    %2026 = vmatprep.subr.mxu0 0.0
    %2027 = vmatpush2.msra.mxu0 0.0
    %2028 = vmatprep.subr.mxu0 0.0
    %2029 = vmatpush2.msra.mxu0 0.0
    %2030 = vmatprep.mubr.f32.mxu0 0.0
    %2031 = vmatmul.mubr.f32.gmra.mxu0 %v1325
    %v2032 = vpop.f32.mrf.mxu0
    %v2033 = vadd.f32 %v1197, %v2032
    %v2034 = vpop.f32.mrf.mxu0
    %v2035 = vadd.f32 %v1201, %v2034
    %2036 = vdwg.mxu0
    %2037 = vmatprep.subr.mxu0 0.0
    %2038 = vmatpush1.msra.mxu0 0.0
    %2039 = vmatprep.subr.mxu0 0.0
    %2040 = vmatpush1.msra.mxu0 0.0
    %2041 = vmatprep.subr.mxu0 0.0
    %2042 = vmatpush1.msra.mxu0 0.0
    %2043 = vmatprep.subr.mxu0 0.0
    %2044 = vmatpush1.msra.mxu0 0.0
    %2045 = vmatprep.subr.mxu0 0.0
    %2046 = vmatpush1.msra.mxu0 0.0
    %2047 = vmatprep.subr.mxu0 0.0
    %2048 = vmatpush1.msra.mxu0 0.0
    %2049 = vmatprep.subr.mxu0 0.0
    %2050 = vmatpush1.msra.mxu0 0.0
    %2051 = vmatprep.subr.mxu0 0.0
    %2052 = vmatpush1.msra.mxu0 0.0
    %2053 = vmatprep.subr.mxu0 0.0
    %2054 = vmatpush1.msra.mxu0 0.0
    %2055 = vmatprep.subr.mxu0 0.0
    %2056 = vmatpush1.msra.mxu0 0.0
    %2057 = vmatprep.subr.mxu0 0.0
    %2058 = vmatpush1.msra.mxu0 0.0
    %2059 = vmatprep.subr.mxu0 0.0
    %2060 = vmatpush1.msra.mxu0 0.0
    %2061 = vmatprep.subr.mxu0 %v1093
    %2062 = vmatpush1.msra.mxu0 %v1092
    %2063 = vmatprep.subr.mxu0 %v1053
    %2064 = vmatpush1.msra.mxu0 %v1052
    %2065 = vmatprep.subr.mxu0 %v1013
    %2066 = vmatpush1.msra.mxu0 %v1012
    %2067 = vmatprep.subr.mxu0 %v973
    %2068 = vmatpush1.msra.mxu0 %v972
    %2069 = vmatprep.subr.mxu0 0.0
    %2070 = vmatpush2.msra.mxu0 0.0
    %2071 = vmatprep.subr.mxu0 0.0
    %2072 = vmatpush2.msra.mxu0 0.0
    %2073 = vmatprep.subr.mxu0 0.0
    %2074 = vmatpush2.msra.mxu0 0.0
    %2075 = vmatprep.subr.mxu0 0.0
    %2076 = vmatpush2.msra.mxu0 0.0
    %2077 = vmatprep.subr.mxu0 0.0
    %2078 = vmatpush2.msra.mxu0 0.0
    %2079 = vmatprep.subr.mxu0 0.0
    %2080 = vmatpush2.msra.mxu0 0.0
    %2081 = vmatprep.subr.mxu0 0.0
    %2082 = vmatpush2.msra.mxu0 0.0
    %2083 = vmatprep.subr.mxu0 0.0
    %2084 = vmatpush2.msra.mxu0 0.0
    %2085 = vmatprep.subr.mxu0 0.0
    %2086 = vmatpush2.msra.mxu0 0.0
    %2087 = vmatprep.subr.mxu0 0.0
    %2088 = vmatpush2.msra.mxu0 0.0
    %2089 = vmatprep.subr.mxu0 0.0
    %2090 = vmatpush2.msra.mxu0 0.0
    %2091 = vmatprep.subr.mxu0 0.0
    %2092 = vmatpush2.msra.mxu0 0.0
    %2093 = vmatprep.subr.mxu0 0.0
    %2094 = vmatpush2.msra.mxu0 0.0
    %2095 = vmatprep.subr.mxu0 0.0
    %2096 = vmatpush2.msra.mxu0 0.0
    %2097 = vmatprep.subr.mxu0 0.0
    %2098 = vmatpush2.msra.mxu0 0.0
    %2099 = vmatprep.subr.mxu0 0.0
    %2100 = vmatpush2.msra.mxu0 0.0
    %2101 = vmatprep.mubr.f32.mxu0 0.0
    %2102 = vmatmul.mubr.f32.gmra.mxu0 %v1325
    %v2103 = vpop.f32.mrf.mxu0
    %v2104 = vadd.f32 %v1205, %v2103
    %v2105 = vpop.f32.mrf.mxu0
    %v2106 = vadd.f32 %v1209, %v2105
    %2107 = vdwg.mxu0
    %2108 = vmatprep.subr.mxu0 0.0
    %2109 = vmatpush1.msra.mxu0 0.0
    %2110 = vmatprep.subr.mxu0 0.0
    %2111 = vmatpush1.msra.mxu0 0.0
    %2112 = vmatprep.subr.mxu0 0.0
    %2113 = vmatpush1.msra.mxu0 0.0
    %2114 = vmatprep.subr.mxu0 0.0
    %2115 = vmatpush1.msra.mxu0 0.0
    %2116 = vmatprep.subr.mxu0 0.0
    %2117 = vmatpush1.msra.mxu0 0.0
    %2118 = vmatprep.subr.mxu0 0.0
    %2119 = vmatpush1.msra.mxu0 0.0
    %2120 = vmatprep.subr.mxu0 0.0
    %2121 = vmatpush1.msra.mxu0 0.0
    %2122 = vmatprep.subr.mxu0 0.0
    %2123 = vmatpush1.msra.mxu0 0.0
    %2124 = vmatprep.subr.mxu0 0.0
    %2125 = vmatpush1.msra.mxu0 0.0
    %2126 = vmatprep.subr.mxu0 0.0
    %2127 = vmatpush1.msra.mxu0 0.0
    %2128 = vmatprep.subr.mxu0 0.0
    %2129 = vmatpush1.msra.mxu0 0.0
    %2130 = vmatprep.subr.mxu0 0.0
    %2131 = vmatpush1.msra.mxu0 0.0
    %2132 = vmatprep.subr.mxu0 %v1095
    %2133 = vmatpush1.msra.mxu0 %v1094
    %2134 = vmatprep.subr.mxu0 %v1055
    %2135 = vmatpush1.msra.mxu0 %v1054
    %2136 = vmatprep.subr.mxu0 %v1015
    %2137 = vmatpush1.msra.mxu0 %v1014
    %2138 = vmatprep.subr.mxu0 %v975
    %2139 = vmatpush1.msra.mxu0 %v974
    %2140 = vmatprep.subr.mxu0 0.0
    %2141 = vmatpush2.msra.mxu0 0.0
    %2142 = vmatprep.subr.mxu0 0.0
    %2143 = vmatpush2.msra.mxu0 0.0
    %2144 = vmatprep.subr.mxu0 0.0
    %2145 = vmatpush2.msra.mxu0 0.0
    %2146 = vmatprep.subr.mxu0 0.0
    %2147 = vmatpush2.msra.mxu0 0.0
    %2148 = vmatprep.subr.mxu0 0.0
    %2149 = vmatpush2.msra.mxu0 0.0
    %2150 = vmatprep.subr.mxu0 0.0
    %2151 = vmatpush2.msra.mxu0 0.0
    %2152 = vmatprep.subr.mxu0 0.0
    %2153 = vmatpush2.msra.mxu0 0.0
    %2154 = vmatprep.subr.mxu0 0.0
    %2155 = vmatpush2.msra.mxu0 0.0
    %2156 = vmatprep.subr.mxu0 0.0
    %2157 = vmatpush2.msra.mxu0 0.0
    %2158 = vmatprep.subr.mxu0 0.0
    %2159 = vmatpush2.msra.mxu0 0.0
    %2160 = vmatprep.subr.mxu0 0.0
    %2161 = vmatpush2.msra.mxu0 0.0
    %2162 = vmatprep.subr.mxu0 0.0
    %2163 = vmatpush2.msra.mxu0 0.0
    %2164 = vmatprep.subr.mxu0 0.0
    %2165 = vmatpush2.msra.mxu0 0.0
    %2166 = vmatprep.subr.mxu0 0.0
    %2167 = vmatpush2.msra.mxu0 0.0
    %2168 = vmatprep.subr.mxu0 0.0
    %2169 = vmatpush2.msra.mxu0 0.0
    %2170 = vmatprep.subr.mxu0 0.0
    %2171 = vmatpush2.msra.mxu0 0.0
    %2172 = vmatprep.mubr.f32.mxu0 0.0
    %2173 = vmatmul.mubr.f32.gmra.mxu0 %v1325
    %v2174 = vpop.f32.mrf.mxu0
    %v2175 = vadd.f32 %v1213, %v2174
    %v2176 = vpop.f32.mrf.mxu0
    %v2177 = vadd.f32 %v1217, %v2176
    %2178 = vdwg.mxu0
    %2179 = vmatprep.subr.mxu0 0.0
    %2180 = vmatpush1.msra.mxu0 0.0
    %2181 = vmatprep.subr.mxu0 0.0
    %2182 = vmatpush1.msra.mxu0 0.0
    %2183 = vmatprep.subr.mxu0 0.0
    %2184 = vmatpush1.msra.mxu0 0.0
    %2185 = vmatprep.subr.mxu0 0.0
    %2186 = vmatpush1.msra.mxu0 0.0
    %2187 = vmatprep.subr.mxu0 0.0
    %2188 = vmatpush1.msra.mxu0 0.0
    %2189 = vmatprep.subr.mxu0 0.0
    %2190 = vmatpush1.msra.mxu0 0.0
    %2191 = vmatprep.subr.mxu0 0.0
    %2192 = vmatpush1.msra.mxu0 0.0
    %2193 = vmatprep.subr.mxu0 0.0
    %2194 = vmatpush1.msra.mxu0 0.0
    %2195 = vmatprep.subr.mxu0 0.0
    %2196 = vmatpush1.msra.mxu0 0.0
    %2197 = vmatprep.subr.mxu0 0.0
    %2198 = vmatpush1.msra.mxu0 0.0
    %2199 = vmatprep.subr.mxu0 0.0
    %2200 = vmatpush1.msra.mxu0 0.0
    %2201 = vmatprep.subr.mxu0 0.0
    %2202 = vmatpush1.msra.mxu0 0.0
    %2203 = vmatprep.subr.mxu0 %v1097
    %2204 = vmatpush1.msra.mxu0 %v1096
    %2205 = vmatprep.subr.mxu0 %v1057
    %2206 = vmatpush1.msra.mxu0 %v1056
    %2207 = vmatprep.subr.mxu0 %v1017
    %2208 = vmatpush1.msra.mxu0 %v1016
    %2209 = vmatprep.subr.mxu0 %v977
    %2210 = vmatpush1.msra.mxu0 %v976
    %2211 = vmatprep.subr.mxu0 0.0
    %2212 = vmatpush2.msra.mxu0 0.0
    %2213 = vmatprep.subr.mxu0 0.0
    %2214 = vmatpush2.msra.mxu0 0.0
    %2215 = vmatprep.subr.mxu0 0.0
    %2216 = vmatpush2.msra.mxu0 0.0
    %2217 = vmatprep.subr.mxu0 0.0
    %2218 = vmatpush2.msra.mxu0 0.0
    %2219 = vmatprep.subr.mxu0 0.0
    %2220 = vmatpush2.msra.mxu0 0.0
    %2221 = vmatprep.subr.mxu0 0.0
    %2222 = vmatpush2.msra.mxu0 0.0
    %2223 = vmatprep.subr.mxu0 0.0
    %2224 = vmatpush2.msra.mxu0 0.0
    %2225 = vmatprep.subr.mxu0 0.0
    %2226 = vmatpush2.msra.mxu0 0.0
    %2227 = vmatprep.subr.mxu0 0.0
    %2228 = vmatpush2.msra.mxu0 0.0
    %2229 = vmatprep.subr.mxu0 0.0
    %2230 = vmatpush2.msra.mxu0 0.0
    %2231 = vmatprep.subr.mxu0 0.0
    %2232 = vmatpush2.msra.mxu0 0.0
    %2233 = vmatprep.subr.mxu0 0.0
    %2234 = vmatpush2.msra.mxu0 0.0
    %2235 = vmatprep.subr.mxu0 0.0
    %2236 = vmatpush2.msra.mxu0 0.0
    %2237 = vmatprep.subr.mxu0 0.0
    %2238 = vmatpush2.msra.mxu0 0.0
    %2239 = vmatprep.subr.mxu0 0.0
    %2240 = vmatpush2.msra.mxu0 0.0
    %2241 = vmatprep.subr.mxu0 0.0
    %2242 = vmatpush2.msra.mxu0 0.0
    %2243 = vmatprep.mubr.f32.mxu0 0.0
    %2244 = vmatmul.mubr.f32.gmra.mxu0 %v1325
    %v2245 = vpop.f32.mrf.mxu0
    %v2246 = vadd.f32 %v1221, %v2245
    %v2247 = vpop.f32.mrf.mxu0
    %v2248 = vadd.f32 %v1225, %v2247
    %2249 = vdwg.mxu0
    %2250 = vmatprep.subr.mxu0 0.0
    %2251 = vmatpush1.msra.mxu0 0.0
    %2252 = vmatprep.subr.mxu0 0.0
    %2253 = vmatpush1.msra.mxu0 0.0
    %2254 = vmatprep.subr.mxu0 0.0
    %2255 = vmatpush1.msra.mxu0 0.0
    %2256 = vmatprep.subr.mxu0 0.0
    %2257 = vmatpush1.msra.mxu0 0.0
    %2258 = vmatprep.subr.mxu0 0.0
    %2259 = vmatpush1.msra.mxu0 0.0
    %2260 = vmatprep.subr.mxu0 0.0
    %2261 = vmatpush1.msra.mxu0 0.0
    %2262 = vmatprep.subr.mxu0 0.0
    %2263 = vmatpush1.msra.mxu0 0.0
    %2264 = vmatprep.subr.mxu0 0.0
    %2265 = vmatpush1.msra.mxu0 0.0
    %2266 = vmatprep.subr.mxu0 0.0
    %2267 = vmatpush1.msra.mxu0 0.0
    %2268 = vmatprep.subr.mxu0 0.0
    %2269 = vmatpush1.msra.mxu0 0.0
    %2270 = vmatprep.subr.mxu0 0.0
    %2271 = vmatpush1.msra.mxu0 0.0
    %2272 = vmatprep.subr.mxu0 0.0
    %2273 = vmatpush1.msra.mxu0 0.0
    %2274 = vmatprep.subr.mxu0 %v1099
    %2275 = vmatpush1.msra.mxu0 %v1098
    %2276 = vmatprep.subr.mxu0 %v1059
    %2277 = vmatpush1.msra.mxu0 %v1058
    %2278 = vmatprep.subr.mxu0 %v1019
    %2279 = vmatpush1.msra.mxu0 %v1018
    %2280 = vmatprep.subr.mxu0 %v979
    %2281 = vmatpush1.msra.mxu0 %v978
    %2282 = vmatprep.subr.mxu0 0.0
    %2283 = vmatpush2.msra.mxu0 0.0
    %2284 = vmatprep.subr.mxu0 0.0
    %2285 = vmatpush2.msra.mxu0 0.0
    %2286 = vmatprep.subr.mxu0 0.0
    %2287 = vmatpush2.msra.mxu0 0.0
    %2288 = vmatprep.subr.mxu0 0.0
    %2289 = vmatpush2.msra.mxu0 0.0
    %2290 = vmatprep.subr.mxu0 0.0
    %2291 = vmatpush2.msra.mxu0 0.0
    %2292 = vmatprep.subr.mxu0 0.0
    %2293 = vmatpush2.msra.mxu0 0.0
    %2294 = vmatprep.subr.mxu0 0.0
    %2295 = vmatpush2.msra.mxu0 0.0
    %2296 = vmatprep.subr.mxu0 0.0
    %2297 = vmatpush2.msra.mxu0 0.0
    %2298 = vmatprep.subr.mxu0 0.0
    %2299 = vmatpush2.msra.mxu0 0.0
    %2300 = vmatprep.subr.mxu0 0.0
    %2301 = vmatpush2.msra.mxu0 0.0
    %2302 = vmatprep.subr.mxu0 0.0
    %2303 = vmatpush2.msra.mxu0 0.0
    %2304 = vmatprep.subr.mxu0 0.0
    %2305 = vmatpush2.msra.mxu0 0.0
    %2306 = vmatprep.subr.mxu0 0.0
    %2307 = vmatpush2.msra.mxu0 0.0
    %2308 = vmatprep.subr.mxu0 0.0
    %2309 = vmatpush2.msra.mxu0 0.0
    %2310 = vmatprep.subr.mxu0 0.0
    %2311 = vmatpush2.msra.mxu0 0.0
    %2312 = vmatprep.subr.mxu0 0.0
    %2313 = vmatpush2.msra.mxu0 0.0
    %2314 = vmatprep.mubr.f32.mxu0 0.0
    %2315 = vmatmul.mubr.f32.gmra.mxu0 %v1325
    %v2316 = vpop.f32.mrf.mxu0
    %v2317 = vadd.f32 %v1229, %v2316
    %v2318 = vpop.f32.mrf.mxu0
    %v2319 = vadd.f32 %v1233, %v2318
    %2320 = vdwg.mxu0
    %2321 = vmatprep.subr.mxu0 0.0
    %2322 = vmatpush1.msra.mxu0 0.0
    %2323 = vmatprep.subr.mxu0 0.0
    %2324 = vmatpush1.msra.mxu0 0.0
    %2325 = vmatprep.subr.mxu0 0.0
    %2326 = vmatpush1.msra.mxu0 0.0
    %2327 = vmatprep.subr.mxu0 0.0
    %2328 = vmatpush1.msra.mxu0 0.0
    %2329 = vmatprep.subr.mxu0 0.0
    %2330 = vmatpush1.msra.mxu0 0.0
    %2331 = vmatprep.subr.mxu0 0.0
    %2332 = vmatpush1.msra.mxu0 0.0
    %2333 = vmatprep.subr.mxu0 0.0
    %2334 = vmatpush1.msra.mxu0 0.0
    %2335 = vmatprep.subr.mxu0 0.0
    %2336 = vmatpush1.msra.mxu0 0.0
    %2337 = vmatprep.subr.mxu0 0.0
    %2338 = vmatpush1.msra.mxu0 0.0
    %2339 = vmatprep.subr.mxu0 0.0
    %2340 = vmatpush1.msra.mxu0 0.0
    %2341 = vmatprep.subr.mxu0 0.0
    %2342 = vmatpush1.msra.mxu0 0.0
    %2343 = vmatprep.subr.mxu0 0.0
    %2344 = vmatpush1.msra.mxu0 0.0
    %2345 = vmatprep.subr.mxu0 %v1101
    %2346 = vmatpush1.msra.mxu0 %v1100
    %2347 = vmatprep.subr.mxu0 %v1061
    %2348 = vmatpush1.msra.mxu0 %v1060
    %2349 = vmatprep.subr.mxu0 %v1021
    %2350 = vmatpush1.msra.mxu0 %v1020
    %2351 = vmatprep.subr.mxu0 %v981
    %2352 = vmatpush1.msra.mxu0 %v980
    %2353 = vmatprep.subr.mxu0 0.0
    %2354 = vmatpush2.msra.mxu0 0.0
    %2355 = vmatprep.subr.mxu0 0.0
    %2356 = vmatpush2.msra.mxu0 0.0
    %2357 = vmatprep.subr.mxu0 0.0
    %2358 = vmatpush2.msra.mxu0 0.0
    %2359 = vmatprep.subr.mxu0 0.0
    %2360 = vmatpush2.msra.mxu0 0.0
    %2361 = vmatprep.subr.mxu0 0.0
    %2362 = vmatpush2.msra.mxu0 0.0
    %2363 = vmatprep.subr.mxu0 0.0
    %2364 = vmatpush2.msra.mxu0 0.0
    %2365 = vmatprep.subr.mxu0 0.0
    %2366 = vmatpush2.msra.mxu0 0.0
    %2367 = vmatprep.subr.mxu0 0.0
    %2368 = vmatpush2.msra.mxu0 0.0
    %2369 = vmatprep.subr.mxu0 0.0
    %2370 = vmatpush2.msra.mxu0 0.0
    %2371 = vmatprep.subr.mxu0 0.0
    %2372 = vmatpush2.msra.mxu0 0.0
    %2373 = vmatprep.subr.mxu0 0.0
    %2374 = vmatpush2.msra.mxu0 0.0
    %2375 = vmatprep.subr.mxu0 0.0
    %2376 = vmatpush2.msra.mxu0 0.0
    %2377 = vmatprep.subr.mxu0 0.0
    %2378 = vmatpush2.msra.mxu0 0.0
    %2379 = vmatprep.subr.mxu0 0.0
    %2380 = vmatpush2.msra.mxu0 0.0
    %2381 = vmatprep.subr.mxu0 0.0
    %2382 = vmatpush2.msra.mxu0 0.0
    %2383 = vmatprep.subr.mxu0 0.0
    %2384 = vmatpush2.msra.mxu0 0.0
    %2385 = vmatprep.mubr.f32.mxu0 0.0
    %2386 = vmatmul.mubr.f32.gmra.mxu0 %v1325
    %v2387 = vpop.f32.mrf.mxu0
    %v2388 = vadd.f32 %v1237, %v2387
    %v2389 = vpop.f32.mrf.mxu0
    %v2390 = vadd.f32 %v1241, %v2389
    %2391 = vdwg.mxu0
    %2392 = vmatprep.subr.mxu0 0.0
    %2393 = vmatpush1.msra.mxu0 0.0
    %2394 = vmatprep.subr.mxu0 0.0
    %2395 = vmatpush1.msra.mxu0 0.0
    %2396 = vmatprep.subr.mxu0 0.0
    %2397 = vmatpush1.msra.mxu0 0.0
    %2398 = vmatprep.subr.mxu0 0.0
    %2399 = vmatpush1.msra.mxu0 0.0
    %2400 = vmatprep.subr.mxu0 0.0
    %2401 = vmatpush1.msra.mxu0 0.0
    %2402 = vmatprep.subr.mxu0 0.0
    %2403 = vmatpush1.msra.mxu0 0.0
    %2404 = vmatprep.subr.mxu0 0.0
    %2405 = vmatpush1.msra.mxu0 0.0
    %2406 = vmatprep.subr.mxu0 0.0
    %2407 = vmatpush1.msra.mxu0 0.0
    %2408 = vmatprep.subr.mxu0 0.0
    %2409 = vmatpush1.msra.mxu0 0.0
    %2410 = vmatprep.subr.mxu0 0.0
    %2411 = vmatpush1.msra.mxu0 0.0
    %2412 = vmatprep.subr.mxu0 0.0
    %2413 = vmatpush1.msra.mxu0 0.0
    %2414 = vmatprep.subr.mxu0 0.0
    %2415 = vmatpush1.msra.mxu0 0.0
    %2416 = vmatprep.subr.mxu0 %v1103
    %2417 = vmatpush1.msra.mxu0 %v1102
    %2418 = vmatprep.subr.mxu0 %v1063
    %2419 = vmatpush1.msra.mxu0 %v1062
    %2420 = vmatprep.subr.mxu0 %v1023
    %2421 = vmatpush1.msra.mxu0 %v1022
    %2422 = vmatprep.subr.mxu0 %v983
    %2423 = vmatpush1.msra.mxu0 %v982
    %2424 = vmatprep.subr.mxu0 0.0
    %2425 = vmatpush2.msra.mxu0 0.0
    %2426 = vmatprep.subr.mxu0 0.0
    %2427 = vmatpush2.msra.mxu0 0.0
    %2428 = vmatprep.subr.mxu0 0.0
    %2429 = vmatpush2.msra.mxu0 0.0
    %2430 = vmatprep.subr.mxu0 0.0
    %2431 = vmatpush2.msra.mxu0 0.0
    %2432 = vmatprep.subr.mxu0 0.0
    %2433 = vmatpush2.msra.mxu0 0.0
    %2434 = vmatprep.subr.mxu0 0.0
    %2435 = vmatpush2.msra.mxu0 0.0
    %2436 = vmatprep.subr.mxu0 0.0
    %2437 = vmatpush2.msra.mxu0 0.0
    %2438 = vmatprep.subr.mxu0 0.0
    %2439 = vmatpush2.msra.mxu0 0.0
    %2440 = vmatprep.subr.mxu0 0.0
    %2441 = vmatpush2.msra.mxu0 0.0
    %2442 = vmatprep.subr.mxu0 0.0
    %2443 = vmatpush2.msra.mxu0 0.0
    %2444 = vmatprep.subr.mxu0 0.0
    %2445 = vmatpush2.msra.mxu0 0.0
    %2446 = vmatprep.subr.mxu0 0.0
    %2447 = vmatpush2.msra.mxu0 0.0
    %2448 = vmatprep.subr.mxu0 0.0
    %2449 = vmatpush2.msra.mxu0 0.0
    %2450 = vmatprep.subr.mxu0 0.0
    %2451 = vmatpush2.msra.mxu0 0.0
    %2452 = vmatprep.subr.mxu0 0.0
    %2453 = vmatpush2.msra.mxu0 0.0
    %2454 = vmatprep.subr.mxu0 0.0
    %2455 = vmatpush2.msra.mxu0 0.0
    %2456 = vmatprep.mubr.f32.mxu0 0.0
    %2457 = vmatmul.mubr.f32.gmra.mxu0 %v1325
    %v2458 = vpop.f32.mrf.mxu0
    %v2459 = vadd.f32 %v1245, %v2458
    %v2460 = vpop.f32.mrf.mxu0
    %v2461 = vadd.f32 %v1249, %v2460
    %2462 = vdwg.mxu0
    %2463 = vmatprep.subr.mxu0 0.0
    %2464 = vmatpush1.msra.mxu0 0.0
    %2465 = vmatprep.subr.mxu0 0.0
    %2466 = vmatpush1.msra.mxu0 0.0
    %2467 = vmatprep.subr.mxu0 0.0
    %2468 = vmatpush1.msra.mxu0 0.0
    %2469 = vmatprep.subr.mxu0 0.0
    %2470 = vmatpush1.msra.mxu0 0.0
    %2471 = vmatprep.subr.mxu0 0.0
    %2472 = vmatpush1.msra.mxu0 0.0
    %2473 = vmatprep.subr.mxu0 0.0
    %2474 = vmatpush1.msra.mxu0 0.0
    %2475 = vmatprep.subr.mxu0 0.0
    %2476 = vmatpush1.msra.mxu0 0.0
    %2477 = vmatprep.subr.mxu0 0.0
    %2478 = vmatpush1.msra.mxu0 0.0
    %2479 = vmatprep.subr.mxu0 0.0
    %2480 = vmatpush1.msra.mxu0 0.0
    %2481 = vmatprep.subr.mxu0 0.0
    %2482 = vmatpush1.msra.mxu0 0.0
    %2483 = vmatprep.subr.mxu0 0.0
    %2484 = vmatpush1.msra.mxu0 0.0
    %2485 = vmatprep.subr.mxu0 0.0
    %2486 = vmatpush1.msra.mxu0 0.0
    %2487 = vmatprep.subr.mxu0 %v1105
    %2488 = vmatpush1.msra.mxu0 %v1104
    %2489 = vmatprep.subr.mxu0 %v1065
    %2490 = vmatpush1.msra.mxu0 %v1064
    %2491 = vmatprep.subr.mxu0 %v1025
    %2492 = vmatpush1.msra.mxu0 %v1024
    %2493 = vmatprep.subr.mxu0 %v985
    %2494 = vmatpush1.msra.mxu0 %v984
    %2495 = vmatprep.subr.mxu0 0.0
    %2496 = vmatpush2.msra.mxu0 0.0
    %2497 = vmatprep.subr.mxu0 0.0
    %2498 = vmatpush2.msra.mxu0 0.0
    %2499 = vmatprep.subr.mxu0 0.0
    %2500 = vmatpush2.msra.mxu0 0.0
    %2501 = vmatprep.subr.mxu0 0.0
    %2502 = vmatpush2.msra.mxu0 0.0
    %2503 = vmatprep.subr.mxu0 0.0
    %2504 = vmatpush2.msra.mxu0 0.0
    %2505 = vmatprep.subr.mxu0 0.0
    %2506 = vmatpush2.msra.mxu0 0.0
    %2507 = vmatprep.subr.mxu0 0.0
    %2508 = vmatpush2.msra.mxu0 0.0
    %2509 = vmatprep.subr.mxu0 0.0
    %2510 = vmatpush2.msra.mxu0 0.0
    %2511 = vmatprep.subr.mxu0 0.0
    %2512 = vmatpush2.msra.mxu0 0.0
    %2513 = vmatprep.subr.mxu0 0.0
    %2514 = vmatpush2.msra.mxu0 0.0
    %2515 = vmatprep.subr.mxu0 0.0
    %2516 = vmatpush2.msra.mxu0 0.0
    %2517 = vmatprep.subr.mxu0 0.0
    %2518 = vmatpush2.msra.mxu0 0.0
    %2519 = vmatprep.subr.mxu0 0.0
    %2520 = vmatpush2.msra.mxu0 0.0
    %2521 = vmatprep.subr.mxu0 0.0
    %2522 = vmatpush2.msra.mxu0 0.0
    %2523 = vmatprep.subr.mxu0 0.0
    %2524 = vmatpush2.msra.mxu0 0.0
    %2525 = vmatprep.subr.mxu0 0.0
    %2526 = vmatpush2.msra.mxu0 0.0
    %2527 = vmatprep.mubr.f32.mxu0 0.0
    %2528 = vmatmul.mubr.f32.gmra.mxu0 %v1325
    %v2529 = vpop.f32.mrf.mxu0
    %v2530 = vadd.f32 %v1253, %v2529
    %v2531 = vpop.f32.mrf.mxu0
    %v2532 = vadd.f32 %v1257, %v2531
    %2533 = vdwg.mxu0
    %2534 = vmatprep.subr.mxu0 0.0
    %2535 = vmatpush1.msra.mxu0 0.0
    %2536 = vmatprep.subr.mxu0 0.0
    %2537 = vmatpush1.msra.mxu0 0.0
    %2538 = vmatprep.subr.mxu0 0.0
    %2539 = vmatpush1.msra.mxu0 0.0
    %2540 = vmatprep.subr.mxu0 0.0
    %2541 = vmatpush1.msra.mxu0 0.0
    %2542 = vmatprep.subr.mxu0 0.0
    %2543 = vmatpush1.msra.mxu0 0.0
    %2544 = vmatprep.subr.mxu0 0.0
    %2545 = vmatpush1.msra.mxu0 0.0
    %2546 = vmatprep.subr.mxu0 0.0
    %2547 = vmatpush1.msra.mxu0 0.0
    %2548 = vmatprep.subr.mxu0 0.0
    %2549 = vmatpush1.msra.mxu0 0.0
    %2550 = vmatprep.subr.mxu0 0.0
    %2551 = vmatpush1.msra.mxu0 0.0
    %2552 = vmatprep.subr.mxu0 0.0
    %2553 = vmatpush1.msra.mxu0 0.0
    %2554 = vmatprep.subr.mxu0 0.0
    %2555 = vmatpush1.msra.mxu0 0.0
    %2556 = vmatprep.subr.mxu0 0.0
    %2557 = vmatpush1.msra.mxu0 0.0
    %2558 = vmatprep.subr.mxu0 %v1107
    %2559 = vmatpush1.msra.mxu0 %v1106
    %2560 = vmatprep.subr.mxu0 %v1067
    %2561 = vmatpush1.msra.mxu0 %v1066
    %2562 = vmatprep.subr.mxu0 %v1027
    %2563 = vmatpush1.msra.mxu0 %v1026
    %2564 = vmatprep.subr.mxu0 %v987
    %2565 = vmatpush1.msra.mxu0 %v986
    %2566 = vmatprep.subr.mxu0 0.0
    %2567 = vmatpush2.msra.mxu0 0.0
    %2568 = vmatprep.subr.mxu0 0.0
    %2569 = vmatpush2.msra.mxu0 0.0
    %2570 = vmatprep.subr.mxu0 0.0
    %2571 = vmatpush2.msra.mxu0 0.0
    %2572 = vmatprep.subr.mxu0 0.0
    %2573 = vmatpush2.msra.mxu0 0.0
    %2574 = vmatprep.subr.mxu0 0.0
    %2575 = vmatpush2.msra.mxu0 0.0
    %2576 = vmatprep.subr.mxu0 0.0
    %2577 = vmatpush2.msra.mxu0 0.0
    %2578 = vmatprep.subr.mxu0 0.0
    %2579 = vmatpush2.msra.mxu0 0.0
    %2580 = vmatprep.subr.mxu0 0.0
    %2581 = vmatpush2.msra.mxu0 0.0
    %2582 = vmatprep.subr.mxu0 0.0
    %2583 = vmatpush2.msra.mxu0 0.0
    %2584 = vmatprep.subr.mxu0 0.0
    %2585 = vmatpush2.msra.mxu0 0.0
    %2586 = vmatprep.subr.mxu0 0.0
    %2587 = vmatpush2.msra.mxu0 0.0
    %2588 = vmatprep.subr.mxu0 0.0
    %2589 = vmatpush2.msra.mxu0 0.0
    %2590 = vmatprep.subr.mxu0 0.0
    %2591 = vmatpush2.msra.mxu0 0.0
    %2592 = vmatprep.subr.mxu0 0.0
    %2593 = vmatpush2.msra.mxu0 0.0
    %2594 = vmatprep.subr.mxu0 0.0
    %2595 = vmatpush2.msra.mxu0 0.0
    %2596 = vmatprep.subr.mxu0 0.0
    %2597 = vmatpush2.msra.mxu0 0.0
    %2598 = vmatprep.mubr.f32.mxu0 0.0
    %2599 = vmatmul.mubr.f32.gmra.mxu0 %v1325
    %v2600 = vpop.f32.mrf.mxu0
    %v2601 = vadd.f32 %v1261, %v2600
    %v2602 = vpop.f32.mrf.mxu0
    %v2603 = vadd.f32 %v1265, %v2602
    %2604 = vdwg.mxu0
    %2605 = vmatprep.subr.mxu0 0.0
    %2606 = vmatpush1.msra.mxu0 0.0
    %2607 = vmatprep.subr.mxu0 0.0
    %2608 = vmatpush1.msra.mxu0 0.0
    %2609 = vmatprep.subr.mxu0 0.0
    %2610 = vmatpush1.msra.mxu0 0.0
    %2611 = vmatprep.subr.mxu0 0.0
    %2612 = vmatpush1.msra.mxu0 0.0
    %2613 = vmatprep.subr.mxu0 0.0
    %2614 = vmatpush1.msra.mxu0 0.0
    %2615 = vmatprep.subr.mxu0 0.0
    %2616 = vmatpush1.msra.mxu0 0.0
    %2617 = vmatprep.subr.mxu0 0.0
    %2618 = vmatpush1.msra.mxu0 0.0
    %2619 = vmatprep.subr.mxu0 0.0
    %2620 = vmatpush1.msra.mxu0 0.0
    %2621 = vmatprep.subr.mxu0 0.0
    %2622 = vmatpush1.msra.mxu0 0.0
    %2623 = vmatprep.subr.mxu0 0.0
    %2624 = vmatpush1.msra.mxu0 0.0
    %2625 = vmatprep.subr.mxu0 0.0
    %2626 = vmatpush1.msra.mxu0 0.0
    %2627 = vmatprep.subr.mxu0 0.0
    %2628 = vmatpush1.msra.mxu0 0.0
    %2629 = vmatprep.subr.mxu0 %v1109
    %2630 = vmatpush1.msra.mxu0 %v1108
    %2631 = vmatprep.subr.mxu0 %v1069
    %2632 = vmatpush1.msra.mxu0 %v1068
    %2633 = vmatprep.subr.mxu0 %v1029
    %2634 = vmatpush1.msra.mxu0 %v1028
    %2635 = vmatprep.subr.mxu0 %v989
    %2636 = vmatpush1.msra.mxu0 %v988
    %2637 = vmatprep.subr.mxu0 0.0
    %2638 = vmatpush2.msra.mxu0 0.0
    %2639 = vmatprep.subr.mxu0 0.0
    %2640 = vmatpush2.msra.mxu0 0.0
    %2641 = vmatprep.subr.mxu0 0.0
    %2642 = vmatpush2.msra.mxu0 0.0
    %2643 = vmatprep.subr.mxu0 0.0
    %2644 = vmatpush2.msra.mxu0 0.0
    %2645 = vmatprep.subr.mxu0 0.0
    %2646 = vmatpush2.msra.mxu0 0.0
    %2647 = vmatprep.subr.mxu0 0.0
    %2648 = vmatpush2.msra.mxu0 0.0
    %2649 = vmatprep.subr.mxu0 0.0
    %2650 = vmatpush2.msra.mxu0 0.0
    %2651 = vmatprep.subr.mxu0 0.0
    %2652 = vmatpush2.msra.mxu0 0.0
    %2653 = vmatprep.subr.mxu0 0.0
    %2654 = vmatpush2.msra.mxu0 0.0
    %2655 = vmatprep.subr.mxu0 0.0
    %2656 = vmatpush2.msra.mxu0 0.0
    %2657 = vmatprep.subr.mxu0 0.0
    %2658 = vmatpush2.msra.mxu0 0.0
    %2659 = vmatprep.subr.mxu0 0.0
    %2660 = vmatpush2.msra.mxu0 0.0
    %2661 = vmatprep.subr.mxu0 0.0
    %2662 = vmatpush2.msra.mxu0 0.0
    %2663 = vmatprep.subr.mxu0 0.0
    %2664 = vmatpush2.msra.mxu0 0.0
    %2665 = vmatprep.subr.mxu0 0.0
    %2666 = vmatpush2.msra.mxu0 0.0
    %2667 = vmatprep.subr.mxu0 0.0
    %2668 = vmatpush2.msra.mxu0 0.0
    %2669 = vmatprep.mubr.f32.mxu0 0.0
    %2670 = vmatmul.mubr.f32.gmra.mxu0 %v1325
    %v2671 = vpop.f32.mrf.mxu0
    %v2672 = vadd.f32 %v1269, %v2671
    %v2673 = vpop.f32.mrf.mxu0
    %v2674 = vadd.f32 %v1273, %v2673
    %2675 = vdwg.mxu0
    %2676 = vmatprep.subr.mxu0 0.0
    %2677 = vmatpush1.msra.mxu0 0.0
    %2678 = vmatprep.subr.mxu0 0.0
    %2679 = vmatpush1.msra.mxu0 0.0
    %2680 = vmatprep.subr.mxu0 0.0
    %2681 = vmatpush1.msra.mxu0 0.0
    %2682 = vmatprep.subr.mxu0 0.0
    %2683 = vmatpush1.msra.mxu0 0.0
    %2684 = vmatprep.subr.mxu0 0.0
    %2685 = vmatpush1.msra.mxu0 0.0
    %2686 = vmatprep.subr.mxu0 0.0
    %2687 = vmatpush1.msra.mxu0 0.0
    %2688 = vmatprep.subr.mxu0 0.0
    %2689 = vmatpush1.msra.mxu0 0.0
    %2690 = vmatprep.subr.mxu0 0.0
    %2691 = vmatpush1.msra.mxu0 0.0
    %2692 = vmatprep.subr.mxu0 0.0
    %2693 = vmatpush1.msra.mxu0 0.0
    %2694 = vmatprep.subr.mxu0 0.0
    %2695 = vmatpush1.msra.mxu0 0.0
    %2696 = vmatprep.subr.mxu0 0.0
    %2697 = vmatpush1.msra.mxu0 0.0
    %2698 = vmatprep.subr.mxu0 0.0
    %2699 = vmatpush1.msra.mxu0 0.0
    %2700 = vmatprep.subr.mxu0 %v1111
    %2701 = vmatpush1.msra.mxu0 %v1110
    %2702 = vmatprep.subr.mxu0 %v1071
    %2703 = vmatpush1.msra.mxu0 %v1070
    %2704 = vmatprep.subr.mxu0 %v1031
    %2705 = vmatpush1.msra.mxu0 %v1030
    %2706 = vmatprep.subr.mxu0 %v991
    %2707 = vmatpush1.msra.mxu0 %v990
    %2708 = vmatprep.subr.mxu0 0.0
    %2709 = vmatpush2.msra.mxu0 0.0
    %2710 = vmatprep.subr.mxu0 0.0
    %2711 = vmatpush2.msra.mxu0 0.0
    %2712 = vmatprep.subr.mxu0 0.0
    %2713 = vmatpush2.msra.mxu0 0.0
    %2714 = vmatprep.subr.mxu0 0.0
    %2715 = vmatpush2.msra.mxu0 0.0
    %2716 = vmatprep.subr.mxu0 0.0
    %2717 = vmatpush2.msra.mxu0 0.0
    %2718 = vmatprep.subr.mxu0 0.0
    %2719 = vmatpush2.msra.mxu0 0.0
    %2720 = vmatprep.subr.mxu0 0.0
    %2721 = vmatpush2.msra.mxu0 0.0
    %2722 = vmatprep.subr.mxu0 0.0
    %2723 = vmatpush2.msra.mxu0 0.0
    %2724 = vmatprep.subr.mxu0 0.0
    %2725 = vmatpush2.msra.mxu0 0.0
    %2726 = vmatprep.subr.mxu0 0.0
    %2727 = vmatpush2.msra.mxu0 0.0
    %2728 = vmatprep.subr.mxu0 0.0
    %2729 = vmatpush2.msra.mxu0 0.0
    %2730 = vmatprep.subr.mxu0 0.0
    %2731 = vmatpush2.msra.mxu0 0.0
    %2732 = vmatprep.subr.mxu0 0.0
    %2733 = vmatpush2.msra.mxu0 0.0
    %2734 = vmatprep.subr.mxu0 0.0
    %2735 = vmatpush2.msra.mxu0 0.0
    %2736 = vmatprep.subr.mxu0 0.0
    %2737 = vmatpush2.msra.mxu0 0.0
    %2738 = vmatprep.subr.mxu0 0.0
    %2739 = vmatpush2.msra.mxu0 0.0
    %2740 = vmatprep.mubr.f32.mxu0 0.0
    %2741 = vmatmul.mubr.f32.gmra.mxu0 %v1325
    %v2742 = vpop.f32.mrf.mxu0
    %v2743 = vadd.f32 %v1277, %v2742
    %v2744 = vpop.f32.mrf.mxu0
    %v2745 = vadd.f32 %v1281, %v2744
    %2746 = vdwg.mxu0
    %v2747 = vld [vmem:[#allocation7] sm:$0xff]
    %v2748 = vld [vmem:[#allocation8] sm:$0xff]
    %v2749 = vld [vmem:[#allocation8 + $0x8] sm:$0xff]
    %v2750 = vld [vmem:[#allocation8 + $0x10] sm:$0xff]
    %v2751 = vld [vmem:[#allocation8 + $0x18] sm:$0xff]
    %v2752 = vld [vmem:[#allocation8 + $0x20] sm:$0xff]
    %v2753 = vld [vmem:[#allocation8 + $0x28] sm:$0xff]
    %v2754 = vld [vmem:[#allocation8 + $0x30] sm:$0xff]
    %v2755 = vld [vmem:[#allocation8 + $0x38] sm:$0xff]
    %v2756 = vld [vmem:[#allocation8 + $0x40] sm:$0xff]
    %v2757 = vld [vmem:[#allocation8 + $0x48] sm:$0xff]
    %v2758 = vld [vmem:[#allocation8 + $0x50] sm:$0xff]
    %v2759 = vld [vmem:[#allocation8 + $0x58] sm:$0xff]
    %v2760 = vld [vmem:[#allocation8 + $0x60] sm:$0xff]
    %v2761 = vld [vmem:[#allocation8 + $0x68] sm:$0xff]
    %v2762 = vld [vmem:[#allocation8 + $0x70] sm:$0xff]
    %v2763 = vld [vmem:[#allocation8 + $0x78] sm:$0xff]
    %v2764 = vld [vmem:[#allocation8 + $0x80] sm:$0xff]
    %v2765 = vld [vmem:[#allocation8 + $0x88] sm:$0xff]
    %v2766 = vld [vmem:[#allocation8 + $0x90] sm:$0xff]
    %v2767 = vld [vmem:[#allocation8 + $0x98] sm:$0xff]
    %v2768 = vld [vmem:[#allocation8 + $0xa0] sm:$0xff]
    %v2769 = vld [vmem:[#allocation8 + $0xa8] sm:$0xff]
    %v2770 = vld [vmem:[#allocation8 + $0xb0] sm:$0xff]
    %v2771 = vld [vmem:[#allocation8 + $0xb8] sm:$0xff]
    %v2772 = vld [vmem:[#allocation8 + $0xc0] sm:$0xff]
    %v2773 = vld [vmem:[#allocation8 + $0xc8] sm:$0xff]
    %v2774 = vld [vmem:[#allocation8 + $0xd0] sm:$0xff]
    %v2775 = vld [vmem:[#allocation8 + $0xd8] sm:$0xff]
    %v2776 = vld [vmem:[#allocation8 + $0xe0] sm:$0xff]
    %v2777 = vld [vmem:[#allocation8 + $0xe8] sm:$0xff]
    %v2778 = vld [vmem:[#allocation8 + $0xf0] sm:$0xff]
    %v2779 = vld [vmem:[#allocation8 + $0xf8] sm:$0xff]
    %v2780 = vld [vmem:[#allocation8 + $0x100] sm:$0xff]
    %v2781 = vld [vmem:[#allocation8 + $0x108] sm:$0xff]
    %v2782 = vld [vmem:[#allocation8 + $0x110] sm:$0xff]
    %v2783 = vld [vmem:[#allocation8 + $0x118] sm:$0xff]
    %v2784 = vld [vmem:[#allocation8 + $0x120] sm:$0xff]
    %v2785 = vld [vmem:[#allocation8 + $0x128] sm:$0xff]
    %v2786 = vld [vmem:[#allocation8 + $0x130] sm:$0xff]
    %v2787 = vld [vmem:[#allocation8 + $0x138] sm:$0xff]
    %v2788 = vld [vmem:[#allocation10] sm:$0xff]
    %v2789 = vld [vmem:[#allocation10 + $0x8] sm:$0xff]
    %v2790 = vld [vmem:[#allocation10 + $0x10] sm:$0xff]
    %v2791 = vld [vmem:[#allocation10 + $0x18] sm:$0xff]
    %v2792 = vld [vmem:[#allocation10 + $0x20] sm:$0xff]
    %v2798 = vlaneseq
    %v2799 = vshrl.u32 %v2798, 7
    %v2800 = vsub.s32 0, %v2799
    %v2801 = vrot.slane %v2788, %v2800
    %v2802 = vlaneseq
    %v2803 = vshrl.u32 %v2802, 7
    %v2804 = vsub.s32 1, %v2803
    %v2805 = vrot.slane %v2788, %v2804
    %v2806 = vlaneseq
    %v2807 = vshrl.u32 %v2806, 7
    %v2808 = vsub.s32 2, %v2807
    %v2809 = vrot.slane %v2788, %v2808
    %v2810 = vlaneseq
    %v2811 = vshrl.u32 %v2810, 7
    %v2812 = vsub.s32 3, %v2811
    %v2813 = vrot.slane %v2788, %v2812
    %v2814 = vlaneseq
    %v2815 = vshrl.u32 %v2814, 7
    %v2816 = vsub.s32 4, %v2815
    %v2817 = vrot.slane %v2788, %v2816
    %v2818 = vlaneseq
    %v2819 = vshrl.u32 %v2818, 7
    %v2820 = vsub.s32 5, %v2819
    %v2821 = vrot.slane %v2788, %v2820
    %v2822 = vlaneseq
    %v2823 = vshrl.u32 %v2822, 7
    %v2824 = vsub.s32 6, %v2823
    %v2825 = vrot.slane %v2788, %v2824
    %v2826 = vlaneseq
    %v2827 = vshrl.u32 %v2826, 7
    %v2828 = vsub.s32 7, %v2827
    %v2829 = vrot.slane %v2788, %v2828
    %v2830 = vlaneseq
    %v2831 = vshrl.u32 %v2830, 7
    %v2832 = vsub.s32 0, %v2831
    %v2833 = vrot.slane %v2789, %v2832
    %v2834 = vlaneseq
    %v2835 = vshrl.u32 %v2834, 7
    %v2836 = vsub.s32 1, %v2835
    %v2837 = vrot.slane %v2789, %v2836
    %v2838 = vlaneseq
    %v2839 = vshrl.u32 %v2838, 7
    %v2840 = vsub.s32 2, %v2839
    %v2841 = vrot.slane %v2789, %v2840
    %v2842 = vlaneseq
    %v2843 = vshrl.u32 %v2842, 7
    %v2844 = vsub.s32 3, %v2843
    %v2845 = vrot.slane %v2789, %v2844
    %v2846 = vlaneseq
    %v2847 = vshrl.u32 %v2846, 7
    %v2848 = vsub.s32 4, %v2847
    %v2849 = vrot.slane %v2789, %v2848
    %v2850 = vlaneseq
    %v2851 = vshrl.u32 %v2850, 7
    %v2852 = vsub.s32 5, %v2851
    %v2853 = vrot.slane %v2789, %v2852
    %v2854 = vlaneseq
    %v2855 = vshrl.u32 %v2854, 7
    %v2856 = vsub.s32 6, %v2855
    %v2857 = vrot.slane %v2789, %v2856
    %v2858 = vlaneseq
    %v2859 = vshrl.u32 %v2858, 7
    %v2860 = vsub.s32 7, %v2859
    %v2861 = vrot.slane %v2789, %v2860
    %v2862 = vlaneseq
    %v2863 = vshrl.u32 %v2862, 7
    %v2864 = vsub.s32 0, %v2863
    %v2865 = vrot.slane %v2790, %v2864
    %v2866 = vlaneseq
    %v2867 = vshrl.u32 %v2866, 7
    %v2868 = vsub.s32 1, %v2867
    %v2869 = vrot.slane %v2790, %v2868
    %v2870 = vlaneseq
    %v2871 = vshrl.u32 %v2870, 7
    %v2872 = vsub.s32 2, %v2871
    %v2873 = vrot.slane %v2790, %v2872
    %v2874 = vlaneseq
    %v2875 = vshrl.u32 %v2874, 7
    %v2876 = vsub.s32 3, %v2875
    %v2877 = vrot.slane %v2790, %v2876
    %v2878 = vlaneseq
    %v2879 = vshrl.u32 %v2878, 7
    %v2880 = vsub.s32 4, %v2879
    %v2881 = vrot.slane %v2790, %v2880
    %v2882 = vlaneseq
    %v2883 = vshrl.u32 %v2882, 7
    %v2884 = vsub.s32 5, %v2883
    %v2885 = vrot.slane %v2790, %v2884
    %v2886 = vlaneseq
    %v2887 = vshrl.u32 %v2886, 7
    %v2888 = vsub.s32 6, %v2887
    %v2889 = vrot.slane %v2790, %v2888
    %v2890 = vlaneseq
    %v2891 = vshrl.u32 %v2890, 7
    %v2892 = vsub.s32 7, %v2891
    %v2893 = vrot.slane %v2790, %v2892
    %v2894 = vlaneseq
    %v2895 = vshrl.u32 %v2894, 7
    %v2896 = vsub.s32 0, %v2895
    %v2897 = vrot.slane %v2791, %v2896
    %v2898 = vlaneseq
    %v2899 = vshrl.u32 %v2898, 7
    %v2900 = vsub.s32 1, %v2899
    %v2901 = vrot.slane %v2791, %v2900
    %v2902 = vlaneseq
    %v2903 = vshrl.u32 %v2902, 7
    %v2904 = vsub.s32 2, %v2903
    %v2905 = vrot.slane %v2791, %v2904
    %v2906 = vlaneseq
    %v2907 = vshrl.u32 %v2906, 7
    %v2908 = vsub.s32 3, %v2907
    %v2909 = vrot.slane %v2791, %v2908
    %v2910 = vlaneseq
    %v2911 = vshrl.u32 %v2910, 7
    %v2912 = vsub.s32 4, %v2911
    %v2913 = vrot.slane %v2791, %v2912
    %v2914 = vlaneseq
    %v2915 = vshrl.u32 %v2914, 7
    %v2916 = vsub.s32 5, %v2915
    %v2917 = vrot.slane %v2791, %v2916
    %v2918 = vlaneseq
    %v2919 = vshrl.u32 %v2918, 7
    %v2920 = vsub.s32 6, %v2919
    %v2921 = vrot.slane %v2791, %v2920
    %v2922 = vlaneseq
    %v2923 = vshrl.u32 %v2922, 7
    %v2924 = vsub.s32 7, %v2923
    %v2925 = vrot.slane %v2791, %v2924
    %v2926 = vlaneseq
    %v2927 = vshrl.u32 %v2926, 7
    %v2928 = vsub.s32 0, %v2927
    %v2929 = vrot.slane %v2792, %v2928
    %v2930 = vlaneseq
    %v2931 = vshrl.u32 %v2930, 7
    %v2932 = vsub.s32 1, %v2931
    %v2933 = vrot.slane %v2792, %v2932
    %v2934 = vlaneseq
    %v2935 = vshrl.u32 %v2934, 7
    %v2936 = vsub.s32 2, %v2935
    %v2937 = vrot.slane %v2792, %v2936
    %v2938 = vlaneseq
    %v2939 = vshrl.u32 %v2938, 7
    %v2940 = vsub.s32 3, %v2939
    %v2941 = vrot.slane %v2792, %v2940
    %v2942 = vlaneseq
    %v2943 = vshrl.u32 %v2942, 7
    %v2944 = vsub.s32 4, %v2943
    %v2945 = vrot.slane %v2792, %v2944
    %v2946 = vlaneseq
    %v2947 = vshrl.u32 %v2946, 7
    %v2948 = vsub.s32 5, %v2947
    %v2949 = vrot.slane %v2792, %v2948
    %v2950 = vlaneseq
    %v2951 = vshrl.u32 %v2950, 7
    %v2952 = vsub.s32 6, %v2951
    %v2953 = vrot.slane %v2792, %v2952
    %v2954 = vlaneseq
    %v2955 = vshrl.u32 %v2954, 7
    %v2956 = vsub.s32 7, %v2955
    %v2957 = vrot.slane %v2792, %v2956
    %vm2998 = vcmask 64512
    %v3000 = vsel %vm2998, %v2747, 0
    %3002 = vmatprep.subr.mxu0 0.0
    %3003 = vmatpush1.msra.mxu0 0.0
    %3004 = vmatprep.subr.mxu0 0.0
    %3005 = vmatpush1.msra.mxu0 0.0
    %3006 = vmatprep.subr.mxu0 0.0
    %3007 = vmatpush1.msra.mxu0 0.0
    %3008 = vmatprep.subr.mxu0 0.0
    %3009 = vmatpush1.msra.mxu0 0.0
    %3010 = vmatprep.subr.mxu0 0.0
    %3011 = vmatpush1.msra.mxu0 0.0
    %3012 = vmatprep.subr.mxu0 0.0
    %3013 = vmatpush1.msra.mxu0 0.0
    %3014 = vmatprep.subr.mxu0 0.0
    %3015 = vmatpush1.msra.mxu0 0.0
    %3016 = vmatprep.subr.mxu0 0.0
    %3017 = vmatpush1.msra.mxu0 0.0
    %3018 = vmatprep.subr.mxu0 0.0
    %3019 = vmatpush1.msra.mxu0 0.0
    %3020 = vmatprep.subr.mxu0 0.0
    %3021 = vmatpush1.msra.mxu0 0.0
    %3022 = vmatprep.subr.mxu0 0.0
    %3023 = vmatpush1.msra.mxu0 0.0
    %3024 = vmatprep.subr.mxu0 0.0
    %3025 = vmatpush1.msra.mxu0 0.0
    %3026 = vmatprep.subr.mxu0 0.0
    %3027 = vmatpush1.msra.mxu0 0.0
    %3028 = vmatprep.subr.mxu0 0.0
    %3029 = vmatpush1.msra.mxu0 0.0
    %3030 = vmatprep.subr.mxu0 0.0
    %3031 = vmatpush1.msra.mxu0 0.0
    %3032 = vmatprep.subr.mxu0 %v2749
    %3033 = vmatpush1.msra.mxu0 %v2748
    %3034 = vmatprep.subr.mxu0 0.0
    %3035 = vmatpush2.msra.mxu0 0.0
    %3036 = vmatprep.subr.mxu0 0.0
    %3037 = vmatpush2.msra.mxu0 0.0
    %3038 = vmatprep.subr.mxu0 0.0
    %3039 = vmatpush2.msra.mxu0 0.0
    %3040 = vmatprep.subr.mxu0 0.0
    %3041 = vmatpush2.msra.mxu0 0.0
    %3042 = vmatprep.subr.mxu0 0.0
    %3043 = vmatpush2.msra.mxu0 0.0
    %3044 = vmatprep.subr.mxu0 0.0
    %3045 = vmatpush2.msra.mxu0 0.0
    %3046 = vmatprep.subr.mxu0 0.0
    %3047 = vmatpush2.msra.mxu0 0.0
    %3048 = vmatprep.subr.mxu0 0.0
    %3049 = vmatpush2.msra.mxu0 0.0
    %3050 = vmatprep.subr.mxu0 0.0
    %3051 = vmatpush2.msra.mxu0 0.0
    %3052 = vmatprep.subr.mxu0 0.0
    %3053 = vmatpush2.msra.mxu0 0.0
    %3054 = vmatprep.subr.mxu0 0.0
    %3055 = vmatpush2.msra.mxu0 0.0
    %3056 = vmatprep.subr.mxu0 0.0
    %3057 = vmatpush2.msra.mxu0 0.0
    %3058 = vmatprep.subr.mxu0 0.0
    %3059 = vmatpush2.msra.mxu0 0.0
    %3060 = vmatprep.subr.mxu0 0.0
    %3061 = vmatpush2.msra.mxu0 0.0
    %3062 = vmatprep.subr.mxu0 0.0
    %3063 = vmatpush2.msra.mxu0 0.0
    %3064 = vmatprep.subr.mxu0 0.0
    %3065 = vmatpush2.msra.mxu0 0.0
    %3066 = vmatprep.mubr.f32.mxu0 0.0
    %3067 = vmatmul.mubr.f32.gmra.mxu0 %v3000
    %v3068 = vpop.f32.mrf.mxu0
    %v3069 = vadd.f32 %v2801, %v3068
    %v3070 = vpop.f32.mrf.mxu0
    %v3071 = vadd.f32 %v2805, %v3070
    %3072 = vdwg.mxu0
    %3073 = vmatprep.subr.mxu0 0.0
    %3074 = vmatpush1.msra.mxu0 0.0
    %3075 = vmatprep.subr.mxu0 0.0
    %3076 = vmatpush1.msra.mxu0 0.0
    %3077 = vmatprep.subr.mxu0 0.0
    %3078 = vmatpush1.msra.mxu0 0.0
    %3079 = vmatprep.subr.mxu0 0.0
    %3080 = vmatpush1.msra.mxu0 0.0
    %3081 = vmatprep.subr.mxu0 0.0
    %3082 = vmatpush1.msra.mxu0 0.0
    %3083 = vmatprep.subr.mxu0 0.0
    %3084 = vmatpush1.msra.mxu0 0.0
    %3085 = vmatprep.subr.mxu0 0.0
    %3086 = vmatpush1.msra.mxu0 0.0
    %3087 = vmatprep.subr.mxu0 0.0
    %3088 = vmatpush1.msra.mxu0 0.0
    %3089 = vmatprep.subr.mxu0 0.0
    %3090 = vmatpush1.msra.mxu0 0.0
    %3091 = vmatprep.subr.mxu0 0.0
    %3092 = vmatpush1.msra.mxu0 0.0
    %3093 = vmatprep.subr.mxu0 0.0
    %3094 = vmatpush1.msra.mxu0 0.0
    %3095 = vmatprep.subr.mxu0 0.0
    %3096 = vmatpush1.msra.mxu0 0.0
    %3097 = vmatprep.subr.mxu0 0.0
    %3098 = vmatpush1.msra.mxu0 0.0
    %3099 = vmatprep.subr.mxu0 0.0
    %3100 = vmatpush1.msra.mxu0 0.0
    %3101 = vmatprep.subr.mxu0 0.0
    %3102 = vmatpush1.msra.mxu0 0.0
    %3103 = vmatprep.subr.mxu0 %v2751
    %3104 = vmatpush1.msra.mxu0 %v2750
    %3105 = vmatprep.subr.mxu0 0.0
    %3106 = vmatpush2.msra.mxu0 0.0
    %3107 = vmatprep.subr.mxu0 0.0
    %3108 = vmatpush2.msra.mxu0 0.0
    %3109 = vmatprep.subr.mxu0 0.0
    %3110 = vmatpush2.msra.mxu0 0.0
    %3111 = vmatprep.subr.mxu0 0.0
    %3112 = vmatpush2.msra.mxu0 0.0
    %3113 = vmatprep.subr.mxu0 0.0
    %3114 = vmatpush2.msra.mxu0 0.0
    %3115 = vmatprep.subr.mxu0 0.0
    %3116 = vmatpush2.msra.mxu0 0.0
    %3117 = vmatprep.subr.mxu0 0.0
    %3118 = vmatpush2.msra.mxu0 0.0
    %3119 = vmatprep.subr.mxu0 0.0
    %3120 = vmatpush2.msra.mxu0 0.0
    %3121 = vmatprep.subr.mxu0 0.0
    %3122 = vmatpush2.msra.mxu0 0.0
    %3123 = vmatprep.subr.mxu0 0.0
    %3124 = vmatpush2.msra.mxu0 0.0
    %3125 = vmatprep.subr.mxu0 0.0
    %3126 = vmatpush2.msra.mxu0 0.0
    %3127 = vmatprep.subr.mxu0 0.0
    %3128 = vmatpush2.msra.mxu0 0.0
    %3129 = vmatprep.subr.mxu0 0.0
    %3130 = vmatpush2.msra.mxu0 0.0
    %3131 = vmatprep.subr.mxu0 0.0
    %3132 = vmatpush2.msra.mxu0 0.0
    %3133 = vmatprep.subr.mxu0 0.0
    %3134 = vmatpush2.msra.mxu0 0.0
    %3135 = vmatprep.subr.mxu0 0.0
    %3136 = vmatpush2.msra.mxu0 0.0
    %3137 = vmatprep.mubr.f32.mxu0 0.0
    %3138 = vmatmul.mubr.f32.gmra.mxu0 %v3000
    %v3139 = vpop.f32.mrf.mxu0
    %v3140 = vadd.f32 %v2809, %v3139
    %v3141 = vpop.f32.mrf.mxu0
    %v3142 = vadd.f32 %v2813, %v3141
    %3143 = vdwg.mxu0
    %3144 = vmatprep.subr.mxu0 0.0
    %3145 = vmatpush1.msra.mxu0 0.0
    %3146 = vmatprep.subr.mxu0 0.0
    %3147 = vmatpush1.msra.mxu0 0.0
    %3148 = vmatprep.subr.mxu0 0.0
    %3149 = vmatpush1.msra.mxu0 0.0
    %3150 = vmatprep.subr.mxu0 0.0
    %3151 = vmatpush1.msra.mxu0 0.0
    %3152 = vmatprep.subr.mxu0 0.0
    %3153 = vmatpush1.msra.mxu0 0.0
    %3154 = vmatprep.subr.mxu0 0.0
    %3155 = vmatpush1.msra.mxu0 0.0
    %3156 = vmatprep.subr.mxu0 0.0
    %3157 = vmatpush1.msra.mxu0 0.0
    %3158 = vmatprep.subr.mxu0 0.0
    %3159 = vmatpush1.msra.mxu0 0.0
    %3160 = vmatprep.subr.mxu0 0.0
    %3161 = vmatpush1.msra.mxu0 0.0
    %3162 = vmatprep.subr.mxu0 0.0
    %3163 = vmatpush1.msra.mxu0 0.0
    %3164 = vmatprep.subr.mxu0 0.0
    %3165 = vmatpush1.msra.mxu0 0.0
    %3166 = vmatprep.subr.mxu0 0.0
    %3167 = vmatpush1.msra.mxu0 0.0
    %3168 = vmatprep.subr.mxu0 0.0
    %3169 = vmatpush1.msra.mxu0 0.0
    %3170 = vmatprep.subr.mxu0 0.0
    %3171 = vmatpush1.msra.mxu0 0.0
    %3172 = vmatprep.subr.mxu0 0.0
    %3173 = vmatpush1.msra.mxu0 0.0
    %3174 = vmatprep.subr.mxu0 %v2753
    %3175 = vmatpush1.msra.mxu0 %v2752
    %3176 = vmatprep.subr.mxu0 0.0
    %3177 = vmatpush2.msra.mxu0 0.0
    %3178 = vmatprep.subr.mxu0 0.0
    %3179 = vmatpush2.msra.mxu0 0.0
    %3180 = vmatprep.subr.mxu0 0.0
    %3181 = vmatpush2.msra.mxu0 0.0
    %3182 = vmatprep.subr.mxu0 0.0
    %3183 = vmatpush2.msra.mxu0 0.0
    %3184 = vmatprep.subr.mxu0 0.0
    %3185 = vmatpush2.msra.mxu0 0.0
    %3186 = vmatprep.subr.mxu0 0.0
    %3187 = vmatpush2.msra.mxu0 0.0
    %3188 = vmatprep.subr.mxu0 0.0
    %3189 = vmatpush2.msra.mxu0 0.0
    %3190 = vmatprep.subr.mxu0 0.0
    %3191 = vmatpush2.msra.mxu0 0.0
    %3192 = vmatprep.subr.mxu0 0.0
    %3193 = vmatpush2.msra.mxu0 0.0
    %3194 = vmatprep.subr.mxu0 0.0
    %3195 = vmatpush2.msra.mxu0 0.0
    %3196 = vmatprep.subr.mxu0 0.0
    %3197 = vmatpush2.msra.mxu0 0.0
    %3198 = vmatprep.subr.mxu0 0.0
    %3199 = vmatpush2.msra.mxu0 0.0
    %3200 = vmatprep.subr.mxu0 0.0
    %3201 = vmatpush2.msra.mxu0 0.0
    %3202 = vmatprep.subr.mxu0 0.0
    %3203 = vmatpush2.msra.mxu0 0.0
    %3204 = vmatprep.subr.mxu0 0.0
    %3205 = vmatpush2.msra.mxu0 0.0
    %3206 = vmatprep.subr.mxu0 0.0
    %3207 = vmatpush2.msra.mxu0 0.0
    %3208 = vmatprep.mubr.f32.mxu0 0.0
    %3209 = vmatmul.mubr.f32.gmra.mxu0 %v3000
    %v3210 = vpop.f32.mrf.mxu0
    %v3211 = vadd.f32 %v2817, %v3210
    %v3212 = vpop.f32.mrf.mxu0
    %v3213 = vadd.f32 %v2821, %v3212
    %3214 = vdwg.mxu0
    %3215 = vmatprep.subr.mxu0 0.0
    %3216 = vmatpush1.msra.mxu0 0.0
    %3217 = vmatprep.subr.mxu0 0.0
    %3218 = vmatpush1.msra.mxu0 0.0
    %3219 = vmatprep.subr.mxu0 0.0
    %3220 = vmatpush1.msra.mxu0 0.0
    %3221 = vmatprep.subr.mxu0 0.0
    %3222 = vmatpush1.msra.mxu0 0.0
    %3223 = vmatprep.subr.mxu0 0.0
    %3224 = vmatpush1.msra.mxu0 0.0
    %3225 = vmatprep.subr.mxu0 0.0
    %3226 = vmatpush1.msra.mxu0 0.0
    %3227 = vmatprep.subr.mxu0 0.0
    %3228 = vmatpush1.msra.mxu0 0.0
    %3229 = vmatprep.subr.mxu0 0.0
    %3230 = vmatpush1.msra.mxu0 0.0
    %3231 = vmatprep.subr.mxu0 0.0
    %3232 = vmatpush1.msra.mxu0 0.0
    %3233 = vmatprep.subr.mxu0 0.0
    %3234 = vmatpush1.msra.mxu0 0.0
    %3235 = vmatprep.subr.mxu0 0.0
    %3236 = vmatpush1.msra.mxu0 0.0
    %3237 = vmatprep.subr.mxu0 0.0
    %3238 = vmatpush1.msra.mxu0 0.0
    %3239 = vmatprep.subr.mxu0 0.0
    %3240 = vmatpush1.msra.mxu0 0.0
    %3241 = vmatprep.subr.mxu0 0.0
    %3242 = vmatpush1.msra.mxu0 0.0
    %3243 = vmatprep.subr.mxu0 0.0
    %3244 = vmatpush1.msra.mxu0 0.0
    %3245 = vmatprep.subr.mxu0 %v2755
    %3246 = vmatpush1.msra.mxu0 %v2754
    %3247 = vmatprep.subr.mxu0 0.0
    %3248 = vmatpush2.msra.mxu0 0.0
    %3249 = vmatprep.subr.mxu0 0.0
    %3250 = vmatpush2.msra.mxu0 0.0
    %3251 = vmatprep.subr.mxu0 0.0
    %3252 = vmatpush2.msra.mxu0 0.0
    %3253 = vmatprep.subr.mxu0 0.0
    %3254 = vmatpush2.msra.mxu0 0.0
    %3255 = vmatprep.subr.mxu0 0.0
    %3256 = vmatpush2.msra.mxu0 0.0
    %3257 = vmatprep.subr.mxu0 0.0
    %3258 = vmatpush2.msra.mxu0 0.0
    %3259 = vmatprep.subr.mxu0 0.0
    %3260 = vmatpush2.msra.mxu0 0.0
    %3261 = vmatprep.subr.mxu0 0.0
    %3262 = vmatpush2.msra.mxu0 0.0
    %3263 = vmatprep.subr.mxu0 0.0
    %3264 = vmatpush2.msra.mxu0 0.0
    %3265 = vmatprep.subr.mxu0 0.0
    %3266 = vmatpush2.msra.mxu0 0.0
    %3267 = vmatprep.subr.mxu0 0.0
    %3268 = vmatpush2.msra.mxu0 0.0
    %3269 = vmatprep.subr.mxu0 0.0
    %3270 = vmatpush2.msra.mxu0 0.0
    %3271 = vmatprep.subr.mxu0 0.0
    %3272 = vmatpush2.msra.mxu0 0.0
    %3273 = vmatprep.subr.mxu0 0.0
    %3274 = vmatpush2.msra.mxu0 0.0
    %3275 = vmatprep.subr.mxu0 0.0
    %3276 = vmatpush2.msra.mxu0 0.0
    %3277 = vmatprep.subr.mxu0 0.0
    %3278 = vmatpush2.msra.mxu0 0.0
    %3279 = vmatprep.mubr.f32.mxu0 0.0
    %3280 = vmatmul.mubr.f32.gmra.mxu0 %v3000
    %v3281 = vpop.f32.mrf.mxu0
    %v3282 = vadd.f32 %v2825, %v3281
    %v3283 = vpop.f32.mrf.mxu0
    %v3284 = vadd.f32 %v2829, %v3283
    %3285 = vdwg.mxu0
    %3286 = vmatprep.subr.mxu0 0.0
    %3287 = vmatpush1.msra.mxu0 0.0
    %3288 = vmatprep.subr.mxu0 0.0
    %3289 = vmatpush1.msra.mxu0 0.0
    %3290 = vmatprep.subr.mxu0 0.0
    %3291 = vmatpush1.msra.mxu0 0.0
    %3292 = vmatprep.subr.mxu0 0.0
    %3293 = vmatpush1.msra.mxu0 0.0
    %3294 = vmatprep.subr.mxu0 0.0
    %3295 = vmatpush1.msra.mxu0 0.0
    %3296 = vmatprep.subr.mxu0 0.0
    %3297 = vmatpush1.msra.mxu0 0.0
    %3298 = vmatprep.subr.mxu0 0.0
    %3299 = vmatpush1.msra.mxu0 0.0
    %3300 = vmatprep.subr.mxu0 0.0
    %3301 = vmatpush1.msra.mxu0 0.0
    %3302 = vmatprep.subr.mxu0 0.0
    %3303 = vmatpush1.msra.mxu0 0.0
    %3304 = vmatprep.subr.mxu0 0.0
    %3305 = vmatpush1.msra.mxu0 0.0
    %3306 = vmatprep.subr.mxu0 0.0
    %3307 = vmatpush1.msra.mxu0 0.0
    %3308 = vmatprep.subr.mxu0 0.0
    %3309 = vmatpush1.msra.mxu0 0.0
    %3310 = vmatprep.subr.mxu0 0.0
    %3311 = vmatpush1.msra.mxu0 0.0
    %3312 = vmatprep.subr.mxu0 0.0
    %3313 = vmatpush1.msra.mxu0 0.0
    %3314 = vmatprep.subr.mxu0 0.0
    %3315 = vmatpush1.msra.mxu0 0.0
    %3316 = vmatprep.subr.mxu0 %v2757
    %3317 = vmatpush1.msra.mxu0 %v2756
    %3318 = vmatprep.subr.mxu0 0.0
    %3319 = vmatpush2.msra.mxu0 0.0
    %3320 = vmatprep.subr.mxu0 0.0
    %3321 = vmatpush2.msra.mxu0 0.0
    %3322 = vmatprep.subr.mxu0 0.0
    %3323 = vmatpush2.msra.mxu0 0.0
    %3324 = vmatprep.subr.mxu0 0.0
    %3325 = vmatpush2.msra.mxu0 0.0
    %3326 = vmatprep.subr.mxu0 0.0
    %3327 = vmatpush2.msra.mxu0 0.0
    %3328 = vmatprep.subr.mxu0 0.0
    %3329 = vmatpush2.msra.mxu0 0.0
    %3330 = vmatprep.subr.mxu0 0.0
    %3331 = vmatpush2.msra.mxu0 0.0
    %3332 = vmatprep.subr.mxu0 0.0
    %3333 = vmatpush2.msra.mxu0 0.0
    %3334 = vmatprep.subr.mxu0 0.0
    %3335 = vmatpush2.msra.mxu0 0.0
    %3336 = vmatprep.subr.mxu0 0.0
    %3337 = vmatpush2.msra.mxu0 0.0
    %3338 = vmatprep.subr.mxu0 0.0
    %3339 = vmatpush2.msra.mxu0 0.0
    %3340 = vmatprep.subr.mxu0 0.0
    %3341 = vmatpush2.msra.mxu0 0.0
    %3342 = vmatprep.subr.mxu0 0.0
    %3343 = vmatpush2.msra.mxu0 0.0
    %3344 = vmatprep.subr.mxu0 0.0
    %3345 = vmatpush2.msra.mxu0 0.0
    %3346 = vmatprep.subr.mxu0 0.0
    %3347 = vmatpush2.msra.mxu0 0.0
    %3348 = vmatprep.subr.mxu0 0.0
    %3349 = vmatpush2.msra.mxu0 0.0
    %3350 = vmatprep.mubr.f32.mxu0 0.0
    %3351 = vmatmul.mubr.f32.gmra.mxu0 %v3000
    %v3352 = vpop.f32.mrf.mxu0
    %v3353 = vadd.f32 %v2833, %v3352
    %v3354 = vpop.f32.mrf.mxu0
    %v3355 = vadd.f32 %v2837, %v3354
    %3356 = vdwg.mxu0
    %3357 = vmatprep.subr.mxu0 0.0
    %3358 = vmatpush1.msra.mxu0 0.0
    %3359 = vmatprep.subr.mxu0 0.0
    %3360 = vmatpush1.msra.mxu0 0.0
    %3361 = vmatprep.subr.mxu0 0.0
    %3362 = vmatpush1.msra.mxu0 0.0
    %3363 = vmatprep.subr.mxu0 0.0
    %3364 = vmatpush1.msra.mxu0 0.0
    %3365 = vmatprep.subr.mxu0 0.0
    %3366 = vmatpush1.msra.mxu0 0.0
    %3367 = vmatprep.subr.mxu0 0.0
    %3368 = vmatpush1.msra.mxu0 0.0
    %3369 = vmatprep.subr.mxu0 0.0
    %3370 = vmatpush1.msra.mxu0 0.0
    %3371 = vmatprep.subr.mxu0 0.0
    %3372 = vmatpush1.msra.mxu0 0.0
    %3373 = vmatprep.subr.mxu0 0.0
    %3374 = vmatpush1.msra.mxu0 0.0
    %3375 = vmatprep.subr.mxu0 0.0
    %3376 = vmatpush1.msra.mxu0 0.0
    %3377 = vmatprep.subr.mxu0 0.0
    %3378 = vmatpush1.msra.mxu0 0.0
    %3379 = vmatprep.subr.mxu0 0.0
    %3380 = vmatpush1.msra.mxu0 0.0
    %3381 = vmatprep.subr.mxu0 0.0
    %3382 = vmatpush1.msra.mxu0 0.0
    %3383 = vmatprep.subr.mxu0 0.0
    %3384 = vmatpush1.msra.mxu0 0.0
    %3385 = vmatprep.subr.mxu0 0.0
    %3386 = vmatpush1.msra.mxu0 0.0
    %3387 = vmatprep.subr.mxu0 %v2759
    %3388 = vmatpush1.msra.mxu0 %v2758
    %3389 = vmatprep.subr.mxu0 0.0
    %3390 = vmatpush2.msra.mxu0 0.0
    %3391 = vmatprep.subr.mxu0 0.0
    %3392 = vmatpush2.msra.mxu0 0.0
    %3393 = vmatprep.subr.mxu0 0.0
    %3394 = vmatpush2.msra.mxu0 0.0
    %3395 = vmatprep.subr.mxu0 0.0
    %3396 = vmatpush2.msra.mxu0 0.0
    %3397 = vmatprep.subr.mxu0 0.0
    %3398 = vmatpush2.msra.mxu0 0.0
    %3399 = vmatprep.subr.mxu0 0.0
    %3400 = vmatpush2.msra.mxu0 0.0
    %3401 = vmatprep.subr.mxu0 0.0
    %3402 = vmatpush2.msra.mxu0 0.0
    %3403 = vmatprep.subr.mxu0 0.0
    %3404 = vmatpush2.msra.mxu0 0.0
    %3405 = vmatprep.subr.mxu0 0.0
    %3406 = vmatpush2.msra.mxu0 0.0
    %3407 = vmatprep.subr.mxu0 0.0
    %3408 = vmatpush2.msra.mxu0 0.0
    %3409 = vmatprep.subr.mxu0 0.0
    %3410 = vmatpush2.msra.mxu0 0.0
    %3411 = vmatprep.subr.mxu0 0.0
    %3412 = vmatpush2.msra.mxu0 0.0
    %3413 = vmatprep.subr.mxu0 0.0
    %3414 = vmatpush2.msra.mxu0 0.0
    %3415 = vmatprep.subr.mxu0 0.0
    %3416 = vmatpush2.msra.mxu0 0.0
    %3417 = vmatprep.subr.mxu0 0.0
    %3418 = vmatpush2.msra.mxu0 0.0
    %3419 = vmatprep.subr.mxu0 0.0
    %3420 = vmatpush2.msra.mxu0 0.0
    %3421 = vmatprep.mubr.f32.mxu0 0.0
    %3422 = vmatmul.mubr.f32.gmra.mxu0 %v3000
    %v3423 = vpop.f32.mrf.mxu0
    %v3424 = vadd.f32 %v2841, %v3423
    %v3425 = vpop.f32.mrf.mxu0
    %v3426 = vadd.f32 %v2845, %v3425
    %3427 = vdwg.mxu0
    %3428 = vmatprep.subr.mxu0 0.0
    %3429 = vmatpush1.msra.mxu0 0.0
    %3430 = vmatprep.subr.mxu0 0.0
    %3431 = vmatpush1.msra.mxu0 0.0
    %3432 = vmatprep.subr.mxu0 0.0
    %3433 = vmatpush1.msra.mxu0 0.0
    %3434 = vmatprep.subr.mxu0 0.0
    %3435 = vmatpush1.msra.mxu0 0.0
    %3436 = vmatprep.subr.mxu0 0.0
    %3437 = vmatpush1.msra.mxu0 0.0
    %3438 = vmatprep.subr.mxu0 0.0
    %3439 = vmatpush1.msra.mxu0 0.0
    %3440 = vmatprep.subr.mxu0 0.0
    %3441 = vmatpush1.msra.mxu0 0.0
    %3442 = vmatprep.subr.mxu0 0.0
    %3443 = vmatpush1.msra.mxu0 0.0
    %3444 = vmatprep.subr.mxu0 0.0
    %3445 = vmatpush1.msra.mxu0 0.0
    %3446 = vmatprep.subr.mxu0 0.0
    %3447 = vmatpush1.msra.mxu0 0.0
    %3448 = vmatprep.subr.mxu0 0.0
    %3449 = vmatpush1.msra.mxu0 0.0
    %3450 = vmatprep.subr.mxu0 0.0
    %3451 = vmatpush1.msra.mxu0 0.0
    %3452 = vmatprep.subr.mxu0 0.0
    %3453 = vmatpush1.msra.mxu0 0.0
    %3454 = vmatprep.subr.mxu0 0.0
    %3455 = vmatpush1.msra.mxu0 0.0
    %3456 = vmatprep.subr.mxu0 0.0
    %3457 = vmatpush1.msra.mxu0 0.0
    %3458 = vmatprep.subr.mxu0 %v2761
    %3459 = vmatpush1.msra.mxu0 %v2760
    %3460 = vmatprep.subr.mxu0 0.0
    %3461 = vmatpush2.msra.mxu0 0.0
    %3462 = vmatprep.subr.mxu0 0.0
    %3463 = vmatpush2.msra.mxu0 0.0
    %3464 = vmatprep.subr.mxu0 0.0
    %3465 = vmatpush2.msra.mxu0 0.0
    %3466 = vmatprep.subr.mxu0 0.0
    %3467 = vmatpush2.msra.mxu0 0.0
    %3468 = vmatprep.subr.mxu0 0.0
    %3469 = vmatpush2.msra.mxu0 0.0
    %3470 = vmatprep.subr.mxu0 0.0
    %3471 = vmatpush2.msra.mxu0 0.0
    %3472 = vmatprep.subr.mxu0 0.0
    %3473 = vmatpush2.msra.mxu0 0.0
    %3474 = vmatprep.subr.mxu0 0.0
    %3475 = vmatpush2.msra.mxu0 0.0
    %3476 = vmatprep.subr.mxu0 0.0
    %3477 = vmatpush2.msra.mxu0 0.0
    %3478 = vmatprep.subr.mxu0 0.0
    %3479 = vmatpush2.msra.mxu0 0.0
    %3480 = vmatprep.subr.mxu0 0.0
    %3481 = vmatpush2.msra.mxu0 0.0
    %3482 = vmatprep.subr.mxu0 0.0
    %3483 = vmatpush2.msra.mxu0 0.0
    %3484 = vmatprep.subr.mxu0 0.0
    %3485 = vmatpush2.msra.mxu0 0.0
    %3486 = vmatprep.subr.mxu0 0.0
    %3487 = vmatpush2.msra.mxu0 0.0
    %3488 = vmatprep.subr.mxu0 0.0
    %3489 = vmatpush2.msra.mxu0 0.0
    %3490 = vmatprep.subr.mxu0 0.0
    %3491 = vmatpush2.msra.mxu0 0.0
    %3492 = vmatprep.mubr.f32.mxu0 0.0
    %3493 = vmatmul.mubr.f32.gmra.mxu0 %v3000
    %v3494 = vpop.f32.mrf.mxu0
    %v3495 = vadd.f32 %v2849, %v3494
    %v3496 = vpop.f32.mrf.mxu0
    %v3497 = vadd.f32 %v2853, %v3496
    %3498 = vdwg.mxu0
    %3499 = vmatprep.subr.mxu0 0.0
    %3500 = vmatpush1.msra.mxu0 0.0
    %3501 = vmatprep.subr.mxu0 0.0
    %3502 = vmatpush1.msra.mxu0 0.0
    %3503 = vmatprep.subr.mxu0 0.0
    %3504 = vmatpush1.msra.mxu0 0.0
    %3505 = vmatprep.subr.mxu0 0.0
    %3506 = vmatpush1.msra.mxu0 0.0
    %3507 = vmatprep.subr.mxu0 0.0
    %3508 = vmatpush1.msra.mxu0 0.0
    %3509 = vmatprep.subr.mxu0 0.0
    %3510 = vmatpush1.msra.mxu0 0.0
    %3511 = vmatprep.subr.mxu0 0.0
    %3512 = vmatpush1.msra.mxu0 0.0
    %3513 = vmatprep.subr.mxu0 0.0
    %3514 = vmatpush1.msra.mxu0 0.0
    %3515 = vmatprep.subr.mxu0 0.0
    %3516 = vmatpush1.msra.mxu0 0.0
    %3517 = vmatprep.subr.mxu0 0.0
    %3518 = vmatpush1.msra.mxu0 0.0
    %3519 = vmatprep.subr.mxu0 0.0
    %3520 = vmatpush1.msra.mxu0 0.0
    %3521 = vmatprep.subr.mxu0 0.0
    %3522 = vmatpush1.msra.mxu0 0.0
    %3523 = vmatprep.subr.mxu0 0.0
    %3524 = vmatpush1.msra.mxu0 0.0
    %3525 = vmatprep.subr.mxu0 0.0
    %3526 = vmatpush1.msra.mxu0 0.0
    %3527 = vmatprep.subr.mxu0 0.0
    %3528 = vmatpush1.msra.mxu0 0.0
    %3529 = vmatprep.subr.mxu0 %v2763
    %3530 = vmatpush1.msra.mxu0 %v2762
    %3531 = vmatprep.subr.mxu0 0.0
    %3532 = vmatpush2.msra.mxu0 0.0
    %3533 = vmatprep.subr.mxu0 0.0
    %3534 = vmatpush2.msra.mxu0 0.0
    %3535 = vmatprep.subr.mxu0 0.0
    %3536 = vmatpush2.msra.mxu0 0.0
    %3537 = vmatprep.subr.mxu0 0.0
    %3538 = vmatpush2.msra.mxu0 0.0
    %3539 = vmatprep.subr.mxu0 0.0
    %3540 = vmatpush2.msra.mxu0 0.0
    %3541 = vmatprep.subr.mxu0 0.0
    %3542 = vmatpush2.msra.mxu0 0.0
    %3543 = vmatprep.subr.mxu0 0.0
    %3544 = vmatpush2.msra.mxu0 0.0
    %3545 = vmatprep.subr.mxu0 0.0
    %3546 = vmatpush2.msra.mxu0 0.0
    %3547 = vmatprep.subr.mxu0 0.0
    %3548 = vmatpush2.msra.mxu0 0.0
    %3549 = vmatprep.subr.mxu0 0.0
    %3550 = vmatpush2.msra.mxu0 0.0
    %3551 = vmatprep.subr.mxu0 0.0
    %3552 = vmatpush2.msra.mxu0 0.0
    %3553 = vmatprep.subr.mxu0 0.0
    %3554 = vmatpush2.msra.mxu0 0.0
    %3555 = vmatprep.subr.mxu0 0.0
    %3556 = vmatpush2.msra.mxu0 0.0
    %3557 = vmatprep.subr.mxu0 0.0
    %3558 = vmatpush2.msra.mxu0 0.0
    %3559 = vmatprep.subr.mxu0 0.0
    %3560 = vmatpush2.msra.mxu0 0.0
    %3561 = vmatprep.subr.mxu0 0.0
    %3562 = vmatpush2.msra.mxu0 0.0
    %3563 = vmatprep.mubr.f32.mxu0 0.0
    %3564 = vmatmul.mubr.f32.gmra.mxu0 %v3000
    %v3565 = vpop.f32.mrf.mxu0
    %v3566 = vadd.f32 %v2857, %v3565
    %v3567 = vpop.f32.mrf.mxu0
    %v3568 = vadd.f32 %v2861, %v3567
    %3569 = vdwg.mxu0
    %3570 = vmatprep.subr.mxu0 0.0
    %3571 = vmatpush1.msra.mxu0 0.0
    %3572 = vmatprep.subr.mxu0 0.0
    %3573 = vmatpush1.msra.mxu0 0.0
    %3574 = vmatprep.subr.mxu0 0.0
    %3575 = vmatpush1.msra.mxu0 0.0
    %3576 = vmatprep.subr.mxu0 0.0
    %3577 = vmatpush1.msra.mxu0 0.0
    %3578 = vmatprep.subr.mxu0 0.0
    %3579 = vmatpush1.msra.mxu0 0.0
    %3580 = vmatprep.subr.mxu0 0.0
    %3581 = vmatpush1.msra.mxu0 0.0
    %3582 = vmatprep.subr.mxu0 0.0
    %3583 = vmatpush1.msra.mxu0 0.0
    %3584 = vmatprep.subr.mxu0 0.0
    %3585 = vmatpush1.msra.mxu0 0.0
    %3586 = vmatprep.subr.mxu0 0.0
    %3587 = vmatpush1.msra.mxu0 0.0
    %3588 = vmatprep.subr.mxu0 0.0
    %3589 = vmatpush1.msra.mxu0 0.0
    %3590 = vmatprep.subr.mxu0 0.0
    %3591 = vmatpush1.msra.mxu0 0.0
    %3592 = vmatprep.subr.mxu0 0.0
    %3593 = vmatpush1.msra.mxu0 0.0
    %3594 = vmatprep.subr.mxu0 0.0
    %3595 = vmatpush1.msra.mxu0 0.0
    %3596 = vmatprep.subr.mxu0 0.0
    %3597 = vmatpush1.msra.mxu0 0.0
    %3598 = vmatprep.subr.mxu0 0.0
    %3599 = vmatpush1.msra.mxu0 0.0
    %3600 = vmatprep.subr.mxu0 %v2765
    %3601 = vmatpush1.msra.mxu0 %v2764
    %3602 = vmatprep.subr.mxu0 0.0
    %3603 = vmatpush2.msra.mxu0 0.0
    %3604 = vmatprep.subr.mxu0 0.0
    %3605 = vmatpush2.msra.mxu0 0.0
    %3606 = vmatprep.subr.mxu0 0.0
    %3607 = vmatpush2.msra.mxu0 0.0
    %3608 = vmatprep.subr.mxu0 0.0
    %3609 = vmatpush2.msra.mxu0 0.0
    %3610 = vmatprep.subr.mxu0 0.0
    %3611 = vmatpush2.msra.mxu0 0.0
    %3612 = vmatprep.subr.mxu0 0.0
    %3613 = vmatpush2.msra.mxu0 0.0
    %3614 = vmatprep.subr.mxu0 0.0
    %3615 = vmatpush2.msra.mxu0 0.0
    %3616 = vmatprep.subr.mxu0 0.0
    %3617 = vmatpush2.msra.mxu0 0.0
    %3618 = vmatprep.subr.mxu0 0.0
    %3619 = vmatpush2.msra.mxu0 0.0
    %3620 = vmatprep.subr.mxu0 0.0
    %3621 = vmatpush2.msra.mxu0 0.0
    %3622 = vmatprep.subr.mxu0 0.0
    %3623 = vmatpush2.msra.mxu0 0.0
    %3624 = vmatprep.subr.mxu0 0.0
    %3625 = vmatpush2.msra.mxu0 0.0
    %3626 = vmatprep.subr.mxu0 0.0
    %3627 = vmatpush2.msra.mxu0 0.0
    %3628 = vmatprep.subr.mxu0 0.0
    %3629 = vmatpush2.msra.mxu0 0.0
    %3630 = vmatprep.subr.mxu0 0.0
    %3631 = vmatpush2.msra.mxu0 0.0
    %3632 = vmatprep.subr.mxu0 0.0
    %3633 = vmatpush2.msra.mxu0 0.0
    %3634 = vmatprep.mubr.f32.mxu0 0.0
    %3635 = vmatmul.mubr.f32.gmra.mxu0 %v3000
    %v3636 = vpop.f32.mrf.mxu0
    %v3637 = vadd.f32 %v2865, %v3636
    %v3638 = vpop.f32.mrf.mxu0
    %v3639 = vadd.f32 %v2869, %v3638
    %3640 = vdwg.mxu0
    %3641 = vmatprep.subr.mxu0 0.0
    %3642 = vmatpush1.msra.mxu0 0.0
    %3643 = vmatprep.subr.mxu0 0.0
    %3644 = vmatpush1.msra.mxu0 0.0
    %3645 = vmatprep.subr.mxu0 0.0
    %3646 = vmatpush1.msra.mxu0 0.0
    %3647 = vmatprep.subr.mxu0 0.0
    %3648 = vmatpush1.msra.mxu0 0.0
    %3649 = vmatprep.subr.mxu0 0.0
    %3650 = vmatpush1.msra.mxu0 0.0
    %3651 = vmatprep.subr.mxu0 0.0
    %3652 = vmatpush1.msra.mxu0 0.0
    %3653 = vmatprep.subr.mxu0 0.0
    %3654 = vmatpush1.msra.mxu0 0.0
    %3655 = vmatprep.subr.mxu0 0.0
    %3656 = vmatpush1.msra.mxu0 0.0
    %3657 = vmatprep.subr.mxu0 0.0
    %3658 = vmatpush1.msra.mxu0 0.0
    %3659 = vmatprep.subr.mxu0 0.0
    %3660 = vmatpush1.msra.mxu0 0.0
    %3661 = vmatprep.subr.mxu0 0.0
    %3662 = vmatpush1.msra.mxu0 0.0
    %3663 = vmatprep.subr.mxu0 0.0
    %3664 = vmatpush1.msra.mxu0 0.0
    %3665 = vmatprep.subr.mxu0 0.0
    %3666 = vmatpush1.msra.mxu0 0.0
    %3667 = vmatprep.subr.mxu0 0.0
    %3668 = vmatpush1.msra.mxu0 0.0
    %3669 = vmatprep.subr.mxu0 0.0
    %3670 = vmatpush1.msra.mxu0 0.0
    %3671 = vmatprep.subr.mxu0 %v2767
    %3672 = vmatpush1.msra.mxu0 %v2766
    %3673 = vmatprep.subr.mxu0 0.0
    %3674 = vmatpush2.msra.mxu0 0.0
    %3675 = vmatprep.subr.mxu0 0.0
    %3676 = vmatpush2.msra.mxu0 0.0
    %3677 = vmatprep.subr.mxu0 0.0
    %3678 = vmatpush2.msra.mxu0 0.0
    %3679 = vmatprep.subr.mxu0 0.0
    %3680 = vmatpush2.msra.mxu0 0.0
    %3681 = vmatprep.subr.mxu0 0.0
    %3682 = vmatpush2.msra.mxu0 0.0
    %3683 = vmatprep.subr.mxu0 0.0
    %3684 = vmatpush2.msra.mxu0 0.0
    %3685 = vmatprep.subr.mxu0 0.0
    %3686 = vmatpush2.msra.mxu0 0.0
    %3687 = vmatprep.subr.mxu0 0.0
    %3688 = vmatpush2.msra.mxu0 0.0
    %3689 = vmatprep.subr.mxu0 0.0
    %3690 = vmatpush2.msra.mxu0 0.0
    %3691 = vmatprep.subr.mxu0 0.0
    %3692 = vmatpush2.msra.mxu0 0.0
    %3693 = vmatprep.subr.mxu0 0.0
    %3694 = vmatpush2.msra.mxu0 0.0
    %3695 = vmatprep.subr.mxu0 0.0
    %3696 = vmatpush2.msra.mxu0 0.0
    %3697 = vmatprep.subr.mxu0 0.0
    %3698 = vmatpush2.msra.mxu0 0.0
    %3699 = vmatprep.subr.mxu0 0.0
    %3700 = vmatpush2.msra.mxu0 0.0
    %3701 = vmatprep.subr.mxu0 0.0
    %3702 = vmatpush2.msra.mxu0 0.0
    %3703 = vmatprep.subr.mxu0 0.0
    %3704 = vmatpush2.msra.mxu0 0.0
    %3705 = vmatprep.mubr.f32.mxu0 0.0
    %3706 = vmatmul.mubr.f32.gmra.mxu0 %v3000
    %v3707 = vpop.f32.mrf.mxu0
    %v3708 = vadd.f32 %v2873, %v3707
    %v3709 = vpop.f32.mrf.mxu0
    %v3710 = vadd.f32 %v2877, %v3709
    %3711 = vdwg.mxu0
    %3712 = vmatprep.subr.mxu0 0.0
    %3713 = vmatpush1.msra.mxu0 0.0
    %3714 = vmatprep.subr.mxu0 0.0
    %3715 = vmatpush1.msra.mxu0 0.0
    %3716 = vmatprep.subr.mxu0 0.0
    %3717 = vmatpush1.msra.mxu0 0.0
    %3718 = vmatprep.subr.mxu0 0.0
    %3719 = vmatpush1.msra.mxu0 0.0
    %3720 = vmatprep.subr.mxu0 0.0
    %3721 = vmatpush1.msra.mxu0 0.0
    %3722 = vmatprep.subr.mxu0 0.0
    %3723 = vmatpush1.msra.mxu0 0.0
    %3724 = vmatprep.subr.mxu0 0.0
    %3725 = vmatpush1.msra.mxu0 0.0
    %3726 = vmatprep.subr.mxu0 0.0
    %3727 = vmatpush1.msra.mxu0 0.0
    %3728 = vmatprep.subr.mxu0 0.0
    %3729 = vmatpush1.msra.mxu0 0.0
    %3730 = vmatprep.subr.mxu0 0.0
    %3731 = vmatpush1.msra.mxu0 0.0
    %3732 = vmatprep.subr.mxu0 0.0
    %3733 = vmatpush1.msra.mxu0 0.0
    %3734 = vmatprep.subr.mxu0 0.0
    %3735 = vmatpush1.msra.mxu0 0.0
    %3736 = vmatprep.subr.mxu0 0.0
    %3737 = vmatpush1.msra.mxu0 0.0
    %3738 = vmatprep.subr.mxu0 0.0
    %3739 = vmatpush1.msra.mxu0 0.0
    %3740 = vmatprep.subr.mxu0 0.0
    %3741 = vmatpush1.msra.mxu0 0.0
    %3742 = vmatprep.subr.mxu0 %v2769
    %3743 = vmatpush1.msra.mxu0 %v2768
    %3744 = vmatprep.subr.mxu0 0.0
    %3745 = vmatpush2.msra.mxu0 0.0
    %3746 = vmatprep.subr.mxu0 0.0
    %3747 = vmatpush2.msra.mxu0 0.0
    %3748 = vmatprep.subr.mxu0 0.0
    %3749 = vmatpush2.msra.mxu0 0.0
    %3750 = vmatprep.subr.mxu0 0.0
    %3751 = vmatpush2.msra.mxu0 0.0
    %3752 = vmatprep.subr.mxu0 0.0
    %3753 = vmatpush2.msra.mxu0 0.0
    %3754 = vmatprep.subr.mxu0 0.0
    %3755 = vmatpush2.msra.mxu0 0.0
    %3756 = vmatprep.subr.mxu0 0.0
    %3757 = vmatpush2.msra.mxu0 0.0
    %3758 = vmatprep.subr.mxu0 0.0
    %3759 = vmatpush2.msra.mxu0 0.0
    %3760 = vmatprep.subr.mxu0 0.0
    %3761 = vmatpush2.msra.mxu0 0.0
    %3762 = vmatprep.subr.mxu0 0.0
    %3763 = vmatpush2.msra.mxu0 0.0
    %3764 = vmatprep.subr.mxu0 0.0
    %3765 = vmatpush2.msra.mxu0 0.0
    %3766 = vmatprep.subr.mxu0 0.0
    %3767 = vmatpush2.msra.mxu0 0.0
    %3768 = vmatprep.subr.mxu0 0.0
    %3769 = vmatpush2.msra.mxu0 0.0
    %3770 = vmatprep.subr.mxu0 0.0
    %3771 = vmatpush2.msra.mxu0 0.0
    %3772 = vmatprep.subr.mxu0 0.0
    %3773 = vmatpush2.msra.mxu0 0.0
    %3774 = vmatprep.subr.mxu0 0.0
    %3775 = vmatpush2.msra.mxu0 0.0
    %3776 = vmatprep.mubr.f32.mxu0 0.0
    %3777 = vmatmul.mubr.f32.gmra.mxu0 %v3000
    %v3778 = vpop.f32.mrf.mxu0
    %v3779 = vadd.f32 %v2881, %v3778
    %v3780 = vpop.f32.mrf.mxu0
    %v3781 = vadd.f32 %v2885, %v3780
    %3782 = vdwg.mxu0
    %3783 = vmatprep.subr.mxu0 0.0
    %3784 = vmatpush1.msra.mxu0 0.0
    %3785 = vmatprep.subr.mxu0 0.0
    %3786 = vmatpush1.msra.mxu0 0.0
    %3787 = vmatprep.subr.mxu0 0.0
    %3788 = vmatpush1.msra.mxu0 0.0
    %3789 = vmatprep.subr.mxu0 0.0
    %3790 = vmatpush1.msra.mxu0 0.0
    %3791 = vmatprep.subr.mxu0 0.0
    %3792 = vmatpush1.msra.mxu0 0.0
    %3793 = vmatprep.subr.mxu0 0.0
    %3794 = vmatpush1.msra.mxu0 0.0
    %3795 = vmatprep.subr.mxu0 0.0
    %3796 = vmatpush1.msra.mxu0 0.0
    %3797 = vmatprep.subr.mxu0 0.0
    %3798 = vmatpush1.msra.mxu0 0.0
    %3799 = vmatprep.subr.mxu0 0.0
    %3800 = vmatpush1.msra.mxu0 0.0
    %3801 = vmatprep.subr.mxu0 0.0
    %3802 = vmatpush1.msra.mxu0 0.0
    %3803 = vmatprep.subr.mxu0 0.0
    %3804 = vmatpush1.msra.mxu0 0.0
    %3805 = vmatprep.subr.mxu0 0.0
    %3806 = vmatpush1.msra.mxu0 0.0
    %3807 = vmatprep.subr.mxu0 0.0
    %3808 = vmatpush1.msra.mxu0 0.0
    %3809 = vmatprep.subr.mxu0 0.0
    %3810 = vmatpush1.msra.mxu0 0.0
    %3811 = vmatprep.subr.mxu0 0.0
    %3812 = vmatpush1.msra.mxu0 0.0
    %3813 = vmatprep.subr.mxu0 %v2771
    %3814 = vmatpush1.msra.mxu0 %v2770
    %3815 = vmatprep.subr.mxu0 0.0
    %3816 = vmatpush2.msra.mxu0 0.0
    %3817 = vmatprep.subr.mxu0 0.0
    %3818 = vmatpush2.msra.mxu0 0.0
    %3819 = vmatprep.subr.mxu0 0.0
    %3820 = vmatpush2.msra.mxu0 0.0
    %3821 = vmatprep.subr.mxu0 0.0
    %3822 = vmatpush2.msra.mxu0 0.0
    %3823 = vmatprep.subr.mxu0 0.0
    %3824 = vmatpush2.msra.mxu0 0.0
    %3825 = vmatprep.subr.mxu0 0.0
    %3826 = vmatpush2.msra.mxu0 0.0
    %3827 = vmatprep.subr.mxu0 0.0
    %3828 = vmatpush2.msra.mxu0 0.0
    %3829 = vmatprep.subr.mxu0 0.0
    %3830 = vmatpush2.msra.mxu0 0.0
    %3831 = vmatprep.subr.mxu0 0.0
    %3832 = vmatpush2.msra.mxu0 0.0
    %3833 = vmatprep.subr.mxu0 0.0
    %3834 = vmatpush2.msra.mxu0 0.0
    %3835 = vmatprep.subr.mxu0 0.0
    %3836 = vmatpush2.msra.mxu0 0.0
    %3837 = vmatprep.subr.mxu0 0.0
    %3838 = vmatpush2.msra.mxu0 0.0
    %3839 = vmatprep.subr.mxu0 0.0
    %3840 = vmatpush2.msra.mxu0 0.0
    %3841 = vmatprep.subr.mxu0 0.0
    %3842 = vmatpush2.msra.mxu0 0.0
    %3843 = vmatprep.subr.mxu0 0.0
    %3844 = vmatpush2.msra.mxu0 0.0
    %3845 = vmatprep.subr.mxu0 0.0
    %3846 = vmatpush2.msra.mxu0 0.0
    %3847 = vmatprep.mubr.f32.mxu0 0.0
    %3848 = vmatmul.mubr.f32.gmra.mxu0 %v3000
    %v3849 = vpop.f32.mrf.mxu0
    %v3850 = vadd.f32 %v2889, %v3849
    %v3851 = vpop.f32.mrf.mxu0
    %v3852 = vadd.f32 %v2893, %v3851
    %3853 = vdwg.mxu0
    %3854 = vmatprep.subr.mxu0 0.0
    %3855 = vmatpush1.msra.mxu0 0.0
    %3856 = vmatprep.subr.mxu0 0.0
    %3857 = vmatpush1.msra.mxu0 0.0
    %3858 = vmatprep.subr.mxu0 0.0
    %3859 = vmatpush1.msra.mxu0 0.0
    %3860 = vmatprep.subr.mxu0 0.0
    %3861 = vmatpush1.msra.mxu0 0.0
    %3862 = vmatprep.subr.mxu0 0.0
    %3863 = vmatpush1.msra.mxu0 0.0
    %3864 = vmatprep.subr.mxu0 0.0
    %3865 = vmatpush1.msra.mxu0 0.0
    %3866 = vmatprep.subr.mxu0 0.0
    %3867 = vmatpush1.msra.mxu0 0.0
    %3868 = vmatprep.subr.mxu0 0.0
    %3869 = vmatpush1.msra.mxu0 0.0
    %3870 = vmatprep.subr.mxu0 0.0
    %3871 = vmatpush1.msra.mxu0 0.0
    %3872 = vmatprep.subr.mxu0 0.0
    %3873 = vmatpush1.msra.mxu0 0.0
    %3874 = vmatprep.subr.mxu0 0.0
    %3875 = vmatpush1.msra.mxu0 0.0
    %3876 = vmatprep.subr.mxu0 0.0
    %3877 = vmatpush1.msra.mxu0 0.0
    %3878 = vmatprep.subr.mxu0 0.0
    %3879 = vmatpush1.msra.mxu0 0.0
    %3880 = vmatprep.subr.mxu0 0.0
    %3881 = vmatpush1.msra.mxu0 0.0
    %3882 = vmatprep.subr.mxu0 0.0
    %3883 = vmatpush1.msra.mxu0 0.0
    %3884 = vmatprep.subr.mxu0 %v2773
    %3885 = vmatpush1.msra.mxu0 %v2772
    %3886 = vmatprep.subr.mxu0 0.0
    %3887 = vmatpush2.msra.mxu0 0.0
    %3888 = vmatprep.subr.mxu0 0.0
    %3889 = vmatpush2.msra.mxu0 0.0
    %3890 = vmatprep.subr.mxu0 0.0
    %3891 = vmatpush2.msra.mxu0 0.0
    %3892 = vmatprep.subr.mxu0 0.0
    %3893 = vmatpush2.msra.mxu0 0.0
    %3894 = vmatprep.subr.mxu0 0.0
    %3895 = vmatpush2.msra.mxu0 0.0
    %3896 = vmatprep.subr.mxu0 0.0
    %3897 = vmatpush2.msra.mxu0 0.0
    %3898 = vmatprep.subr.mxu0 0.0
    %3899 = vmatpush2.msra.mxu0 0.0
    %3900 = vmatprep.subr.mxu0 0.0
    %3901 = vmatpush2.msra.mxu0 0.0
    %3902 = vmatprep.subr.mxu0 0.0
    %3903 = vmatpush2.msra.mxu0 0.0
    %3904 = vmatprep.subr.mxu0 0.0
    %3905 = vmatpush2.msra.mxu0 0.0
    %3906 = vmatprep.subr.mxu0 0.0
    %3907 = vmatpush2.msra.mxu0 0.0
    %3908 = vmatprep.subr.mxu0 0.0
    %3909 = vmatpush2.msra.mxu0 0.0
    %3910 = vmatprep.subr.mxu0 0.0
    %3911 = vmatpush2.msra.mxu0 0.0
    %3912 = vmatprep.subr.mxu0 0.0
    %3913 = vmatpush2.msra.mxu0 0.0
    %3914 = vmatprep.subr.mxu0 0.0
    %3915 = vmatpush2.msra.mxu0 0.0
    %3916 = vmatprep.subr.mxu0 0.0
    %3917 = vmatpush2.msra.mxu0 0.0
    %3918 = vmatprep.mubr.f32.mxu0 0.0
    %3919 = vmatmul.mubr.f32.gmra.mxu0 %v3000
    %v3920 = vpop.f32.mrf.mxu0
    %v3921 = vadd.f32 %v2897, %v3920
    %v3922 = vpop.f32.mrf.mxu0
    %v3923 = vadd.f32 %v2901, %v3922
    %3924 = vdwg.mxu0
    %3925 = vmatprep.subr.mxu0 0.0
    %3926 = vmatpush1.msra.mxu0 0.0
    %3927 = vmatprep.subr.mxu0 0.0
    %3928 = vmatpush1.msra.mxu0 0.0
    %3929 = vmatprep.subr.mxu0 0.0
    %3930 = vmatpush1.msra.mxu0 0.0
    %3931 = vmatprep.subr.mxu0 0.0
    %3932 = vmatpush1.msra.mxu0 0.0
    %3933 = vmatprep.subr.mxu0 0.0
    %3934 = vmatpush1.msra.mxu0 0.0
    %3935 = vmatprep.subr.mxu0 0.0
    %3936 = vmatpush1.msra.mxu0 0.0
    %3937 = vmatprep.subr.mxu0 0.0
    %3938 = vmatpush1.msra.mxu0 0.0
    %3939 = vmatprep.subr.mxu0 0.0
    %3940 = vmatpush1.msra.mxu0 0.0
    %3941 = vmatprep.subr.mxu0 0.0
    %3942 = vmatpush1.msra.mxu0 0.0
    %3943 = vmatprep.subr.mxu0 0.0
    %3944 = vmatpush1.msra.mxu0 0.0
    %3945 = vmatprep.subr.mxu0 0.0
    %3946 = vmatpush1.msra.mxu0 0.0
    %3947 = vmatprep.subr.mxu0 0.0
    %3948 = vmatpush1.msra.mxu0 0.0
    %3949 = vmatprep.subr.mxu0 0.0
    %3950 = vmatpush1.msra.mxu0 0.0
    %3951 = vmatprep.subr.mxu0 0.0
    %3952 = vmatpush1.msra.mxu0 0.0
    %3953 = vmatprep.subr.mxu0 0.0
    %3954 = vmatpush1.msra.mxu0 0.0
    %3955 = vmatprep.subr.mxu0 %v2775
    %3956 = vmatpush1.msra.mxu0 %v2774
    %3957 = vmatprep.subr.mxu0 0.0
    %3958 = vmatpush2.msra.mxu0 0.0
    %3959 = vmatprep.subr.mxu0 0.0
    %3960 = vmatpush2.msra.mxu0 0.0
    %3961 = vmatprep.subr.mxu0 0.0
    %3962 = vmatpush2.msra.mxu0 0.0
    %3963 = vmatprep.subr.mxu0 0.0
    %3964 = vmatpush2.msra.mxu0 0.0
    %3965 = vmatprep.subr.mxu0 0.0
    %3966 = vmatpush2.msra.mxu0 0.0
    %3967 = vmatprep.subr.mxu0 0.0
    %3968 = vmatpush2.msra.mxu0 0.0
    %3969 = vmatprep.subr.mxu0 0.0
    %3970 = vmatpush2.msra.mxu0 0.0
    %3971 = vmatprep.subr.mxu0 0.0
    %3972 = vmatpush2.msra.mxu0 0.0
    %3973 = vmatprep.subr.mxu0 0.0
    %3974 = vmatpush2.msra.mxu0 0.0
    %3975 = vmatprep.subr.mxu0 0.0
    %3976 = vmatpush2.msra.mxu0 0.0
    %3977 = vmatprep.subr.mxu0 0.0
    %3978 = vmatpush2.msra.mxu0 0.0
    %3979 = vmatprep.subr.mxu0 0.0
    %3980 = vmatpush2.msra.mxu0 0.0
    %3981 = vmatprep.subr.mxu0 0.0
    %3982 = vmatpush2.msra.mxu0 0.0
    %3983 = vmatprep.subr.mxu0 0.0
    %3984 = vmatpush2.msra.mxu0 0.0
    %3985 = vmatprep.subr.mxu0 0.0
    %3986 = vmatpush2.msra.mxu0 0.0
    %3987 = vmatprep.subr.mxu0 0.0
    %3988 = vmatpush2.msra.mxu0 0.0
    %3989 = vmatprep.mubr.f32.mxu0 0.0
    %3990 = vmatmul.mubr.f32.gmra.mxu0 %v3000
    %v3991 = vpop.f32.mrf.mxu0
    %v3992 = vadd.f32 %v2905, %v3991
    %v3993 = vpop.f32.mrf.mxu0
    %v3994 = vadd.f32 %v2909, %v3993
    %3995 = vdwg.mxu0
    %3996 = vmatprep.subr.mxu0 0.0
    %3997 = vmatpush1.msra.mxu0 0.0
    %3998 = vmatprep.subr.mxu0 0.0
    %3999 = vmatpush1.msra.mxu0 0.0
    %4000 = vmatprep.subr.mxu0 0.0
    %4001 = vmatpush1.msra.mxu0 0.0
    %4002 = vmatprep.subr.mxu0 0.0
    %4003 = vmatpush1.msra.mxu0 0.0
    %4004 = vmatprep.subr.mxu0 0.0
    %4005 = vmatpush1.msra.mxu0 0.0
    %4006 = vmatprep.subr.mxu0 0.0
    %4007 = vmatpush1.msra.mxu0 0.0
    %4008 = vmatprep.subr.mxu0 0.0
    %4009 = vmatpush1.msra.mxu0 0.0
    %4010 = vmatprep.subr.mxu0 0.0
    %4011 = vmatpush1.msra.mxu0 0.0
    %4012 = vmatprep.subr.mxu0 0.0
    %4013 = vmatpush1.msra.mxu0 0.0
    %4014 = vmatprep.subr.mxu0 0.0
    %4015 = vmatpush1.msra.mxu0 0.0
    %4016 = vmatprep.subr.mxu0 0.0
    %4017 = vmatpush1.msra.mxu0 0.0
    %4018 = vmatprep.subr.mxu0 0.0
    %4019 = vmatpush1.msra.mxu0 0.0
    %4020 = vmatprep.subr.mxu0 0.0
    %4021 = vmatpush1.msra.mxu0 0.0
    %4022 = vmatprep.subr.mxu0 0.0
    %4023 = vmatpush1.msra.mxu0 0.0
    %4024 = vmatprep.subr.mxu0 0.0
    %4025 = vmatpush1.msra.mxu0 0.0
    %4026 = vmatprep.subr.mxu0 %v2777
    %4027 = vmatpush1.msra.mxu0 %v2776
    %4028 = vmatprep.subr.mxu0 0.0
    %4029 = vmatpush2.msra.mxu0 0.0
    %4030 = vmatprep.subr.mxu0 0.0
    %4031 = vmatpush2.msra.mxu0 0.0
    %4032 = vmatprep.subr.mxu0 0.0
    %4033 = vmatpush2.msra.mxu0 0.0
    %4034 = vmatprep.subr.mxu0 0.0
    %4035 = vmatpush2.msra.mxu0 0.0
    %4036 = vmatprep.subr.mxu0 0.0
    %4037 = vmatpush2.msra.mxu0 0.0
    %4038 = vmatprep.subr.mxu0 0.0
    %4039 = vmatpush2.msra.mxu0 0.0
    %4040 = vmatprep.subr.mxu0 0.0
    %4041 = vmatpush2.msra.mxu0 0.0
    %4042 = vmatprep.subr.mxu0 0.0
    %4043 = vmatpush2.msra.mxu0 0.0
    %4044 = vmatprep.subr.mxu0 0.0
    %4045 = vmatpush2.msra.mxu0 0.0
    %4046 = vmatprep.subr.mxu0 0.0
    %4047 = vmatpush2.msra.mxu0 0.0
    %4048 = vmatprep.subr.mxu0 0.0
    %4049 = vmatpush2.msra.mxu0 0.0
    %4050 = vmatprep.subr.mxu0 0.0
    %4051 = vmatpush2.msra.mxu0 0.0
    %4052 = vmatprep.subr.mxu0 0.0
    %4053 = vmatpush2.msra.mxu0 0.0
    %4054 = vmatprep.subr.mxu0 0.0
    %4055 = vmatpush2.msra.mxu0 0.0
    %4056 = vmatprep.subr.mxu0 0.0
    %4057 = vmatpush2.msra.mxu0 0.0
    %4058 = vmatprep.subr.mxu0 0.0
    %4059 = vmatpush2.msra.mxu0 0.0
    %4060 = vmatprep.mubr.f32.mxu0 0.0
    %4061 = vmatmul.mubr.f32.gmra.mxu0 %v3000
    %v4062 = vpop.f32.mrf.mxu0
    %v4063 = vadd.f32 %v2913, %v4062
    %v4064 = vpop.f32.mrf.mxu0
    %v4065 = vadd.f32 %v2917, %v4064
    %4066 = vdwg.mxu0
    %4067 = vmatprep.subr.mxu0 0.0
    %4068 = vmatpush1.msra.mxu0 0.0
    %4069 = vmatprep.subr.mxu0 0.0
    %4070 = vmatpush1.msra.mxu0 0.0
    %4071 = vmatprep.subr.mxu0 0.0
    %4072 = vmatpush1.msra.mxu0 0.0
    %4073 = vmatprep.subr.mxu0 0.0
    %4074 = vmatpush1.msra.mxu0 0.0
    %4075 = vmatprep.subr.mxu0 0.0
    %4076 = vmatpush1.msra.mxu0 0.0
    %4077 = vmatprep.subr.mxu0 0.0
    %4078 = vmatpush1.msra.mxu0 0.0
    %4079 = vmatprep.subr.mxu0 0.0
    %4080 = vmatpush1.msra.mxu0 0.0
    %4081 = vmatprep.subr.mxu0 0.0
    %4082 = vmatpush1.msra.mxu0 0.0
    %4083 = vmatprep.subr.mxu0 0.0
    %4084 = vmatpush1.msra.mxu0 0.0
    %4085 = vmatprep.subr.mxu0 0.0
    %4086 = vmatpush1.msra.mxu0 0.0
    %4087 = vmatprep.subr.mxu0 0.0
    %4088 = vmatpush1.msra.mxu0 0.0
    %4089 = vmatprep.subr.mxu0 0.0
    %4090 = vmatpush1.msra.mxu0 0.0
    %4091 = vmatprep.subr.mxu0 0.0
    %4092 = vmatpush1.msra.mxu0 0.0
    %4093 = vmatprep.subr.mxu0 0.0
    %4094 = vmatpush1.msra.mxu0 0.0
    %4095 = vmatprep.subr.mxu0 0.0
    %4096 = vmatpush1.msra.mxu0 0.0
    %4097 = vmatprep.subr.mxu0 %v2779
    %4098 = vmatpush1.msra.mxu0 %v2778
    %4099 = vmatprep.subr.mxu0 0.0
    %4100 = vmatpush2.msra.mxu0 0.0
    %4101 = vmatprep.subr.mxu0 0.0
    %4102 = vmatpush2.msra.mxu0 0.0
    %4103 = vmatprep.subr.mxu0 0.0
    %4104 = vmatpush2.msra.mxu0 0.0
    %4105 = vmatprep.subr.mxu0 0.0
    %4106 = vmatpush2.msra.mxu0 0.0
    %4107 = vmatprep.subr.mxu0 0.0
    %4108 = vmatpush2.msra.mxu0 0.0
    %4109 = vmatprep.subr.mxu0 0.0
    %4110 = vmatpush2.msra.mxu0 0.0
    %4111 = vmatprep.subr.mxu0 0.0
    %4112 = vmatpush2.msra.mxu0 0.0
    %4113 = vmatprep.subr.mxu0 0.0
    %4114 = vmatpush2.msra.mxu0 0.0
    %4115 = vmatprep.subr.mxu0 0.0
    %4116 = vmatpush2.msra.mxu0 0.0
    %4117 = vmatprep.subr.mxu0 0.0
    %4118 = vmatpush2.msra.mxu0 0.0
    %4119 = vmatprep.subr.mxu0 0.0
    %4120 = vmatpush2.msra.mxu0 0.0
    %4121 = vmatprep.subr.mxu0 0.0
    %4122 = vmatpush2.msra.mxu0 0.0
    %4123 = vmatprep.subr.mxu0 0.0
    %4124 = vmatpush2.msra.mxu0 0.0
    %4125 = vmatprep.subr.mxu0 0.0
    %4126 = vmatpush2.msra.mxu0 0.0
    %4127 = vmatprep.subr.mxu0 0.0
    %4128 = vmatpush2.msra.mxu0 0.0
    %4129 = vmatprep.subr.mxu0 0.0
    %4130 = vmatpush2.msra.mxu0 0.0
    %4131 = vmatprep.mubr.f32.mxu0 0.0
    %4132 = vmatmul.mubr.f32.gmra.mxu0 %v3000
    %v4133 = vpop.f32.mrf.mxu0
    %v4134 = vadd.f32 %v2921, %v4133
    %v4135 = vpop.f32.mrf.mxu0
    %v4136 = vadd.f32 %v2925, %v4135
    %4137 = vdwg.mxu0
    %4138 = vmatprep.subr.mxu0 0.0
    %4139 = vmatpush1.msra.mxu0 0.0
    %4140 = vmatprep.subr.mxu0 0.0
    %4141 = vmatpush1.msra.mxu0 0.0
    %4142 = vmatprep.subr.mxu0 0.0
    %4143 = vmatpush1.msra.mxu0 0.0
    %4144 = vmatprep.subr.mxu0 0.0
    %4145 = vmatpush1.msra.mxu0 0.0
    %4146 = vmatprep.subr.mxu0 0.0
    %4147 = vmatpush1.msra.mxu0 0.0
    %4148 = vmatprep.subr.mxu0 0.0
    %4149 = vmatpush1.msra.mxu0 0.0
    %4150 = vmatprep.subr.mxu0 0.0
    %4151 = vmatpush1.msra.mxu0 0.0
    %4152 = vmatprep.subr.mxu0 0.0
    %4153 = vmatpush1.msra.mxu0 0.0
    %4154 = vmatprep.subr.mxu0 0.0
    %4155 = vmatpush1.msra.mxu0 0.0
    %4156 = vmatprep.subr.mxu0 0.0
    %4157 = vmatpush1.msra.mxu0 0.0
    %4158 = vmatprep.subr.mxu0 0.0
    %4159 = vmatpush1.msra.mxu0 0.0
    %4160 = vmatprep.subr.mxu0 0.0
    %4161 = vmatpush1.msra.mxu0 0.0
    %4162 = vmatprep.subr.mxu0 0.0
    %4163 = vmatpush1.msra.mxu0 0.0
    %4164 = vmatprep.subr.mxu0 0.0
    %4165 = vmatpush1.msra.mxu0 0.0
    %4166 = vmatprep.subr.mxu0 0.0
    %4167 = vmatpush1.msra.mxu0 0.0
    %4168 = vmatprep.subr.mxu0 %v2781
    %4169 = vmatpush1.msra.mxu0 %v2780
    %4170 = vmatprep.subr.mxu0 0.0
    %4171 = vmatpush2.msra.mxu0 0.0
    %4172 = vmatprep.subr.mxu0 0.0
    %4173 = vmatpush2.msra.mxu0 0.0
    %4174 = vmatprep.subr.mxu0 0.0
    %4175 = vmatpush2.msra.mxu0 0.0
    %4176 = vmatprep.subr.mxu0 0.0
    %4177 = vmatpush2.msra.mxu0 0.0
    %4178 = vmatprep.subr.mxu0 0.0
    %4179 = vmatpush2.msra.mxu0 0.0
    %4180 = vmatprep.subr.mxu0 0.0
    %4181 = vmatpush2.msra.mxu0 0.0
    %4182 = vmatprep.subr.mxu0 0.0
    %4183 = vmatpush2.msra.mxu0 0.0
    %4184 = vmatprep.subr.mxu0 0.0
    %4185 = vmatpush2.msra.mxu0 0.0
    %4186 = vmatprep.subr.mxu0 0.0
    %4187 = vmatpush2.msra.mxu0 0.0
    %4188 = vmatprep.subr.mxu0 0.0
    %4189 = vmatpush2.msra.mxu0 0.0
    %4190 = vmatprep.subr.mxu0 0.0
    %4191 = vmatpush2.msra.mxu0 0.0
    %4192 = vmatprep.subr.mxu0 0.0
    %4193 = vmatpush2.msra.mxu0 0.0
    %4194 = vmatprep.subr.mxu0 0.0
    %4195 = vmatpush2.msra.mxu0 0.0
    %4196 = vmatprep.subr.mxu0 0.0
    %4197 = vmatpush2.msra.mxu0 0.0
    %4198 = vmatprep.subr.mxu0 0.0
    %4199 = vmatpush2.msra.mxu0 0.0
    %4200 = vmatprep.subr.mxu0 0.0
    %4201 = vmatpush2.msra.mxu0 0.0
    %4202 = vmatprep.mubr.f32.mxu0 0.0
    %4203 = vmatmul.mubr.f32.gmra.mxu0 %v3000
    %v4204 = vpop.f32.mrf.mxu0
    %v4205 = vadd.f32 %v2929, %v4204
    %v4206 = vpop.f32.mrf.mxu0
    %v4207 = vadd.f32 %v2933, %v4206
    %4208 = vdwg.mxu0
    %4209 = vmatprep.subr.mxu0 0.0
    %4210 = vmatpush1.msra.mxu0 0.0
    %4211 = vmatprep.subr.mxu0 0.0
    %4212 = vmatpush1.msra.mxu0 0.0
    %4213 = vmatprep.subr.mxu0 0.0
    %4214 = vmatpush1.msra.mxu0 0.0
    %4215 = vmatprep.subr.mxu0 0.0
    %4216 = vmatpush1.msra.mxu0 0.0
    %4217 = vmatprep.subr.mxu0 0.0
    %4218 = vmatpush1.msra.mxu0 0.0
    %4219 = vmatprep.subr.mxu0 0.0
    %4220 = vmatpush1.msra.mxu0 0.0
    %4221 = vmatprep.subr.mxu0 0.0
    %4222 = vmatpush1.msra.mxu0 0.0
    %4223 = vmatprep.subr.mxu0 0.0
    %4224 = vmatpush1.msra.mxu0 0.0
    %4225 = vmatprep.subr.mxu0 0.0
    %4226 = vmatpush1.msra.mxu0 0.0
    %4227 = vmatprep.subr.mxu0 0.0
    %4228 = vmatpush1.msra.mxu0 0.0
    %4229 = vmatprep.subr.mxu0 0.0
    %4230 = vmatpush1.msra.mxu0 0.0
    %4231 = vmatprep.subr.mxu0 0.0
    %4232 = vmatpush1.msra.mxu0 0.0
    %4233 = vmatprep.subr.mxu0 0.0
    %4234 = vmatpush1.msra.mxu0 0.0
    %4235 = vmatprep.subr.mxu0 0.0
    %4236 = vmatpush1.msra.mxu0 0.0
    %4237 = vmatprep.subr.mxu0 0.0
    %4238 = vmatpush1.msra.mxu0 0.0
    %4239 = vmatprep.subr.mxu0 %v2783
    %4240 = vmatpush1.msra.mxu0 %v2782
    %4241 = vmatprep.subr.mxu0 0.0
    %4242 = vmatpush2.msra.mxu0 0.0
    %4243 = vmatprep.subr.mxu0 0.0
    %4244 = vmatpush2.msra.mxu0 0.0
    %4245 = vmatprep.subr.mxu0 0.0
    %4246 = vmatpush2.msra.mxu0 0.0
    %4247 = vmatprep.subr.mxu0 0.0
    %4248 = vmatpush2.msra.mxu0 0.0
    %4249 = vmatprep.subr.mxu0 0.0
    %4250 = vmatpush2.msra.mxu0 0.0
    %4251 = vmatprep.subr.mxu0 0.0
    %4252 = vmatpush2.msra.mxu0 0.0
    %4253 = vmatprep.subr.mxu0 0.0
    %4254 = vmatpush2.msra.mxu0 0.0
    %4255 = vmatprep.subr.mxu0 0.0
    %4256 = vmatpush2.msra.mxu0 0.0
    %4257 = vmatprep.subr.mxu0 0.0
    %4258 = vmatpush2.msra.mxu0 0.0
    %4259 = vmatprep.subr.mxu0 0.0
    %4260 = vmatpush2.msra.mxu0 0.0
    %4261 = vmatprep.subr.mxu0 0.0
    %4262 = vmatpush2.msra.mxu0 0.0
    %4263 = vmatprep.subr.mxu0 0.0
    %4264 = vmatpush2.msra.mxu0 0.0
    %4265 = vmatprep.subr.mxu0 0.0
    %4266 = vmatpush2.msra.mxu0 0.0
    %4267 = vmatprep.subr.mxu0 0.0
    %4268 = vmatpush2.msra.mxu0 0.0
    %4269 = vmatprep.subr.mxu0 0.0
    %4270 = vmatpush2.msra.mxu0 0.0
    %4271 = vmatprep.subr.mxu0 0.0
    %4272 = vmatpush2.msra.mxu0 0.0
    %4273 = vmatprep.mubr.f32.mxu0 0.0
    %4274 = vmatmul.mubr.f32.gmra.mxu0 %v3000
    %v4275 = vpop.f32.mrf.mxu0
    %v4276 = vadd.f32 %v2937, %v4275
    %v4277 = vpop.f32.mrf.mxu0
    %v4278 = vadd.f32 %v2941, %v4277
    %4279 = vdwg.mxu0
    %4280 = vmatprep.subr.mxu0 0.0
    %4281 = vmatpush1.msra.mxu0 0.0
    %4282 = vmatprep.subr.mxu0 0.0
    %4283 = vmatpush1.msra.mxu0 0.0
    %4284 = vmatprep.subr.mxu0 0.0
    %4285 = vmatpush1.msra.mxu0 0.0
    %4286 = vmatprep.subr.mxu0 0.0
    %4287 = vmatpush1.msra.mxu0 0.0
    %4288 = vmatprep.subr.mxu0 0.0
    %4289 = vmatpush1.msra.mxu0 0.0
    %4290 = vmatprep.subr.mxu0 0.0
    %4291 = vmatpush1.msra.mxu0 0.0
    %4292 = vmatprep.subr.mxu0 0.0
    %4293 = vmatpush1.msra.mxu0 0.0
    %4294 = vmatprep.subr.mxu0 0.0
    %4295 = vmatpush1.msra.mxu0 0.0
    %4296 = vmatprep.subr.mxu0 0.0
    %4297 = vmatpush1.msra.mxu0 0.0
    %4298 = vmatprep.subr.mxu0 0.0
    %4299 = vmatpush1.msra.mxu0 0.0
    %4300 = vmatprep.subr.mxu0 0.0
    %4301 = vmatpush1.msra.mxu0 0.0
    %4302 = vmatprep.subr.mxu0 0.0
    %4303 = vmatpush1.msra.mxu0 0.0
    %4304 = vmatprep.subr.mxu0 0.0
    %4305 = vmatpush1.msra.mxu0 0.0
    %4306 = vmatprep.subr.mxu0 0.0
    %4307 = vmatpush1.msra.mxu0 0.0
    %4308 = vmatprep.subr.mxu0 0.0
    %4309 = vmatpush1.msra.mxu0 0.0
    %4310 = vmatprep.subr.mxu0 %v2785
    %4311 = vmatpush1.msra.mxu0 %v2784
    %4312 = vmatprep.subr.mxu0 0.0
    %4313 = vmatpush2.msra.mxu0 0.0
    %4314 = vmatprep.subr.mxu0 0.0
    %4315 = vmatpush2.msra.mxu0 0.0
    %4316 = vmatprep.subr.mxu0 0.0
    %4317 = vmatpush2.msra.mxu0 0.0
    %4318 = vmatprep.subr.mxu0 0.0
    %4319 = vmatpush2.msra.mxu0 0.0
    %4320 = vmatprep.subr.mxu0 0.0
    %4321 = vmatpush2.msra.mxu0 0.0
    %4322 = vmatprep.subr.mxu0 0.0
    %4323 = vmatpush2.msra.mxu0 0.0
    %4324 = vmatprep.subr.mxu0 0.0
    %4325 = vmatpush2.msra.mxu0 0.0
    %4326 = vmatprep.subr.mxu0 0.0
    %4327 = vmatpush2.msra.mxu0 0.0
    %4328 = vmatprep.subr.mxu0 0.0
    %4329 = vmatpush2.msra.mxu0 0.0
    %4330 = vmatprep.subr.mxu0 0.0
    %4331 = vmatpush2.msra.mxu0 0.0
    %4332 = vmatprep.subr.mxu0 0.0
    %4333 = vmatpush2.msra.mxu0 0.0
    %4334 = vmatprep.subr.mxu0 0.0
    %4335 = vmatpush2.msra.mxu0 0.0
    %4336 = vmatprep.subr.mxu0 0.0
    %4337 = vmatpush2.msra.mxu0 0.0
    %4338 = vmatprep.subr.mxu0 0.0
    %4339 = vmatpush2.msra.mxu0 0.0
    %4340 = vmatprep.subr.mxu0 0.0
    %4341 = vmatpush2.msra.mxu0 0.0
    %4342 = vmatprep.subr.mxu0 0.0
    %4343 = vmatpush2.msra.mxu0 0.0
    %4344 = vmatprep.mubr.f32.mxu0 0.0
    %4345 = vmatmul.mubr.f32.gmra.mxu0 %v3000
    %v4346 = vpop.f32.mrf.mxu0
    %v4347 = vadd.f32 %v2945, %v4346
    %v4348 = vpop.f32.mrf.mxu0
    %v4349 = vadd.f32 %v2949, %v4348
    %4350 = vdwg.mxu0
    %4351 = vmatprep.subr.mxu0 0.0
    %4352 = vmatpush1.msra.mxu0 0.0
    %4353 = vmatprep.subr.mxu0 0.0
    %4354 = vmatpush1.msra.mxu0 0.0
    %4355 = vmatprep.subr.mxu0 0.0
    %4356 = vmatpush1.msra.mxu0 0.0
    %4357 = vmatprep.subr.mxu0 0.0
    %4358 = vmatpush1.msra.mxu0 0.0
    %4359 = vmatprep.subr.mxu0 0.0
    %4360 = vmatpush1.msra.mxu0 0.0
    %4361 = vmatprep.subr.mxu0 0.0
    %4362 = vmatpush1.msra.mxu0 0.0
    %4363 = vmatprep.subr.mxu0 0.0
    %4364 = vmatpush1.msra.mxu0 0.0
    %4365 = vmatprep.subr.mxu0 0.0
    %4366 = vmatpush1.msra.mxu0 0.0
    %4367 = vmatprep.subr.mxu0 0.0
    %4368 = vmatpush1.msra.mxu0 0.0
    %4369 = vmatprep.subr.mxu0 0.0
    %4370 = vmatpush1.msra.mxu0 0.0
    %4371 = vmatprep.subr.mxu0 0.0
    %4372 = vmatpush1.msra.mxu0 0.0
    %4373 = vmatprep.subr.mxu0 0.0
    %4374 = vmatpush1.msra.mxu0 0.0
    %4375 = vmatprep.subr.mxu0 0.0
    %4376 = vmatpush1.msra.mxu0 0.0
    %4377 = vmatprep.subr.mxu0 0.0
    %4378 = vmatpush1.msra.mxu0 0.0
    %4379 = vmatprep.subr.mxu0 0.0
    %4380 = vmatpush1.msra.mxu0 0.0
    %4381 = vmatprep.subr.mxu0 %v2787
    %4382 = vmatpush1.msra.mxu0 %v2786
    %4383 = vmatprep.subr.mxu0 0.0
    %4384 = vmatpush2.msra.mxu0 0.0
    %4385 = vmatprep.subr.mxu0 0.0
    %4386 = vmatpush2.msra.mxu0 0.0
    %4387 = vmatprep.subr.mxu0 0.0
    %4388 = vmatpush2.msra.mxu0 0.0
    %4389 = vmatprep.subr.mxu0 0.0
    %4390 = vmatpush2.msra.mxu0 0.0
    %4391 = vmatprep.subr.mxu0 0.0
    %4392 = vmatpush2.msra.mxu0 0.0
    %4393 = vmatprep.subr.mxu0 0.0
    %4394 = vmatpush2.msra.mxu0 0.0
    %4395 = vmatprep.subr.mxu0 0.0
    %4396 = vmatpush2.msra.mxu0 0.0
    %4397 = vmatprep.subr.mxu0 0.0
    %4398 = vmatpush2.msra.mxu0 0.0
    %4399 = vmatprep.subr.mxu0 0.0
    %4400 = vmatpush2.msra.mxu0 0.0
    %4401 = vmatprep.subr.mxu0 0.0
    %4402 = vmatpush2.msra.mxu0 0.0
    %4403 = vmatprep.subr.mxu0 0.0
    %4404 = vmatpush2.msra.mxu0 0.0
    %4405 = vmatprep.subr.mxu0 0.0
    %4406 = vmatpush2.msra.mxu0 0.0
    %4407 = vmatprep.subr.mxu0 0.0
    %4408 = vmatpush2.msra.mxu0 0.0
    %4409 = vmatprep.subr.mxu0 0.0
    %4410 = vmatpush2.msra.mxu0 0.0
    %4411 = vmatprep.subr.mxu0 0.0
    %4412 = vmatpush2.msra.mxu0 0.0
    %4413 = vmatprep.subr.mxu0 0.0
    %4414 = vmatpush2.msra.mxu0 0.0
    %4415 = vmatprep.mubr.f32.mxu0 0.0
    %4416 = vmatmul.mubr.f32.gmra.mxu0 %v3000
    %v4417 = vpop.f32.mrf.mxu0
    %v4418 = vadd.f32 %v2953, %v4417
    %v4419 = vpop.f32.mrf.mxu0
    %v4420 = vadd.f32 %v2957, %v4419
    %4421 = vdwg.mxu0
    %v4422 = vmul.f32 %v1394, %v3069
    %v4423 = vmul.f32 %v1396, %v3071
    %v4424 = vmul.f32 %v1465, %v3140
    %v4425 = vmul.f32 %v1467, %v3142
    %v4426 = vmul.f32 %v1536, %v3211
    %v4427 = vmul.f32 %v1538, %v3213
    %v4428 = vmul.f32 %v1607, %v3282
    %v4429 = vmul.f32 %v1609, %v3284
    %v4430 = vmul.f32 %v1678, %v3353
    %v4431 = vmul.f32 %v1680, %v3355
    %v4432 = vmul.f32 %v1749, %v3424
    %v4433 = vmul.f32 %v1751, %v3426
    %v4434 = vmul.f32 %v1820, %v3495
    %v4435 = vmul.f32 %v1822, %v3497
    %v4436 = vmul.f32 %v1891, %v3566
    %v4437 = vmul.f32 %v1893, %v3568
    %v4438 = vmul.f32 %v1962, %v3637
    %v4439 = vmul.f32 %v1964, %v3639
    %v4440 = vmul.f32 %v2033, %v3708
    %v4441 = vmul.f32 %v2035, %v3710
    %v4442 = vmul.f32 %v2104, %v3779
    %v4443 = vmul.f32 %v2106, %v3781
    %v4444 = vmul.f32 %v2175, %v3850
    %v4445 = vmul.f32 %v2177, %v3852
    %v4446 = vmul.f32 %v2246, %v3921
    %v4447 = vmul.f32 %v2248, %v3923
    %v4448 = vmul.f32 %v2317, %v3992
    %v4449 = vmul.f32 %v2319, %v3994
    %v4450 = vmul.f32 %v2388, %v4063
    %v4451 = vmul.f32 %v2390, %v4065
    %v4452 = vmul.f32 %v2459, %v4134
    %v4453 = vmul.f32 %v2461, %v4136
    %v4454 = vmul.f32 %v2530, %v4205
    %v4455 = vmul.f32 %v2532, %v4207
    %v4456 = vmul.f32 %v2601, %v4276
    %v4457 = vmul.f32 %v2603, %v4278
    %v4458 = vmul.f32 %v2672, %v4347
    %v4459 = vmul.f32 %v2674, %v4349
    %v4460 = vmul.f32 %v2743, %v4418
    %v4461 = vmul.f32 %v2745, %v4420
    %v4462 = vadd.f32 %v4422, %v4430
    %v4463 = vadd.f32 %v4423, %v4431
    %v4464 = vadd.f32 %v4424, %v4432
    %v4465 = vadd.f32 %v4425, %v4433
    %v4466 = vadd.f32 %v4426, %v4434
    %v4467 = vadd.f32 %v4427, %v4435
    %v4468 = vadd.f32 %v4428, %v4436
    %v4469 = vadd.f32 %v4429, %v4437
    %v4470 = vadd.f32 %v4462, %v4438
    %v4471 = vadd.f32 %v4463, %v4439
    %v4472 = vadd.f32 %v4464, %v4440
    %v4473 = vadd.f32 %v4465, %v4441
    %v4474 = vadd.f32 %v4466, %v4442
    %v4475 = vadd.f32 %v4467, %v4443
    %v4476 = vadd.f32 %v4468, %v4444
    %v4477 = vadd.f32 %v4469, %v4445
    %v4478 = vadd.f32 %v4470, %v4446
    %v4479 = vadd.f32 %v4471, %v4447
    %v4480 = vadd.f32 %v4472, %v4448
    %v4481 = vadd.f32 %v4473, %v4449
    %v4482 = vadd.f32 %v4474, %v4450
    %v4483 = vadd.f32 %v4475, %v4451
    %v4484 = vadd.f32 %v4476, %v4452
    %v4485 = vadd.f32 %v4477, %v4453
    %v4486 = vadd.f32 %v4478, %v4454
    %v4487 = vadd.f32 %v4479, %v4455
    %v4488 = vadd.f32 %v4480, %v4456
    %v4489 = vadd.f32 %v4481, %v4457
    %v4490 = vadd.f32 %v4482, %v4458
    %v4491 = vadd.f32 %v4483, %v4459
    %v4492 = vadd.f32 %v4484, %v4460
    %v4493 = vadd.f32 %v4485, %v4461
    %v4494 = vmax.f32 %v4486, 0.0
    %v4495 = vmax.f32 %v4487, 0.0
    %v4496 = vmax.f32 %v4488, 0.0
    %v4497 = vmax.f32 %v4489, 0.0
    %v4498 = vmax.f32 %v4490, 0.0
    %v4499 = vmax.f32 %v4491, 0.0
    %v4500 = vmax.f32 %v4492, 0.0
    %v4501 = vmax.f32 %v4493, 0.0
    %v4502 = vrsqrt.pop %v4494
    %v4503 = vmul.f32 %v4494, %v4502
    %vm4504 = vcmp.eq.f32.partialorder %v4494, inf
    %v4505 = vsel %vm4504, %v4494, %v4503
    %vm4506 = vcmp.eq.f32.partialorder %v4494, 0.0
    %v4507 = vand.u32 %v4494, 2147483648
    %v4508 = vsel %vm4506, %v4507, %v4505
    %v4509 = vrsqrt.pop %v4495
    %v4510 = vmul.f32 %v4495, %v4509
    %vm4511 = vcmp.eq.f32.partialorder %v4495, inf
    %v4512 = vsel %vm4511, %v4495, %v4510
    %vm4513 = vcmp.eq.f32.partialorder %v4495, 0.0
    %v4514 = vand.u32 %v4495, 2147483648
    %v4515 = vsel %vm4513, %v4514, %v4512
    %v4516 = vrsqrt.pop %v4496
    %v4517 = vmul.f32 %v4496, %v4516
    %vm4518 = vcmp.eq.f32.partialorder %v4496, inf
    %v4519 = vsel %vm4518, %v4496, %v4517
    %vm4520 = vcmp.eq.f32.partialorder %v4496, 0.0
    %v4521 = vand.u32 %v4496, 2147483648
    %v4522 = vsel %vm4520, %v4521, %v4519
    %v4523 = vrsqrt.pop %v4497
    %v4524 = vmul.f32 %v4497, %v4523
    %vm4525 = vcmp.eq.f32.partialorder %v4497, inf
    %v4526 = vsel %vm4525, %v4497, %v4524
    %vm4527 = vcmp.eq.f32.partialorder %v4497, 0.0
    %v4528 = vand.u32 %v4497, 2147483648
    %v4529 = vsel %vm4527, %v4528, %v4526
    %v4530 = vrsqrt.pop %v4498
    %v4531 = vmul.f32 %v4498, %v4530
    %vm4532 = vcmp.eq.f32.partialorder %v4498, inf
    %v4533 = vsel %vm4532, %v4498, %v4531
    %vm4534 = vcmp.eq.f32.partialorder %v4498, 0.0
    %v4535 = vand.u32 %v4498, 2147483648
    %v4536 = vsel %vm4534, %v4535, %v4533
    %v4537 = vrsqrt.pop %v4499
    %v4538 = vmul.f32 %v4499, %v4537
    %vm4539 = vcmp.eq.f32.partialorder %v4499, inf
    %v4540 = vsel %vm4539, %v4499, %v4538
    %vm4541 = vcmp.eq.f32.partialorder %v4499, 0.0
    %v4542 = vand.u32 %v4499, 2147483648
    %v4543 = vsel %vm4541, %v4542, %v4540
    %v4544 = vrsqrt.pop %v4500
    %v4545 = vmul.f32 %v4500, %v4544
    %vm4546 = vcmp.eq.f32.partialorder %v4500, inf
    %v4547 = vsel %vm4546, %v4500, %v4545
    %vm4548 = vcmp.eq.f32.partialorder %v4500, 0.0
    %v4549 = vand.u32 %v4500, 2147483648
    %v4550 = vsel %vm4548, %v4549, %v4547
    %v4551 = vrsqrt.pop %v4501
    %v4552 = vmul.f32 %v4501, %v4551
    %vm4553 = vcmp.eq.f32.partialorder %v4501, inf
    %v4554 = vsel %vm4553, %v4501, %v4552
    %vm4555 = vcmp.eq.f32.partialorder %v4501, 0.0
    %v4556 = vand.u32 %v4501, 2147483648
    %v4557 = vsel %vm4555, %v4556, %v4554
    %v4558 = vsub.f32 0.0, %v4486
    %v4559 = vsub.f32 0.0, %v4487
    %v4560 = vsub.f32 0.0, %v4488
    %v4561 = vsub.f32 0.0, %v4489
    %v4562 = vsub.f32 0.0, %v4490
    %v4563 = vsub.f32 0.0, %v4491
    %v4564 = vsub.f32 0.0, %v4492
    %v4565 = vsub.f32 0.0, %v4493
    %v4566 = vmax.f32 %v4558, 0.0
    %v4567 = vmax.f32 %v4559, 0.0
    %v4568 = vmax.f32 %v4560, 0.0
    %v4569 = vmax.f32 %v4561, 0.0
    %v4570 = vmax.f32 %v4562, 0.0
    %v4571 = vmax.f32 %v4563, 0.0
    %v4572 = vmax.f32 %v4564, 0.0
    %v4573 = vmax.f32 %v4565, 0.0
    %v4574 = vrsqrt.pop %v4566
    %v4575 = vmul.f32 %v4566, %v4574
    %vm4576 = vcmp.eq.f32.partialorder %v4566, inf
    %v4577 = vsel %vm4576, %v4566, %v4575
    %vm4578 = vcmp.eq.f32.partialorder %v4566, 0.0
    %v4579 = vand.u32 %v4566, 2147483648
    %v4580 = vsel %vm4578, %v4579, %v4577
    %v4581 = vrsqrt.pop %v4567
    %v4582 = vmul.f32 %v4567, %v4581
    %vm4583 = vcmp.eq.f32.partialorder %v4567, inf
    %v4584 = vsel %vm4583, %v4567, %v4582
    %vm4585 = vcmp.eq.f32.partialorder %v4567, 0.0
    %v4586 = vand.u32 %v4567, 2147483648
    %v4587 = vsel %vm4585, %v4586, %v4584
    %v4588 = vrsqrt.pop %v4568
    %v4589 = vmul.f32 %v4568, %v4588
    %vm4590 = vcmp.eq.f32.partialorder %v4568, inf
    %v4591 = vsel %vm4590, %v4568, %v4589
    %vm4592 = vcmp.eq.f32.partialorder %v4568, 0.0
    %v4593 = vand.u32 %v4568, 2147483648
    %v4594 = vsel %vm4592, %v4593, %v4591
    %v4595 = vrsqrt.pop %v4569
    %v4596 = vmul.f32 %v4569, %v4595
    %vm4597 = vcmp.eq.f32.partialorder %v4569, inf
    %v4598 = vsel %vm4597, %v4569, %v4596
    %vm4599 = vcmp.eq.f32.partialorder %v4569, 0.0
    %v4600 = vand.u32 %v4569, 2147483648
    %v4601 = vsel %vm4599, %v4600, %v4598
    %v4602 = vrsqrt.pop %v4570
    %v4603 = vmul.f32 %v4570, %v4602
    %vm4604 = vcmp.eq.f32.partialorder %v4570, inf
    %v4605 = vsel %vm4604, %v4570, %v4603
    %vm4606 = vcmp.eq.f32.partialorder %v4570, 0.0
    %v4607 = vand.u32 %v4570, 2147483648
    %v4608 = vsel %vm4606, %v4607, %v4605
    %v4609 = vrsqrt.pop %v4571
    %v4610 = vmul.f32 %v4571, %v4609
    %vm4611 = vcmp.eq.f32.partialorder %v4571, inf
    %v4612 = vsel %vm4611, %v4571, %v4610
    %vm4613 = vcmp.eq.f32.partialorder %v4571, 0.0
    %v4614 = vand.u32 %v4571, 2147483648
    %v4615 = vsel %vm4613, %v4614, %v4612
    %v4616 = vrsqrt.pop %v4572
    %v4617 = vmul.f32 %v4572, %v4616
    %vm4618 = vcmp.eq.f32.partialorder %v4572, inf
    %v4619 = vsel %vm4618, %v4572, %v4617
    %vm4620 = vcmp.eq.f32.partialorder %v4572, 0.0
    %v4621 = vand.u32 %v4572, 2147483648
    %v4622 = vsel %vm4620, %v4621, %v4619
    %v4623 = vrsqrt.pop %v4573
    %v4624 = vmul.f32 %v4573, %v4623
    %vm4625 = vcmp.eq.f32.partialorder %v4573, inf
    %v4626 = vsel %vm4625, %v4573, %v4624
    %vm4627 = vcmp.eq.f32.partialorder %v4573, 0.0
    %v4628 = vand.u32 %v4573, 2147483648
    %v4629 = vsel %vm4627, %v4628, %v4626
    %v4630 = vsub.f32 %v4508, %v4580
    %v4631 = vsub.f32 %v4515, %v4587
    %v4632 = vsub.f32 %v4522, %v4594
    %v4633 = vsub.f32 %v4529, %v4601
    %v4634 = vsub.f32 %v4536, %v4608
    %v4635 = vsub.f32 %v4543, %v4615
    %v4636 = vsub.f32 %v4550, %v4622
    %v4637 = vsub.f32 %v4557, %v4629
    %v4638 = vmul.f32 %v4630, %v4630
    %v4639 = vmul.f32 %v4631, %v4631
    %v4640 = vmul.f32 %v4632, %v4632
    %v4641 = vmul.f32 %v4633, %v4633
    %v4642 = vmul.f32 %v4634, %v4634
    %v4643 = vmul.f32 %v4635, %v4635
    %v4644 = vmul.f32 %v4636, %v4636
    %v4645 = vmul.f32 %v4637, %v4637
    %v4646 = vadd.f32 %v4638, %v4639
    %v4647 = vadd.f32 %v4646, %v4640
    %v4648 = vadd.f32 %v4647, %v4641
    %v4649 = vadd.f32 %v4648, %v4642
    %v4650 = vadd.f32 %v4649, %v4643
    %v4651 = vadd.f32 %v4650, %v4644
    %v4652 = vadd.f32 %v4651, %v4645
    %4653 = vadd.xlane.f32.xlu0 %v4652
    %v4654 = vpop.xlane.xlu0 %4653
    %v4655 = vrsqrt.pop %v4654
    %v4656 = vmul.f32 %v4654, %v4655
    %vm4657 = vcmp.eq.f32.partialorder %v4654, inf
    %v4658 = vsel %vm4657, %v4654, %v4656
    %vm4659 = vcmp.eq.f32.partialorder %v4654, 0.0
    %v4660 = vand.u32 %v4654, 2147483648
    %v4661 = vsel %vm4659, %v4660, %v4658
    %v4662 = vmax.f32 %v4661, 1e-12
    %v4663 = vrcp.pop %v4662
    %v4664 = vmul.f32 %v4630, %v4663
    %v4665 = vmul.f32 %v4631, %v4663
    %v4666 = vmul.f32 %v4632, %v4663
    %v4667 = vmul.f32 %v4633, %v4663
    %v4668 = vmul.f32 %v4634, %v4663
    %v4669 = vmul.f32 %v4635, %v4663
    %v4670 = vmul.f32 %v4636, %v4663
    %v4671 = vmul.f32 %v4637, %v4663
    %v4672 = vld [vmem:[#allocation14] sm:$0xff]
    %v4673 = vld [vmem:[#allocation14 + $0x8] sm:$0xff]
    %v4674 = vld [vmem:[#allocation14 + $0x10] sm:$0xff]
    %v4675 = vld [vmem:[#allocation14 + $0x18] sm:$0xff]
    %v4676 = vld [vmem:[#allocation14 + $0x20] sm:$0xff]
    %v4677 = vld [vmem:[#allocation14 + $0x28] sm:$0xff]
    %v4678 = vld [vmem:[#allocation14 + $0x30] sm:$0xff]
    %v4679 = vld [vmem:[#allocation14 + $0x38] sm:$0xff]
    %v4680 = vld [vmem:[#allocation14 + $0x40] sm:$0xff]
    %v4681 = vld [vmem:[#allocation14 + $0x48] sm:$0xff]
    %v4682 = vld [vmem:[#allocation14 + $0x50] sm:$0xff]
    %v4683 = vld [vmem:[#allocation14 + $0x58] sm:$0xff]
    %v4684 = vld [vmem:[#allocation14 + $0x60] sm:$0xff]
    %v4685 = vld [vmem:[#allocation14 + $0x68] sm:$0xff]
    %v4686 = vld [vmem:[#allocation14 + $0x70] sm:$0xff]
    %v4687 = vld [vmem:[#allocation14 + $0x78] sm:$0xff]
    %v4688 = vld [vmem:[#allocation14 + $0x80] sm:$0xff]
    %v4689 = vld [vmem:[#allocation14 + $0x88] sm:$0xff]
    %v4690 = vld [vmem:[#allocation14 + $0x90] sm:$0xff]
    %v4691 = vld [vmem:[#allocation14 + $0x98] sm:$0xff]
    %v4692 = vld [vmem:[#allocation14 + $0xa0] sm:$0xff]
    %v4693 = vld [vmem:[#allocation14 + $0xa8] sm:$0xff]
    %v4694 = vld [vmem:[#allocation14 + $0xb0] sm:$0xff]
    %v4695 = vld [vmem:[#allocation14 + $0xb8] sm:$0xff]
    %v4696 = vld [vmem:[#allocation14 + $0xc0] sm:$0xff]
    %v4697 = vld [vmem:[#allocation14 + $0xc8] sm:$0xff]
    %v4698 = vld [vmem:[#allocation14 + $0xd0] sm:$0xff]
    %v4699 = vld [vmem:[#allocation14 + $0xd8] sm:$0xff]
    %v4700 = vld [vmem:[#allocation14 + $0xe0] sm:$0xff]
    %v4701 = vld [vmem:[#allocation14 + $0xe8] sm:$0xff]
    %v4702 = vld [vmem:[#allocation14 + $0xf0] sm:$0xff]
    %v4703 = vld [vmem:[#allocation14 + $0xf8] sm:$0xff]
    %v4704 = vld [vmem:[#allocation14 + $0x100] sm:$0xff]
    %v4705 = vld [vmem:[#allocation14 + $0x108] sm:$0xff]
    %v4706 = vld [vmem:[#allocation14 + $0x110] sm:$0xff]
    %v4707 = vld [vmem:[#allocation14 + $0x118] sm:$0xff]
    %v4708 = vld [vmem:[#allocation14 + $0x120] sm:$0xff]
    %v4709 = vld [vmem:[#allocation14 + $0x128] sm:$0xff]
    %v4710 = vld [vmem:[#allocation14 + $0x130] sm:$0xff]
    %v4711 = vld [vmem:[#allocation14 + $0x138] sm:$0xff]
    %v4712 = vld [vmem:[#allocation14 + $0x140] sm:$0xff]
    %v4713 = vld [vmem:[#allocation14 + $0x148] sm:$0xff]
    %v4714 = vld [vmem:[#allocation14 + $0x150] sm:$0xff]
    %v4715 = vld [vmem:[#allocation14 + $0x158] sm:$0xff]
    %v4716 = vld [vmem:[#allocation14 + $0x160] sm:$0xff]
    %v4717 = vld [vmem:[#allocation14 + $0x168] sm:$0xff]
    %v4718 = vld [vmem:[#allocation14 + $0x170] sm:$0xff]
    %v4719 = vld [vmem:[#allocation14 + $0x178] sm:$0xff]
    %v4720 = vld [vmem:[#allocation14 + $0x180] sm:$0xff]
    %v4721 = vld [vmem:[#allocation14 + $0x188] sm:$0xff]
    %v4722 = vld [vmem:[#allocation14 + $0x190] sm:$0xff]
    %v4723 = vld [vmem:[#allocation14 + $0x198] sm:$0xff]
    %v4724 = vld [vmem:[#allocation14 + $0x1a0] sm:$0xff]
    %v4725 = vld [vmem:[#allocation14 + $0x1a8] sm:$0xff]
    %v4726 = vld [vmem:[#allocation14 + $0x1b0] sm:$0xff]
    %v4727 = vld [vmem:[#allocation14 + $0x1b8] sm:$0xff]
    %v4728 = vld [vmem:[#allocation14 + $0x1c0] sm:$0xff]
    %v4729 = vld [vmem:[#allocation14 + $0x1c8] sm:$0xff]
    %v4730 = vld [vmem:[#allocation14 + $0x1d0] sm:$0xff]
    %v4731 = vld [vmem:[#allocation14 + $0x1d8] sm:$0xff]
    %v4732 = vld [vmem:[#allocation14 + $0x1e0] sm:$0xff]
    %v4733 = vld [vmem:[#allocation14 + $0x1e8] sm:$0xff]
    %v4734 = vld [vmem:[#allocation14 + $0x1f0] sm:$0xff]
    %v4735 = vld [vmem:[#allocation14 + $0x1f8] sm:$0xff]
    %v4736 = vld [vmem:[#allocation14 + $0x200] sm:$0xff]
    %v4737 = vld [vmem:[#allocation14 + $0x208] sm:$0xff]
    %v4738 = vld [vmem:[#allocation14 + $0x210] sm:$0xff]
    %v4739 = vld [vmem:[#allocation14 + $0x218] sm:$0xff]
    %v4740 = vld [vmem:[#allocation14 + $0x220] sm:$0xff]
    %v4741 = vld [vmem:[#allocation14 + $0x228] sm:$0xff]
    %v4742 = vld [vmem:[#allocation14 + $0x230] sm:$0xff]
    %v4743 = vld [vmem:[#allocation14 + $0x238] sm:$0xff]
    %v4744 = vld [vmem:[#allocation14 + $0x240] sm:$0xff]
    %v4745 = vld [vmem:[#allocation14 + $0x248] sm:$0xff]
    %v4746 = vld [vmem:[#allocation14 + $0x250] sm:$0xff]
    %v4747 = vld [vmem:[#allocation14 + $0x258] sm:$0xff]
    %v4748 = vld [vmem:[#allocation14 + $0x260] sm:$0xff]
    %v4749 = vld [vmem:[#allocation14 + $0x268] sm:$0xff]
    %v4750 = vld [vmem:[#allocation14 + $0x270] sm:$0xff]
    %v4751 = vld [vmem:[#allocation14 + $0x278] sm:$0xff]
    %v4752 = vld [vmem:[#allocation14 + $0x280] sm:$0xff]
    %v4753 = vld [vmem:[#allocation14 + $0x288] sm:$0xff]
    %v4754 = vld [vmem:[#allocation14 + $0x290] sm:$0xff]
    %v4755 = vld [vmem:[#allocation14 + $0x298] sm:$0xff]
    %v4756 = vld [vmem:[#allocation14 + $0x2a0] sm:$0xff]
    %v4757 = vld [vmem:[#allocation14 + $0x2a8] sm:$0xff]
    %v4758 = vld [vmem:[#allocation14 + $0x2b0] sm:$0xff]
    %v4759 = vld [vmem:[#allocation14 + $0x2b8] sm:$0xff]
    %v4760 = vld [vmem:[#allocation14 + $0x2c0] sm:$0xff]
    %v4761 = vld [vmem:[#allocation14 + $0x2c8] sm:$0xff]
    %v4762 = vld [vmem:[#allocation14 + $0x2d0] sm:$0xff]
    %v4763 = vld [vmem:[#allocation14 + $0x2d8] sm:$0xff]
    %v4764 = vld [vmem:[#allocation14 + $0x2e0] sm:$0xff]
    %v4765 = vld [vmem:[#allocation14 + $0x2e8] sm:$0xff]
    %v4766 = vld [vmem:[#allocation14 + $0x2f0] sm:$0xff]
    %v4767 = vld [vmem:[#allocation14 + $0x2f8] sm:$0xff]
    %v4768 = vld [vmem:[#allocation14 + $0x300] sm:$0xff]
    %v4769 = vld [vmem:[#allocation14 + $0x308] sm:$0xff]
    %v4770 = vld [vmem:[#allocation14 + $0x310] sm:$0xff]
    %v4771 = vld [vmem:[#allocation14 + $0x318] sm:$0xff]
    %v4772 = vld [vmem:[#allocation14 + $0x320] sm:$0xff]
    %v4773 = vld [vmem:[#allocation14 + $0x328] sm:$0xff]
    %v4774 = vld [vmem:[#allocation14 + $0x330] sm:$0xff]
    %v4775 = vld [vmem:[#allocation14 + $0x338] sm:$0xff]
    %v4776 = vld [vmem:[#allocation14 + $0x340] sm:$0xff]
    %v4777 = vld [vmem:[#allocation14 + $0x348] sm:$0xff]
    %v4778 = vld [vmem:[#allocation14 + $0x350] sm:$0xff]
    %v4779 = vld [vmem:[#allocation14 + $0x358] sm:$0xff]
    %v4780 = vld [vmem:[#allocation14 + $0x360] sm:$0xff]
    %v4781 = vld [vmem:[#allocation14 + $0x368] sm:$0xff]
    %v4782 = vld [vmem:[#allocation14 + $0x370] sm:$0xff]
    %v4783 = vld [vmem:[#allocation14 + $0x378] sm:$0xff]
    %v4784 = vld [vmem:[#allocation14 + $0x380] sm:$0xff]
    %v4785 = vld [vmem:[#allocation14 + $0x388] sm:$0xff]
    %v4786 = vld [vmem:[#allocation14 + $0x390] sm:$0xff]
    %v4787 = vld [vmem:[#allocation14 + $0x398] sm:$0xff]
    %v4788 = vld [vmem:[#allocation14 + $0x3a0] sm:$0xff]
    %v4789 = vld [vmem:[#allocation14 + $0x3a8] sm:$0xff]
    %v4790 = vld [vmem:[#allocation14 + $0x3b0] sm:$0xff]
    %v4791 = vld [vmem:[#allocation14 + $0x3b8] sm:$0xff]
    %v4792 = vld [vmem:[#allocation14 + $0x3c0] sm:$0xff]
    %v4793 = vld [vmem:[#allocation14 + $0x3c8] sm:$0xff]
    %v4794 = vld [vmem:[#allocation14 + $0x3d0] sm:$0xff]
    %v4795 = vld [vmem:[#allocation14 + $0x3d8] sm:$0xff]
    %v4796 = vld [vmem:[#allocation14 + $0x3e0] sm:$0xff]
    %v4797 = vld [vmem:[#allocation14 + $0x3e8] sm:$0xff]
    %v4798 = vld [vmem:[#allocation14 + $0x3f0] sm:$0xff]
    %v4799 = vld [vmem:[#allocation14 + $0x3f8] sm:$0xff]
    %v4800 = vld [vmem:[%s8] sm:$0x1]
    %v4802 = vlaneseq
    %v4803 = vshrl.u32 %v4802, 7
    %v4804 = vsub.s32 0, %v4803
    %v4805 = vrot.slane %v4800, %v4804
    %4807 = vmatprep.subr.mxu0 0.0
    %4808 = vmatpush1.msra.mxu0 %v4687
    %4809 = vmatprep.subr.mxu0 0.0
    %4810 = vmatpush1.msra.mxu0 %v4686
    %4811 = vmatprep.subr.mxu0 0.0
    %4812 = vmatpush1.msra.mxu0 %v4685
    %4813 = vmatprep.subr.mxu0 0.0
    %4814 = vmatpush1.msra.mxu0 %v4684
    %4815 = vmatprep.subr.mxu0 0.0
    %4816 = vmatpush1.msra.mxu0 %v4683
    %4817 = vmatprep.subr.mxu0 0.0
    %4818 = vmatpush1.msra.mxu0 %v4682
    %4819 = vmatprep.subr.mxu0 0.0
    %4820 = vmatpush1.msra.mxu0 %v4681
    %4821 = vmatprep.subr.mxu0 0.0
    %4822 = vmatpush1.msra.mxu0 %v4680
    %4823 = vmatprep.subr.mxu0 0.0
    %4824 = vmatpush1.msra.mxu0 %v4679
    %4825 = vmatprep.subr.mxu0 0.0
    %4826 = vmatpush1.msra.mxu0 %v4678
    %4827 = vmatprep.subr.mxu0 0.0
    %4828 = vmatpush1.msra.mxu0 %v4677
    %4829 = vmatprep.subr.mxu0 0.0
    %4830 = vmatpush1.msra.mxu0 %v4676
    %4831 = vmatprep.subr.mxu0 0.0
    %4832 = vmatpush1.msra.mxu0 %v4675
    %4833 = vmatprep.subr.mxu0 0.0
    %4834 = vmatpush1.msra.mxu0 %v4674
    %4835 = vmatprep.subr.mxu0 0.0
    %4836 = vmatpush1.msra.mxu0 %v4673
    %4837 = vmatprep.subr.mxu0 0.0
    %4838 = vmatpush1.msra.mxu0 %v4672
    %4839 = vmatprep.subr.mxu0 0.0
    %4840 = vmatpush2.msra.mxu0 %v4703
    %4841 = vmatprep.subr.mxu0 0.0
    %4842 = vmatpush2.msra.mxu0 %v4702
    %4843 = vmatprep.subr.mxu0 0.0
    %4844 = vmatpush2.msra.mxu0 %v4701
    %4845 = vmatprep.subr.mxu0 0.0
    %4846 = vmatpush2.msra.mxu0 %v4700
    %4847 = vmatprep.subr.mxu0 0.0
    %4848 = vmatpush2.msra.mxu0 %v4699
    %4849 = vmatprep.subr.mxu0 0.0
    %4850 = vmatpush2.msra.mxu0 %v4698
    %4851 = vmatprep.subr.mxu0 0.0
    %4852 = vmatpush2.msra.mxu0 %v4697
    %4853 = vmatprep.subr.mxu0 0.0
    %4854 = vmatpush2.msra.mxu0 %v4696
    %4855 = vmatprep.subr.mxu0 0.0
    %4856 = vmatpush2.msra.mxu0 %v4695
    %4857 = vmatprep.subr.mxu0 0.0
    %4858 = vmatpush2.msra.mxu0 %v4694
    %4859 = vmatprep.subr.mxu0 0.0
    %4860 = vmatpush2.msra.mxu0 %v4693
    %4861 = vmatprep.subr.mxu0 0.0
    %4862 = vmatpush2.msra.mxu0 %v4692
    %4863 = vmatprep.subr.mxu0 0.0
    %4864 = vmatpush2.msra.mxu0 %v4691
    %4865 = vmatprep.subr.mxu0 0.0
    %4866 = vmatpush2.msra.mxu0 %v4690
    %4867 = vmatprep.subr.mxu0 0.0
    %4868 = vmatpush2.msra.mxu0 %v4689
    %4869 = vmatprep.subr.mxu0 0.0
    %4870 = vmatpush2.msra.mxu0 %v4688
    %4871 = vmatprep.mubr.f32.mxu0 %v4665
    %4872 = vmatmul.mubr.f32.gmra.mxu0 %v4664
    %v4873 = vpop.f32.mrf.mxu0
    %v4874 = vadd.f32 %v4805, %v4873
    %v4875 = vpop.f32.mrf.mxu0
    %4876 = vdwg.mxu0
    %4877 = vmatprep.subr.mxu0 0.0
    %4878 = vmatpush1.msra.mxu0 %v4719
    %4879 = vmatprep.subr.mxu0 0.0
    %4880 = vmatpush1.msra.mxu0 %v4718
    %4881 = vmatprep.subr.mxu0 0.0
    %4882 = vmatpush1.msra.mxu0 %v4717
    %4883 = vmatprep.subr.mxu0 0.0
    %4884 = vmatpush1.msra.mxu0 %v4716
    %4885 = vmatprep.subr.mxu0 0.0
    %4886 = vmatpush1.msra.mxu0 %v4715
    %4887 = vmatprep.subr.mxu0 0.0
    %4888 = vmatpush1.msra.mxu0 %v4714
    %4889 = vmatprep.subr.mxu0 0.0
    %4890 = vmatpush1.msra.mxu0 %v4713
    %4891 = vmatprep.subr.mxu0 0.0
    %4892 = vmatpush1.msra.mxu0 %v4712
    %4893 = vmatprep.subr.mxu0 0.0
    %4894 = vmatpush1.msra.mxu0 %v4711
    %4895 = vmatprep.subr.mxu0 0.0
    %4896 = vmatpush1.msra.mxu0 %v4710
    %4897 = vmatprep.subr.mxu0 0.0
    %4898 = vmatpush1.msra.mxu0 %v4709
    %4899 = vmatprep.subr.mxu0 0.0
    %4900 = vmatpush1.msra.mxu0 %v4708
    %4901 = vmatprep.subr.mxu0 0.0
    %4902 = vmatpush1.msra.mxu0 %v4707
    %4903 = vmatprep.subr.mxu0 0.0
    %4904 = vmatpush1.msra.mxu0 %v4706
    %4905 = vmatprep.subr.mxu0 0.0
    %4906 = vmatpush1.msra.mxu0 %v4705
    %4907 = vmatprep.subr.mxu0 0.0
    %4908 = vmatpush1.msra.mxu0 %v4704
    %4909 = vmatprep.subr.mxu0 0.0
    %4910 = vmatpush2.msra.mxu0 %v4735
    %4911 = vmatprep.subr.mxu0 0.0
    %4912 = vmatpush2.msra.mxu0 %v4734
    %4913 = vmatprep.subr.mxu0 0.0
    %4914 = vmatpush2.msra.mxu0 %v4733
    %4915 = vmatprep.subr.mxu0 0.0
    %4916 = vmatpush2.msra.mxu0 %v4732
    %4917 = vmatprep.subr.mxu0 0.0
    %4918 = vmatpush2.msra.mxu0 %v4731
    %4919 = vmatprep.subr.mxu0 0.0
    %4920 = vmatpush2.msra.mxu0 %v4730
    %4921 = vmatprep.subr.mxu0 0.0
    %4922 = vmatpush2.msra.mxu0 %v4729
    %4923 = vmatprep.subr.mxu0 0.0
    %4924 = vmatpush2.msra.mxu0 %v4728
    %4925 = vmatprep.subr.mxu0 0.0
    %4926 = vmatpush2.msra.mxu0 %v4727
    %4927 = vmatprep.subr.mxu0 0.0
    %4928 = vmatpush2.msra.mxu0 %v4726
    %4929 = vmatprep.subr.mxu0 0.0
    %4930 = vmatpush2.msra.mxu0 %v4725
    %4931 = vmatprep.subr.mxu0 0.0
    %4932 = vmatpush2.msra.mxu0 %v4724
    %4933 = vmatprep.subr.mxu0 0.0
    %4934 = vmatpush2.msra.mxu0 %v4723
    %4935 = vmatprep.subr.mxu0 0.0
    %4936 = vmatpush2.msra.mxu0 %v4722
    %4937 = vmatprep.subr.mxu0 0.0
    %4938 = vmatpush2.msra.mxu0 %v4721
    %4939 = vmatprep.subr.mxu0 0.0
    %4940 = vmatpush2.msra.mxu0 %v4720
    %4941 = vmatprep.mubr.f32.mxu0 %v4667
    %4942 = vmatmul.mubr.f32.gmra.mxu0 %v4666
    %v4943 = vpop.f32.mrf.mxu0
    %v4944 = vadd.f32 %v4874, %v4943
    %v4945 = vpop.f32.mrf.mxu0
    %4946 = vdwg.mxu0
    %4947 = vmatprep.subr.mxu0 0.0
    %4948 = vmatpush1.msra.mxu0 %v4751
    %4949 = vmatprep.subr.mxu0 0.0
    %4950 = vmatpush1.msra.mxu0 %v4750
    %4951 = vmatprep.subr.mxu0 0.0
    %4952 = vmatpush1.msra.mxu0 %v4749
    %4953 = vmatprep.subr.mxu0 0.0
    %4954 = vmatpush1.msra.mxu0 %v4748
    %4955 = vmatprep.subr.mxu0 0.0
    %4956 = vmatpush1.msra.mxu0 %v4747
    %4957 = vmatprep.subr.mxu0 0.0
    %4958 = vmatpush1.msra.mxu0 %v4746
    %4959 = vmatprep.subr.mxu0 0.0
    %4960 = vmatpush1.msra.mxu0 %v4745
    %4961 = vmatprep.subr.mxu0 0.0
    %4962 = vmatpush1.msra.mxu0 %v4744
    %4963 = vmatprep.subr.mxu0 0.0
    %4964 = vmatpush1.msra.mxu0 %v4743
    %4965 = vmatprep.subr.mxu0 0.0
    %4966 = vmatpush1.msra.mxu0 %v4742
    %4967 = vmatprep.subr.mxu0 0.0
    %4968 = vmatpush1.msra.mxu0 %v4741
    %4969 = vmatprep.subr.mxu0 0.0
    %4970 = vmatpush1.msra.mxu0 %v4740
    %4971 = vmatprep.subr.mxu0 0.0
    %4972 = vmatpush1.msra.mxu0 %v4739
    %4973 = vmatprep.subr.mxu0 0.0
    %4974 = vmatpush1.msra.mxu0 %v4738
    %4975 = vmatprep.subr.mxu0 0.0
    %4976 = vmatpush1.msra.mxu0 %v4737
    %4977 = vmatprep.subr.mxu0 0.0
    %4978 = vmatpush1.msra.mxu0 %v4736
    %4979 = vmatprep.subr.mxu0 0.0
    %4980 = vmatpush2.msra.mxu0 %v4767
    %4981 = vmatprep.subr.mxu0 0.0
    %4982 = vmatpush2.msra.mxu0 %v4766
    %4983 = vmatprep.subr.mxu0 0.0
    %4984 = vmatpush2.msra.mxu0 %v4765
    %4985 = vmatprep.subr.mxu0 0.0
    %4986 = vmatpush2.msra.mxu0 %v4764
    %4987 = vmatprep.subr.mxu0 0.0
    %4988 = vmatpush2.msra.mxu0 %v4763
    %4989 = vmatprep.subr.mxu0 0.0
    %4990 = vmatpush2.msra.mxu0 %v4762
    %4991 = vmatprep.subr.mxu0 0.0
    %4992 = vmatpush2.msra.mxu0 %v4761
    %4993 = vmatprep.subr.mxu0 0.0
    %4994 = vmatpush2.msra.mxu0 %v4760
    %4995 = vmatprep.subr.mxu0 0.0
    %4996 = vmatpush2.msra.mxu0 %v4759
    %4997 = vmatprep.subr.mxu0 0.0
    %4998 = vmatpush2.msra.mxu0 %v4758
    %4999 = vmatprep.subr.mxu0 0.0
    %5000 = vmatpush2.msra.mxu0 %v4757
    %5001 = vmatprep.subr.mxu0 0.0
    %5002 = vmatpush2.msra.mxu0 %v4756
    %5003 = vmatprep.subr.mxu0 0.0
    %5004 = vmatpush2.msra.mxu0 %v4755
    %5005 = vmatprep.subr.mxu0 0.0
    %5006 = vmatpush2.msra.mxu0 %v4754
    %5007 = vmatprep.subr.mxu0 0.0
    %5008 = vmatpush2.msra.mxu0 %v4753
    %5009 = vmatprep.subr.mxu0 0.0
    %5010 = vmatpush2.msra.mxu0 %v4752
    %5011 = vmatprep.mubr.f32.mxu0 %v4669
    %5012 = vmatmul.mubr.f32.gmra.mxu0 %v4668
    %v5013 = vpop.f32.mrf.mxu0
    %v5014 = vadd.f32 %v4944, %v5013
    %v5015 = vpop.f32.mrf.mxu0
    %5016 = vdwg.mxu0
    %5017 = vmatprep.subr.mxu0 0.0
    %5018 = vmatpush1.msra.mxu0 %v4783
    %5019 = vmatprep.subr.mxu0 0.0
    %5020 = vmatpush1.msra.mxu0 %v4782
    %5021 = vmatprep.subr.mxu0 0.0
    %5022 = vmatpush1.msra.mxu0 %v4781
    %5023 = vmatprep.subr.mxu0 0.0
    %5024 = vmatpush1.msra.mxu0 %v4780
    %5025 = vmatprep.subr.mxu0 0.0
    %5026 = vmatpush1.msra.mxu0 %v4779
    %5027 = vmatprep.subr.mxu0 0.0
    %5028 = vmatpush1.msra.mxu0 %v4778
    %5029 = vmatprep.subr.mxu0 0.0
    %5030 = vmatpush1.msra.mxu0 %v4777
    %5031 = vmatprep.subr.mxu0 0.0
    %5032 = vmatpush1.msra.mxu0 %v4776
    %5033 = vmatprep.subr.mxu0 0.0
    %5034 = vmatpush1.msra.mxu0 %v4775
    %5035 = vmatprep.subr.mxu0 0.0
    %5036 = vmatpush1.msra.mxu0 %v4774
    %5037 = vmatprep.subr.mxu0 0.0
    %5038 = vmatpush1.msra.mxu0 %v4773
    %5039 = vmatprep.subr.mxu0 0.0
    %5040 = vmatpush1.msra.mxu0 %v4772
    %5041 = vmatprep.subr.mxu0 0.0
    %5042 = vmatpush1.msra.mxu0 %v4771
    %5043 = vmatprep.subr.mxu0 0.0
    %5044 = vmatpush1.msra.mxu0 %v4770
    %5045 = vmatprep.subr.mxu0 0.0
    %5046 = vmatpush1.msra.mxu0 %v4769
    %5047 = vmatprep.subr.mxu0 0.0
    %5048 = vmatpush1.msra.mxu0 %v4768
    %5049 = vmatprep.subr.mxu0 0.0
    %5050 = vmatpush2.msra.mxu0 %v4799
    %5051 = vmatprep.subr.mxu0 0.0
    %5052 = vmatpush2.msra.mxu0 %v4798
    %5053 = vmatprep.subr.mxu0 0.0
    %5054 = vmatpush2.msra.mxu0 %v4797
    %5055 = vmatprep.subr.mxu0 0.0
    %5056 = vmatpush2.msra.mxu0 %v4796
    %5057 = vmatprep.subr.mxu0 0.0
    %5058 = vmatpush2.msra.mxu0 %v4795
    %5059 = vmatprep.subr.mxu0 0.0
    %5060 = vmatpush2.msra.mxu0 %v4794
    %5061 = vmatprep.subr.mxu0 0.0
    %5062 = vmatpush2.msra.mxu0 %v4793
    %5063 = vmatprep.subr.mxu0 0.0
    %5064 = vmatpush2.msra.mxu0 %v4792
    %5065 = vmatprep.subr.mxu0 0.0
    %5066 = vmatpush2.msra.mxu0 %v4791
    %5067 = vmatprep.subr.mxu0 0.0
    %5068 = vmatpush2.msra.mxu0 %v4790
    %5069 = vmatprep.subr.mxu0 0.0
    %5070 = vmatpush2.msra.mxu0 %v4789
    %5071 = vmatprep.subr.mxu0 0.0
    %5072 = vmatpush2.msra.mxu0 %v4788
    %5073 = vmatprep.subr.mxu0 0.0
    %5074 = vmatpush2.msra.mxu0 %v4787
    %5075 = vmatprep.subr.mxu0 0.0
    %5076 = vmatpush2.msra.mxu0 %v4786
    %5077 = vmatprep.subr.mxu0 0.0
    %5078 = vmatpush2.msra.mxu0 %v4785
    %5079 = vmatprep.subr.mxu0 0.0
    %5080 = vmatpush2.msra.mxu0 %v4784
    %5081 = vmatprep.mubr.f32.mxu0 %v4671
    %5082 = vmatmul.mubr.f32.gmra.mxu0 %v4670
    %v5083 = vpop.f32.mrf.mxu0
    %v5084 = vadd.f32 %v5014, %v5083
    %v5085 = vpop.f32.mrf.mxu0
    %5086 = vdwg.mxu0
    %v5087 = vlaneseq
    %v5088 = vand.u32 %v5087, 127
    %vm5089 = vcmp.lt.s32.totalorder %v5088, 16
    %v5090 = vsel %vm5089, %v5084, -1e+30
    %5091 = vmax.xlane.f32.xlu0 %v5090
    %v5092 = vpop.xlane.xlu0 %5091
    %v5093 = vsub.f32 %v5090, %v5092
    %v5094 = vmul.f32 %v5093, 1.442695
    %v5095 = vpow.pop %v5094
    %5096 = vadd.xlane.f32.xlu0 %v5095
    %v5097 = vpop.xlane.xlu0 %5096
    %v5098 = vrcp.pop %v5097
    %v5099 = vmul.f32 %v5095, %v5098
    %5100 = vst [vmem:[#allocation16] sm:$0xff] %v5099
    // Predicated region
    $region70: #{tpu_custom_call.1} parent=1 // pred_check
      _
    $region71: #{tpu_custom_call.1} parent=1 // pred_check_branch
      %5102 = sbr.rel (0) target = $region73
    $region72: #{tpu_custom_call.1} parent=1 // pred_region
      %s5104 = ssub.s32 128, 128
      %5105 = vsyncadd [#allocation4], %s5104
      %s5107 = sshll.u32 [#allocation16], 4
      %s5108 = int_to_ptr.vmem [resolvable:$true] %s5107
      %5110 = dma.vmem_to_hbm [thread:$0]  %s5108, 128, %s9, [#allocation4]
    $region73: #{tpu_custom_call.1} parent=1 // pred_fallthru
      _
    // Predicated region
    $region74: #{tpu_custom_call.1} parent=1 // pred_check
      _
    $region75: #{tpu_custom_call.1} parent=1 // pred_check_branch
      %5112 = sbr.rel (0) target = $region77
    $region76: #{tpu_custom_call.1} parent=1 // pred_region
      %5113 = dma.done [#allocation4], 128
    $region77: #{tpu_custom_call.1} parent=1 // pred_fallthru
      _
    %5114 = vsyncpa [#allocation3], 1
    %5115 = vsyncpa [#allocation6], 1
    %5116 = vsyncpa [#allocation9], 1
    %5117 = vsyncpa [#allocation12], 1
    %5118 = vsyncpa [#allocation15], 1
    %5119 = vsyncpa [#allocation4], 1

</llo_original>
